<compile_context>
chip_gen: v5e
topology: v5e:2x2
jax: 0.10.0
libtpu: 0.0.40
codegen_flags: <defaults>
</compile_context>

<pallas_src>
import math
import jax
import jax.numpy as jnp
from jax.experimental import pallas as pl
from jax.experimental.pallas import tpu as pltpu

# ---------------- small config (consistent with the module's forward) -------
N_LAYER = 2
D_SIZE = 32
N_HEAD = 2
N_CLASS = 16
PATCH = 4
IMAGE = 16
CHANNELS = 3
NUM_PATCHES = (IMAGE // PATCH) ** 2          # 16
SEQ = NUM_PATCHES + 1                        # 17 (cls token + patches)
HEAD_DIM = D_SIZE // N_HEAD
MLP_DIM = 4 * D_SIZE
EPS = 1e-5                                   # torch LayerNorm default


# ---------------- in-kernel helpers ------------------------------------------
def _layernorm(x, w, b):
    mu = jnp.mean(x, axis=-1, keepdims=True)
    var = jnp.mean((x - mu) ** 2, axis=-1, keepdims=True)
    return (x - mu) * jax.lax.rsqrt(var + EPS) * w + b


def _gelu_exact(x):
    # matches torch.nn.GELU() (erf form)
    return 0.5 * x * (1.0 + jax.lax.erf(x / jnp.sqrt(jnp.float32(2.0))))


def _softmax(x):
    m = jnp.max(x, axis=-1, keepdims=True)
    e = jnp.exp(x - m)
    inv = pl.reciprocal(jnp.sum(e, axis=-1, keepdims=True), approx=True)
    return e * inv


# ---------------- the single fused kernel ------------------------------------
def vit_kernel(
    patches_ref,                 # (B*NP, C*P*P)
    patch_w_ref, patch_b_ref,    # (C*P*P, D), (1, D)
    cls_ref, pos_ref,            # (1, D), (SEQ, D)
    ln1_w_ref, ln1_b_ref,        # (L, 1, D)
    qkv_w_ref, qkv_b_ref,        # (L, D, 3D), (L, 1, 3D)   (q part pre-scaled)
    ao_w_ref, ao_b_ref,          # (L, D, D), (L, 1, D)
    ln2_w_ref, ln2_b_ref,        # (L, 1, D)
    m1_w_ref, m1_b_ref,          # (L, D, 4D), (L, 1, 4D)
    m2_w_ref, m2_b_ref,          # (L, 4D, D), (L, 1, D)
    lnf_w_ref, lnf_b_ref,        # (1, D)
    cls_w_ref, cls_b_ref,        # (D, N_CLASS), (1, N_CLASS)
    o_ref,                       # (B, N_CLASS)
    ctx_buf,                     # VMEM scratch (B*SEQ, D)
):
    B = o_ref.shape[0]

    # ----- patch embedding + cls token + positional embedding (all in VMEM)
    emb = (jnp.dot(patches_ref[...], patch_w_ref[...],
                   preferred_element_type=jnp.float32) + patch_b_ref[...])
    cls_tok = cls_ref[...]                    # (1, D)
    pos = pos_ref[...]                        # (SEQ, D)
    rows = []
    for b in range(B):                        # static, B is tiny
        rows.append(cls_tok + pos[0:1, :])
        rows.append(emb[b * NUM_PATCHES:(b + 1) * NUM_PATCHES, :] + pos[1:SEQ, :])
    x = jnp.concatenate(rows, axis=0)         # (B*SEQ, D)

    # ----- transformer layers, statically unrolled; weights stay resident ---
    for l in range(N_LAYER):
        # attention branch: LN -> fused QKV -> per-(batch,head) SDPA -> proj
        h = _layernorm(x, ln1_w_ref[l], ln1_b_ref[l])
        qkv = (jnp.dot(h, qkv_w_ref[l], preferred_element_type=jnp.float32)
               + qkv_b_ref[l])                # (B*SEQ, 3D), q already scaled
        for b in range(B):
            r0 = b * SEQ
            for hd in range(N_HEAD):
                c0 = hd * HEAD_DIM
                q = qkv[r0:r0 + SEQ, c0:c0 + HEAD_DIM]
                k = qkv[r0:r0 + SEQ, D_SIZE + c0:D_SIZE + c0 + HEAD_DIM]
                v = qkv[r0:r0 + SEQ, 2 * D_SIZE + c0:2 * D_SIZE + c0 + HEAD_DIM]
                s = jnp.dot(q, k.T, preferred_element_type=jnp.float32)
                p = _softmax(s)
                # write head context straight into scratch (no concatenate)
                ctx_buf[r0:r0 + SEQ, c0:c0 + HEAD_DIM] = jnp.dot(
                    p, v, preferred_element_type=jnp.float32)
        ctx = ctx_buf[...]                    # (B*SEQ, D)
        x = x + (jnp.dot(ctx, ao_w_ref[l], preferred_element_type=jnp.float32)
                 + ao_b_ref[l])

        # MLP branch: LN -> dense 4x -> GELU -> dense -> residual
        h2 = _layernorm(x, ln2_w_ref[l], ln2_b_ref[l])
        inter = _gelu_exact(
            jnp.dot(h2, m1_w_ref[l], preferred_element_type=jnp.float32)
            + m1_b_ref[l])
        x = x + (jnp.dot(inter, m2_w_ref[l], preferred_element_type=jnp.float32)
                 + m2_b_ref[l])

    # ----- final LN + classifier head on the cls tokens (written once) ------
    cls_rows = jnp.concatenate([x[b * SEQ:b * SEQ + 1, :] for b in range(B)],
                               axis=0)        # (B, D)
    hf = _layernorm(cls_rows, lnf_w_ref[...], lnf_b_ref[...])
    o_ref[...] = (jnp.dot(hf, cls_w_ref[...], preferred_element_type=jnp.float32)
                  + cls_b_ref[...])


# ---------------- parameter init (deterministic, PyTorch-style) --------------
def init_params(key):
    keys = iter(jax.random.split(key, 256))

    def nxt():
        return next(keys)

    def linear(in_dim, out_dim):
        bound = 1.0 / math.sqrt(in_dim)
        w = jax.random.uniform(nxt(), (in_dim, out_dim), jnp.float32, -bound, bound)
        b = jax.random.uniform(nxt(), (1, out_dim), jnp.float32, -bound, bound)
        return w, b

    params = {}
    # Conv2d(stride=kernel=patch) as a matmul on flattened patches:
    # weight (D, C, P, P) stored as (C*P*P, D) with (c, ph, pw) flatten order.
    params["patch_w"], params["patch_b"] = linear(CHANNELS * PATCH * PATCH, D_SIZE)
    params["cls_token"] = jax.random.uniform(nxt(), (1, 1, D_SIZE), jnp.float32)
    params["pos_emb"] = jax.random.uniform(nxt(), (1, SEQ, D_SIZE), jnp.float32)

    layers = []
    for _ in range(N_LAYER):
        lyr = {
            "ln1_w": jnp.ones((1, D_SIZE), jnp.float32),
            "ln1_b": jnp.zeros((1, D_SIZE), jnp.float32),
            "ln2_w": jnp.ones((1, D_SIZE), jnp.float32),
            "ln2_b": jnp.zeros((1, D_SIZE), jnp.float32),
        }
        lyr["q_w"], lyr["q_b"] = linear(D_SIZE, D_SIZE)
        lyr["k_w"], lyr["k_b"] = linear(D_SIZE, D_SIZE)
        lyr["v_w"], lyr["v_b"] = linear(D_SIZE, D_SIZE)
        lyr["o_w"], lyr["o_b"] = linear(D_SIZE, D_SIZE)
        lyr["m1_w"], lyr["m1_b"] = linear(D_SIZE, MLP_DIM)
        lyr["m2_w"], lyr["m2_b"] = linear(MLP_DIM, D_SIZE)
        layers.append(lyr)
    params["layers"] = layers

    params["ln_f_w"] = jnp.ones((1, D_SIZE), jnp.float32)
    params["ln_f_b"] = jnp.zeros((1, D_SIZE), jnp.float32)
    params["cls_w"], params["cls_b"] = linear(D_SIZE, N_CLASS)
    return params


def pack_params(params):
    """Stack per-layer weights (leading N_LAYER axis), fuse QKV and fold the
    1/sqrt(head_dim) attention scale into the Q weights/bias."""
    layers = params["layers"]
    scale = 1.0 / math.sqrt(HEAD_DIM)

    def stack(key):
        return jnp.stack([lyr[key] for lyr in layers], axis=0)

    qkv_w = jnp.stack(
        [jnp.concatenate([lyr["q_w"] * scale, lyr["k_w"], lyr["v_w"]], axis=1)
         for lyr in layers], axis=0)                                 # (L, D, 3D)
    qkv_b = jnp.stack(
        [jnp.concatenate([lyr["q_b"] * scale, lyr["k_b"], lyr["v_b"]], axis=1)
         for lyr in layers], axis=0)                                 # (L, 1, 3D)

    return dict(
        patch_w=params["patch_w"], patch_b=params["patch_b"],
        cls_token=params["cls_token"].reshape(1, D_SIZE),
        pos_emb=params["pos_emb"].reshape(SEQ, D_SIZE),
        ln1_w=stack("ln1_w"), ln1_b=stack("ln1_b"),
        qkv_w=qkv_w, qkv_b=qkv_b,
        ao_w=stack("o_w"), ao_b=stack("o_b"),
        ln2_w=stack("ln2_w"), ln2_b=stack("ln2_b"),
        m1_w=stack("m1_w"), m1_b=stack("m1_b"),
        m2_w=stack("m2_w"), m2_b=stack("m2_b"),
        ln_f_w=params["ln_f_w"], ln_f_b=params["ln_f_b"],
        cls_w=params["cls_w"], cls_b=params["cls_b"],
    )


# ---------------- full forward (one pallas_call) ------------------------------
def vit_forward(packed, x):
    # x is NCHW (B, C, H, W), same as the PyTorch Conv2d input.
    B, C, H, W = x.shape
    p = PATCH
    # non-overlapping patch extraction is pure layout glue; flatten order
    # (c, ph, pw) matches the Conv2d weight flattening used in init_params.
    patches = (
        x.reshape(B, C, H // p, p, W // p, p)
        .transpose(0, 2, 4, 1, 3, 5)
        .reshape(B * NUM_PATCHES, C * p * p)
    )

    return pl.pallas_call(
        vit_kernel,
        out_shape=jax.ShapeDtypeStruct((B, N_CLASS), jnp.float32),
        # no grid: single invocation, every operand lives wholly in VMEM
        # (total weights + activations ~100 KB << VMEM on v5e/v6e/v7x).
        scratch_shapes=[pltpu.VMEM((B * SEQ, D_SIZE), jnp.float32)],
    )(
        patches,
        packed["patch_w"], packed["patch_b"],
        packed["cls_token"], packed["pos_emb"],
        packed["ln1_w"], packed["ln1_b"],
        packed["qkv_w"], packed["qkv_b"],
        packed["ao_w"], packed["ao_b"],
        packed["ln2_w"], packed["ln2_b"],
        packed["m1_w"], packed["m1_b"],
        packed["m2_w"], packed["m2_b"],
        packed["ln_f_w"], packed["ln_f_b"],
        packed["cls_w"], packed["cls_b"],
    )


if __name__ == "__main__":
    key = jax.random.PRNGKey(0)
    xk, pk = jax.random.split(key)
    x = jax.random.normal(xk, (2, CHANNELS, IMAGE, IMAGE), jnp.float32)
    params = init_params(pk)
    packed = pack_params(params)

    logits = jax.jit(vit_forward)(packed, x)
    jax.block_until_ready(logits)
    assert logits.shape == (2, N_CLASS) and logits.dtype == jnp.float32
    print("KERNEL_OK")
</pallas_src>

<mosaic_0001>
module attributes {stable_mosaic.version = 11 : i64} {
  func.func @vit_kernel(%arg0: memref<32x48xf32, #tpu.memory_space<vmem>>, %arg1: memref<48x32xf32, #tpu.memory_space<vmem>>, %arg2: memref<1x32xf32, #tpu.memory_space<vmem>>, %arg3: memref<1x32xf32, #tpu.memory_space<vmem>>, %arg4: memref<17x32xf32, #tpu.memory_space<vmem>>, %arg5: memref<2x1x32xf32, #tpu.memory_space<vmem>>, %arg6: memref<2x1x32xf32, #tpu.memory_space<vmem>>, %arg7: memref<2x32x96xf32, #tpu.memory_space<vmem>>, %arg8: memref<2x1x96xf32, #tpu.memory_space<vmem>>, %arg9: memref<2x32x32xf32, #tpu.memory_space<vmem>>, %arg10: memref<2x1x32xf32, #tpu.memory_space<vmem>>, %arg11: memref<2x1x32xf32, #tpu.memory_space<vmem>>, %arg12: memref<2x1x32xf32, #tpu.memory_space<vmem>>, %arg13: memref<2x32x128xf32, #tpu.memory_space<vmem>>, %arg14: memref<2x1x128xf32, #tpu.memory_space<vmem>>, %arg15: memref<2x128x32xf32, #tpu.memory_space<vmem>>, %arg16: memref<2x1x32xf32, #tpu.memory_space<vmem>>, %arg17: memref<1x32xf32, #tpu.memory_space<vmem>>, %arg18: memref<1x32xf32, #tpu.memory_space<vmem>>, %arg19: memref<32x16xf32, #tpu.memory_space<vmem>>, %arg20: memref<1x16xf32, #tpu.memory_space<vmem>>, %arg21: memref<2x16xf32, #tpu.memory_space<vmem>>, %arg22: memref<34x32xf32, #tpu.memory_space<vmem>>) attributes {dimension_semantics = [], scalar_prefetch = 0 : i64, scratch_operands = 1 : i64, tpu.core_type = #tpu.core_type<tc>} {
    %c0 = arith.constant 0 : index
    %c0_0 = arith.constant 0 : index
    %0 = vector.load %arg0[%c0, %c0_0] : memref<32x48xf32, #tpu.memory_space<vmem>>, vector<32x48xf32>
    %c0_1 = arith.constant 0 : index
    %c0_2 = arith.constant 0 : index
    %1 = vector.load %arg1[%c0_1, %c0_2] : memref<48x32xf32, #tpu.memory_space<vmem>>, vector<48x32xf32>
    %cst = arith.constant dense<0.000000e+00> : vector<32x32xf32>
    %2 = tpu.matmul %0, %1, %cst {dimension_numbers = #tpu.dot_dimension_numbers<[1], [0], [0], [1], [0, 0, 1, 1], [], []>} : vector<32x48xf32>, vector<48x32xf32>, vector<32x32xf32> -> vector<32x32xf32>
    %c0_3 = arith.constant 0 : index
    %c0_4 = arith.constant 0 : index
    %3 = vector.load %arg2[%c0_3, %c0_4] : memref<1x32xf32, #tpu.memory_space<vmem>>, vector<1x32xf32>
    %4 = vector.broadcast %3 : vector<1x32xf32> to vector<32x32xf32>
    %5 = arith.addf %2, %4 : vector<32x32xf32>
    %c0_5 = arith.constant 0 : index
    %c0_6 = arith.constant 0 : index
    %6 = vector.load %arg3[%c0_5, %c0_6] : memref<1x32xf32, #tpu.memory_space<vmem>>, vector<1x32xf32>
    %c0_7 = arith.constant 0 : index
    %c0_8 = arith.constant 0 : index
    %7 = vector.load %arg4[%c0_7, %c0_8] : memref<17x32xf32, #tpu.memory_space<vmem>>, vector<17x32xf32>
    %8 = vector.extract_strided_slice %7 {offsets = [0, 0], sizes = [1, 32], strides = [1, 1]} : vector<17x32xf32> to vector<1x32xf32>
    %9 = arith.addf %6, %8 : vector<1x32xf32>
    %10 = vector.extract_strided_slice %5 {offsets = [0, 0], sizes = [16, 32], strides = [1, 1]} : vector<32x32xf32> to vector<16x32xf32>
    %11 = vector.extract_strided_slice %7 {offsets = [1, 0], sizes = [16, 32], strides = [1, 1]} : vector<17x32xf32> to vector<16x32xf32>
    %12 = arith.addf %10, %11 : vector<16x32xf32>
    %13 = vector.extract_strided_slice %7 {offsets = [0, 0], sizes = [1, 32], strides = [1, 1]} : vector<17x32xf32> to vector<1x32xf32>
    %14 = arith.addf %6, %13 : vector<1x32xf32>
    %15 = vector.extract_strided_slice %5 {offsets = [16, 0], sizes = [16, 32], strides = [1, 1]} : vector<32x32xf32> to vector<16x32xf32>
    %16 = vector.extract_strided_slice %7 {offsets = [1, 0], sizes = [16, 32], strides = [1, 1]} : vector<17x32xf32> to vector<16x32xf32>
    %17 = arith.addf %15, %16 : vector<16x32xf32>
    %18 = tpu.concatenate %9, %12, %14, %17 in 0 : vector<1x32xf32>, vector<16x32xf32>, vector<1x32xf32>, vector<16x32xf32> -> vector<34x32xf32>
    %c0_9 = arith.constant 0 : index
    %c0_10 = arith.constant 0 : index
    %c0_11 = arith.constant 0 : index
    %19 = vector.load %arg5[%c0_9, %c0_10, %c0_11] : memref<2x1x32xf32, #tpu.memory_space<vmem>>, vector<1x1x32xf32>
    %20 = vector.shape_cast %19 : vector<1x1x32xf32> to vector<1x32xf32>
    %c0_12 = arith.constant 0 : index
    %c0_13 = arith.constant 0 : index
    %c0_14 = arith.constant 0 : index
    %21 = vector.load %arg6[%c0_12, %c0_13, %c0_14] : memref<2x1x32xf32, #tpu.memory_space<vmem>>, vector<1x1x32xf32>
    %22 = vector.shape_cast %21 : vector<1x1x32xf32> to vector<1x32xf32>
    %cst_15 = arith.constant dense<0.000000e+00> : vector<34xf32>
    %23 = vector.multi_reduction <add>, %18, %cst_15 [1] : vector<34x32xf32> to vector<34xf32>
    %24 = vector.shape_cast %23 : vector<34xf32> to vector<34x1xf32>
    %cst_16 = arith.constant 3.200000e+01 : f32
    %25 = vector.broadcast %cst_16 : f32 to vector<34x1xf32>
    %26 = arith.divf %24, %25 : vector<34x1xf32>
    %27 = vector.broadcast %26 : vector<34x1xf32> to vector<34x32xf32>
    %28 = arith.subf %18, %27 : vector<34x32xf32>
    %29 = arith.mulf %28, %28 : vector<34x32xf32>
    %cst_17 = arith.constant dense<0.000000e+00> : vector<34xf32>
    %30 = vector.multi_reduction <add>, %29, %cst_17 [1] : vector<34x32xf32> to vector<34xf32>
    %31 = vector.shape_cast %30 : vector<34xf32> to vector<34x1xf32>
    %cst_18 = arith.constant 3.200000e+01 : f32
    %32 = vector.broadcast %cst_18 : f32 to vector<34x1xf32>
    %33 = arith.divf %31, %32 : vector<34x1xf32>
    %34 = vector.broadcast %26 : vector<34x1xf32> to vector<34x32xf32>
    %35 = arith.subf %18, %34 : vector<34x32xf32>
    %cst_19 = arith.constant 9.99999974E-6 : f32
    %36 = vector.broadcast %cst_19 : f32 to vector<34x1xf32>
    %37 = arith.addf %33, %36 : vector<34x1xf32>
    %38 = math.rsqrt %37 : vector<34x1xf32>
    %39 = vector.broadcast %38 : vector<34x1xf32> to vector<34x32xf32>
    %40 = arith.mulf %35, %39 : vector<34x32xf32>
    %41 = vector.broadcast %20 : vector<1x32xf32> to vector<34x32xf32>
    %42 = arith.mulf %40, %41 : vector<34x32xf32>
    %43 = vector.broadcast %22 : vector<1x32xf32> to vector<34x32xf32>
    %44 = arith.addf %42, %43 : vector<34x32xf32>
    %c0_20 = arith.constant 0 : index
    %c0_21 = arith.constant 0 : index
    %c0_22 = arith.constant 0 : index
    %45 = vector.load %arg7[%c0_20, %c0_21, %c0_22] : memref<2x32x96xf32, #tpu.memory_space<vmem>>, vector<1x32x96xf32>
    %46 = vector.shape_cast %45 : vector<1x32x96xf32> to vector<32x96xf32>
    %cst_23 = arith.constant dense<0.000000e+00> : vector<34x96xf32>
    %47 = tpu.matmul %44, %46, %cst_23 {dimension_numbers = #tpu.dot_dimension_numbers<[1], [0], [0], [1], [0, 0, 1, 1], [], []>} : vector<34x32xf32>, vector<32x96xf32>, vector<34x96xf32> -> vector<34x96xf32>
    %c0_24 = arith.constant 0 : index
    %c0_25 = arith.constant 0 : index
    %c0_26 = arith.constant 0 : index
    %48 = vector.load %arg8[%c0_24, %c0_25, %c0_26] : memref<2x1x96xf32, #tpu.memory_space<vmem>>, vector<1x1x96xf32>
    %49 = vector.shape_cast %48 : vector<1x1x96xf32> to vector<1x96xf32>
    %50 = vector.broadcast %49 : vector<1x96xf32> to vector<34x96xf32>
    %51 = arith.addf %47, %50 : vector<34x96xf32>
    %52 = vector.extract_strided_slice %51 {offsets = [0, 0], sizes = [17, 16], strides = [1, 1]} : vector<34x96xf32> to vector<17x16xf32>
    %53 = vector.extract_strided_slice %51 {offsets = [0, 32], sizes = [17, 16], strides = [1, 1]} : vector<34x96xf32> to vector<17x16xf32>
    %54 = vector.extract_strided_slice %51 {offsets = [0, 64], sizes = [17, 16], strides = [1, 1]} : vector<34x96xf32> to vector<17x16xf32>
    %55 = tpu.transpose %53, [1, 0] : vector<17x16xf32> -> vector<16x17xf32>
    %cst_27 = arith.constant dense<0.000000e+00> : vector<17x17xf32>
    %56 = tpu.matmul %52, %55, %cst_27 {dimension_numbers = #tpu.dot_dimension_numbers<[1], [0], [0], [1], [0, 0, 1, 1], [], []>} : vector<17x16xf32>, vector<16x17xf32>, vector<17x17xf32> -> vector<17x17xf32>
    %cst_28 = arith.constant dense<0xFF800000> : vector<17xf32>
    %57 = vector.multi_reduction <maximumf>, %56, %cst_28 [1] : vector<17x17xf32> to vector<17xf32>
    %58 = vector.shape_cast %57 : vector<17xf32> to vector<17x1xf32>
    %59 = vector.broadcast %58 : vector<17x1xf32> to vector<17x17xf32>
    %60 = arith.subf %56, %59 : vector<17x17xf32>
    %61 = math.exp %60 : vector<17x17xf32>
    %cst_29 = arith.constant dense<0.000000e+00> : vector<17xf32>
    %62 = vector.multi_reduction <add>, %61, %cst_29 [1] : vector<17x17xf32> to vector<17xf32>
    %63 = vector.shape_cast %62 : vector<17xf32> to vector<17x1xf32>
    %64 = tpu.reciprocal %63 {approx = true} : vector<17x1xf32> -> vector<17x1xf32>
    %65 = vector.broadcast %64 : vector<17x1xf32> to vector<17x17xf32>
    %66 = arith.mulf %61, %65 : vector<17x17xf32>
    %cst_30 = arith.constant dense<0.000000e+00> : vector<17x16xf32>
    %67 = tpu.matmul %66, %54, %cst_30 {dimension_numbers = #tpu.dot_dimension_numbers<[1], [0], [0], [1], [0, 0, 1, 1], [], []>} : vector<17x17xf32>, vector<17x16xf32>, vector<17x16xf32> -> vector<17x16xf32>
    %c0_31 = arith.constant 0 : index
    %c0_32 = arith.constant 0 : index
    %68 = vector.load %arg22[%c0_31, %c0_32] : memref<34x32xf32, #tpu.memory_space<vmem>>, vector<17x16xf32>
    tpu.vector_store %arg22[%c0_31, %c0_32], %67 {strides = array<i32>} : memref<34x32xf32, #tpu.memory_space<vmem>>, vector<17x16xf32>,
    %69 = vector.extract_strided_slice %51 {offsets = [0, 16], sizes = [17, 16], strides = [1, 1]} : vector<34x96xf32> to vector<17x16xf32>
    %70 = vector.extract_strided_slice %51 {offsets = [0, 48], sizes = [17, 16], strides = [1, 1]} : vector<34x96xf32> to vector<17x16xf32>
    %71 = vector.extract_strided_slice %51 {offsets = [0, 80], sizes = [17, 16], strides = [1, 1]} : vector<34x96xf32> to vector<17x16xf32>
    %72 = tpu.transpose %70, [1, 0] : vector<17x16xf32> -> vector<16x17xf32>
    %cst_33 = arith.constant dense<0.000000e+00> : vector<17x17xf32>
    %73 = tpu.matmul %69, %72, %cst_33 {dimension_numbers = #tpu.dot_dimension_numbers<[1], [0], [0], [1], [0, 0, 1, 1], [], []>} : vector<17x16xf32>, vector<16x17xf32>, vector<17x17xf32> -> vector<17x17xf32>
    %cst_34 = arith.constant dense<0xFF800000> : vector<17xf32>
    %74 = vector.multi_reduction <maximumf>, %73, %cst_34 [1] : vector<17x17xf32> to vector<17xf32>
    %75 = vector.shape_cast %74 : vector<17xf32> to vector<17x1xf32>
    %76 = vector.broadcast %75 : vector<17x1xf32> to vector<17x17xf32>
    %77 = arith.subf %73, %76 : vector<17x17xf32>
    %78 = math.exp %77 : vector<17x17xf32>
    %cst_35 = arith.constant dense<0.000000e+00> : vector<17xf32>
    %79 = vector.multi_reduction <add>, %78, %cst_35 [1] : vector<17x17xf32> to vector<17xf32>
    %80 = vector.shape_cast %79 : vector<17xf32> to vector<17x1xf32>
    %81 = tpu.reciprocal %80 {approx = true} : vector<17x1xf32> -> vector<17x1xf32>
    %82 = vector.broadcast %81 : vector<17x1xf32> to vector<17x17xf32>
    %83 = arith.mulf %78, %82 : vector<17x17xf32>
    %cst_36 = arith.constant dense<0.000000e+00> : vector<17x16xf32>
    %84 = tpu.matmul %83, %71, %cst_36 {dimension_numbers = #tpu.dot_dimension_numbers<[1], [0], [0], [1], [0, 0, 1, 1], [], []>} : vector<17x17xf32>, vector<17x16xf32>, vector<17x16xf32> -> vector<17x16xf32>
    %c0_37 = arith.constant 0 : index
    %c16 = arith.constant 16 : index
    %85 = vector.load %arg22[%c0_37, %c16] : memref<34x32xf32, #tpu.memory_space<vmem>>, vector<17x16xf32>
    tpu.vector_store %arg22[%c0_37, %c16], %84 {strides = array<i32>} : memref<34x32xf32, #tpu.memory_space<vmem>>, vector<17x16xf32>,
    %86 = vector.extract_strided_slice %51 {offsets = [17, 0], sizes = [17, 16], strides = [1, 1]} : vector<34x96xf32> to vector<17x16xf32>
    %87 = vector.extract_strided_slice %51 {offsets = [17, 32], sizes = [17, 16], strides = [1, 1]} : vector<34x96xf32> to vector<17x16xf32>
    %88 = vector.extract_strided_slice %51 {offsets = [17, 64], sizes = [17, 16], strides = [1, 1]} : vector<34x96xf32> to vector<17x16xf32>
    %89 = tpu.transpose %87, [1, 0] : vector<17x16xf32> -> vector<16x17xf32>
    %cst_38 = arith.constant dense<0.000000e+00> : vector<17x17xf32>
    %90 = tpu.matmul %86, %89, %cst_38 {dimension_numbers = #tpu.dot_dimension_numbers<[1], [0], [0], [1], [0, 0, 1, 1], [], []>} : vector<17x16xf32>, vector<16x17xf32>, vector<17x17xf32> -> vector<17x17xf32>
    %cst_39 = arith.constant dense<0xFF800000> : vector<17xf32>
    %91 = vector.multi_reduction <maximumf>, %90, %cst_39 [1] : vector<17x17xf32> to vector<17xf32>
    %92 = vector.shape_cast %91 : vector<17xf32> to vector<17x1xf32>
    %93 = vector.broadcast %92 : vector<17x1xf32> to vector<17x17xf32>
    %94 = arith.subf %90, %93 : vector<17x17xf32>
    %95 = math.exp %94 : vector<17x17xf32>
    %cst_40 = arith.constant dense<0.000000e+00> : vector<17xf32>
    %96 = vector.multi_reduction <add>, %95, %cst_40 [1] : vector<17x17xf32> to vector<17xf32>
    %97 = vector.shape_cast %96 : vector<17xf32> to vector<17x1xf32>
    %98 = tpu.reciprocal %97 {approx = true} : vector<17x1xf32> -> vector<17x1xf32>
    %99 = vector.broadcast %98 : vector<17x1xf32> to vector<17x17xf32>
    %100 = arith.mulf %95, %99 : vector<17x17xf32>
    %cst_41 = arith.constant dense<0.000000e+00> : vector<17x16xf32>
    %101 = tpu.matmul %100, %88, %cst_41 {dimension_numbers = #tpu.dot_dimension_numbers<[1], [0], [0], [1], [0, 0, 1, 1], [], []>} : vector<17x17xf32>, vector<17x16xf32>, vector<17x16xf32> -> vector<17x16xf32>
    %c17 = arith.constant 17 : index
    %c0_42 = arith.constant 0 : index
    %102 = vector.load %arg22[%c17, %c0_42] : memref<34x32xf32, #tpu.memory_space<vmem>>, vector<17x16xf32>
    tpu.vector_store %arg22[%c17, %c0_42], %101 {strides = array<i32>} : memref<34x32xf32, #tpu.memory_space<vmem>>, vector<17x16xf32>,
    %103 = vector.extract_strided_slice %51 {offsets = [17, 16], sizes = [17, 16], strides = [1, 1]} : vector<34x96xf32> to vector<17x16xf32>
    %104 = vector.extract_strided_slice %51 {offsets = [17, 48], sizes = [17, 16], strides = [1, 1]} : vector<34x96xf32> to vector<17x16xf32>
    %105 = vector.extract_strided_slice %51 {offsets = [17, 80], sizes = [17, 16], strides = [1, 1]} : vector<34x96xf32> to vector<17x16xf32>
    %106 = tpu.transpose %104, [1, 0] : vector<17x16xf32> -> vector<16x17xf32>
    %cst_43 = arith.constant dense<0.000000e+00> : vector<17x17xf32>
    %107 = tpu.matmul %103, %106, %cst_43 {dimension_numbers = #tpu.dot_dimension_numbers<[1], [0], [0], [1], [0, 0, 1, 1], [], []>} : vector<17x16xf32>, vector<16x17xf32>, vector<17x17xf32> -> vector<17x17xf32>
    %cst_44 = arith.constant dense<0xFF800000> : vector<17xf32>
    %108 = vector.multi_reduction <maximumf>, %107, %cst_44 [1] : vector<17x17xf32> to vector<17xf32>
    %109 = vector.shape_cast %108 : vector<17xf32> to vector<17x1xf32>
    %110 = vector.broadcast %109 : vector<17x1xf32> to vector<17x17xf32>
    %111 = arith.subf %107, %110 : vector<17x17xf32>
    %112 = math.exp %111 : vector<17x17xf32>
    %cst_45 = arith.constant dense<0.000000e+00> : vector<17xf32>
    %113 = vector.multi_reduction <add>, %112, %cst_45 [1] : vector<17x17xf32> to vector<17xf32>
    %114 = vector.shape_cast %113 : vector<17xf32> to vector<17x1xf32>
    %115 = tpu.reciprocal %114 {approx = true} : vector<17x1xf32> -> vector<17x1xf32>
    %116 = vector.broadcast %115 : vector<17x1xf32> to vector<17x17xf32>
    %117 = arith.mulf %112, %116 : vector<17x17xf32>
    %cst_46 = arith.constant dense<0.000000e+00> : vector<17x16xf32>
    %118 = tpu.matmul %117, %105, %cst_46 {dimension_numbers = #tpu.dot_dimension_numbers<[1], [0], [0], [1], [0, 0, 1, 1], [], []>} : vector<17x17xf32>, vector<17x16xf32>, vector<17x16xf32> -> vector<17x16xf32>
    %c17_47 = arith.constant 17 : index
    %c16_48 = arith.constant 16 : index
    %119 = vector.load %arg22[%c17_47, %c16_48] : memref<34x32xf32, #tpu.memory_space<vmem>>, vector<17x16xf32>
    tpu.vector_store %arg22[%c17_47, %c16_48], %118 {strides = array<i32>} : memref<34x32xf32, #tpu.memory_space<vmem>>, vector<17x16xf32>,
    %c0_49 = arith.constant 0 : index
    %c0_50 = arith.constant 0 : index
    %120 = vector.load %arg22[%c0_49, %c0_50] : memref<34x32xf32, #tpu.memory_space<vmem>>, vector<34x32xf32>
    %c0_51 = arith.constant 0 : index
    %c0_52 = arith.constant 0 : index
    %c0_53 = arith.constant 0 : index
    %121 = vector.load %arg9[%c0_51, %c0_52, %c0_53] : memref<2x32x32xf32, #tpu.memory_space<vmem>>, vector<1x32x32xf32>
    %122 = vector.shape_cast %121 : vector<1x32x32xf32> to vector<32x32xf32>
    %cst_54 = arith.constant dense<0.000000e+00> : vector<34x32xf32>
    %123 = tpu.matmul %120, %122, %cst_54 {dimension_numbers = #tpu.dot_dimension_numbers<[1], [0], [0], [1], [0, 0, 1, 1], [], []>} : vector<34x32xf32>, vector<32x32xf32>, vector<34x32xf32> -> vector<34x32xf32>
    %c0_55 = arith.constant 0 : index
    %c0_56 = arith.constant 0 : index
    %c0_57 = arith.constant 0 : index
    %124 = vector.load %arg10[%c0_55, %c0_56, %c0_57] : memref<2x1x32xf32, #tpu.memory_space<vmem>>, vector<1x1x32xf32>
    %125 = vector.shape_cast %124 : vector<1x1x32xf32> to vector<1x32xf32>
    %126 = vector.broadcast %125 : vector<1x32xf32> to vector<34x32xf32>
    %127 = arith.addf %123, %126 : vector<34x32xf32>
    %128 = arith.addf %18, %127 : vector<34x32xf32>
    %c0_58 = arith.constant 0 : index
    %c0_59 = arith.constant 0 : index
    %c0_60 = arith.constant 0 : index
    %129 = vector.load %arg11[%c0_58, %c0_59, %c0_60] : memref<2x1x32xf32, #tpu.memory_space<vmem>>, vector<1x1x32xf32>
    %130 = vector.shape_cast %129 : vector<1x1x32xf32> to vector<1x32xf32>
    %c0_61 = arith.constant 0 : index
    %c0_62 = arith.constant 0 : index
    %c0_63 = arith.constant 0 : index
    %131 = vector.load %arg12[%c0_61, %c0_62, %c0_63] : memref<2x1x32xf32, #tpu.memory_space<vmem>>, vector<1x1x32xf32>
    %132 = vector.shape_cast %131 : vector<1x1x32xf32> to vector<1x32xf32>
    %cst_64 = arith.constant dense<0.000000e+00> : vector<34xf32>
    %133 = vector.multi_reduction <add>, %128, %cst_64 [1] : vector<34x32xf32> to vector<34xf32>
    %134 = vector.shape_cast %133 : vector<34xf32> to vector<34x1xf32>
    %cst_65 = arith.constant 3.200000e+01 : f32
    %135 = vector.broadcast %cst_65 : f32 to vector<34x1xf32>
    %136 = arith.divf %134, %135 : vector<34x1xf32>
    %137 = vector.broadcast %136 : vector<34x1xf32> to vector<34x32xf32>
    %138 = arith.subf %128, %137 : vector<34x32xf32>
    %139 = arith.mulf %138, %138 : vector<34x32xf32>
    %cst_66 = arith.constant dense<0.000000e+00> : vector<34xf32>
    %140 = vector.multi_reduction <add>, %139, %cst_66 [1] : vector<34x32xf32> to vector<34xf32>
    %141 = vector.shape_cast %140 : vector<34xf32> to vector<34x1xf32>
    %cst_67 = arith.constant 3.200000e+01 : f32
    %142 = vector.broadcast %cst_67 : f32 to vector<34x1xf32>
    %143 = arith.divf %141, %142 : vector<34x1xf32>
    %144 = vector.broadcast %136 : vector<34x1xf32> to vector<34x32xf32>
    %145 = arith.subf %128, %144 : vector<34x32xf32>
    %cst_68 = arith.constant 9.99999974E-6 : f32
    %146 = vector.broadcast %cst_68 : f32 to vector<34x1xf32>
    %147 = arith.addf %143, %146 : vector<34x1xf32>
    %148 = math.rsqrt %147 : vector<34x1xf32>
    %149 = vector.broadcast %148 : vector<34x1xf32> to vector<34x32xf32>
    %150 = arith.mulf %145, %149 : vector<34x32xf32>
    %151 = vector.broadcast %130 : vector<1x32xf32> to vector<34x32xf32>
    %152 = arith.mulf %150, %151 : vector<34x32xf32>
    %153 = vector.broadcast %132 : vector<1x32xf32> to vector<34x32xf32>
    %154 = arith.addf %152, %153 : vector<34x32xf32>
    %c0_69 = arith.constant 0 : index
    %c0_70 = arith.constant 0 : index
    %c0_71 = arith.constant 0 : index
    %155 = vector.load %arg13[%c0_69, %c0_70, %c0_71] : memref<2x32x128xf32, #tpu.memory_space<vmem>>, vector<1x32x128xf32>
    %156 = vector.shape_cast %155 : vector<1x32x128xf32> to vector<32x128xf32>
    %cst_72 = arith.constant dense<0.000000e+00> : vector<34x128xf32>
    %157 = tpu.matmul %154, %156, %cst_72 {dimension_numbers = #tpu.dot_dimension_numbers<[1], [0], [0], [1], [0, 0, 1, 1], [], []>} : vector<34x32xf32>, vector<32x128xf32>, vector<34x128xf32> -> vector<34x128xf32>
    %c0_73 = arith.constant 0 : index
    %c0_74 = arith.constant 0 : index
    %c0_75 = arith.constant 0 : index
    %158 = vector.load %arg14[%c0_73, %c0_74, %c0_75] : memref<2x1x128xf32, #tpu.memory_space<vmem>>, vector<1x1x128xf32>
    %159 = vector.shape_cast %158 : vector<1x1x128xf32> to vector<1x128xf32>
    %160 = vector.broadcast %159 : vector<1x128xf32> to vector<34x128xf32>
    %161 = arith.addf %157, %160 : vector<34x128xf32>
    %cst_76 = arith.constant 5.000000e-01 : f32
    %162 = vector.broadcast %cst_76 : f32 to vector<34x128xf32>
    %163 = arith.mulf %162, %161 : vector<34x128xf32>
    %cst_77 = arith.constant 2.000000e+00 : f32
    %164 = math.sqrt %cst_77 : f32
    %165 = vector.broadcast %164 : f32 to vector<34x128xf32>
    %166 = arith.divf %161, %165 : vector<34x128xf32>
    %167 = math.erf %166 : vector<34x128xf32>
    %cst_78 = arith.constant 1.000000e+00 : f32
    %168 = vector.broadcast %cst_78 : f32 to vector<34x128xf32>
    %169 = arith.addf %168, %167 : vector<34x128xf32>
    %170 = arith.mulf %163, %169 : vector<34x128xf32>
    %c0_79 = arith.constant 0 : index
    %c0_80 = arith.constant 0 : index
    %c0_81 = arith.constant 0 : index
    %171 = vector.load %arg15[%c0_79, %c0_80, %c0_81] : memref<2x128x32xf32, #tpu.memory_space<vmem>>, vector<1x128x32xf32>
    %172 = vector.shape_cast %171 : vector<1x128x32xf32> to vector<128x32xf32>
    %cst_82 = arith.constant dense<0.000000e+00> : vector<34x32xf32>
    %173 = tpu.matmul %170, %172, %cst_82 {dimension_numbers = #tpu.dot_dimension_numbers<[1], [0], [0], [1], [0, 0, 1, 1], [], []>} : vector<34x128xf32>, vector<128x32xf32>, vector<34x32xf32> -> vector<34x32xf32>
    %c0_83 = arith.constant 0 : index
    %c0_84 = arith.constant 0 : index
    %c0_85 = arith.constant 0 : index
    %174 = vector.load %arg16[%c0_83, %c0_84, %c0_85] : memref<2x1x32xf32, #tpu.memory_space<vmem>>, vector<1x1x32xf32>
    %175 = vector.shape_cast %174 : vector<1x1x32xf32> to vector<1x32xf32>
    %176 = vector.broadcast %175 : vector<1x32xf32> to vector<34x32xf32>
    %177 = arith.addf %173, %176 : vector<34x32xf32>
    %178 = arith.addf %128, %177 : vector<34x32xf32>
    %c1 = arith.constant 1 : index
    %c0_86 = arith.constant 0 : index
    %c0_87 = arith.constant 0 : index
    %179 = vector.load %arg5[%c1, %c0_86, %c0_87] : memref<2x1x32xf32, #tpu.memory_space<vmem>>, vector<1x1x32xf32>
    %180 = vector.shape_cast %179 : vector<1x1x32xf32> to vector<1x32xf32>
    %c1_88 = arith.constant 1 : index
    %c0_89 = arith.constant 0 : index
    %c0_90 = arith.constant 0 : index
    %181 = vector.load %arg6[%c1_88, %c0_89, %c0_90] : memref<2x1x32xf32, #tpu.memory_space<vmem>>, vector<1x1x32xf32>
    %182 = vector.shape_cast %181 : vector<1x1x32xf32> to vector<1x32xf32>
    %cst_91 = arith.constant dense<0.000000e+00> : vector<34xf32>
    %183 = vector.multi_reduction <add>, %178, %cst_91 [1] : vector<34x32xf32> to vector<34xf32>
    %184 = vector.shape_cast %183 : vector<34xf32> to vector<34x1xf32>
    %cst_92 = arith.constant 3.200000e+01 : f32
    %185 = vector.broadcast %cst_92 : f32 to vector<34x1xf32>
    %186 = arith.divf %184, %185 : vector<34x1xf32>
    %187 = vector.broadcast %186 : vector<34x1xf32> to vector<34x32xf32>
    %188 = arith.subf %178, %187 : vector<34x32xf32>
    %189 = arith.mulf %188, %188 : vector<34x32xf32>
    %cst_93 = arith.constant dense<0.000000e+00> : vector<34xf32>
    %190 = vector.multi_reduction <add>, %189, %cst_93 [1] : vector<34x32xf32> to vector<34xf32>
    %191 = vector.shape_cast %190 : vector<34xf32> to vector<34x1xf32>
    %cst_94 = arith.constant 3.200000e+01 : f32
    %192 = vector.broadcast %cst_94 : f32 to vector<34x1xf32>
    %193 = arith.divf %191, %192 : vector<34x1xf32>
    %194 = vector.broadcast %186 : vector<34x1xf32> to vector<34x32xf32>
    %195 = arith.subf %178, %194 : vector<34x32xf32>
    %cst_95 = arith.constant 9.99999974E-6 : f32
    %196 = vector.broadcast %cst_95 : f32 to vector<34x1xf32>
    %197 = arith.addf %193, %196 : vector<34x1xf32>
    %198 = math.rsqrt %197 : vector<34x1xf32>
    %199 = vector.broadcast %198 : vector<34x1xf32> to vector<34x32xf32>
    %200 = arith.mulf %195, %199 : vector<34x32xf32>
    %201 = vector.broadcast %180 : vector<1x32xf32> to vector<34x32xf32>
    %202 = arith.mulf %200, %201 : vector<34x32xf32>
    %203 = vector.broadcast %182 : vector<1x32xf32> to vector<34x32xf32>
    %204 = arith.addf %202, %203 : vector<34x32xf32>
    %c1_96 = arith.constant 1 : index
    %c0_97 = arith.constant 0 : index
    %c0_98 = arith.constant 0 : index
    %205 = vector.load %arg7[%c1_96, %c0_97, %c0_98] : memref<2x32x96xf32, #tpu.memory_space<vmem>>, vector<1x32x96xf32>
    %206 = vector.shape_cast %205 : vector<1x32x96xf32> to vector<32x96xf32>
    %cst_99 = arith.constant dense<0.000000e+00> : vector<34x96xf32>
    %207 = tpu.matmul %204, %206, %cst_99 {dimension_numbers = #tpu.dot_dimension_numbers<[1], [0], [0], [1], [0, 0, 1, 1], [], []>} : vector<34x32xf32>, vector<32x96xf32>, vector<34x96xf32> -> vector<34x96xf32>
    %c1_100 = arith.constant 1 : index
    %c0_101 = arith.constant 0 : index
    %c0_102 = arith.constant 0 : index
    %208 = vector.load %arg8[%c1_100, %c0_101, %c0_102] : memref<2x1x96xf32, #tpu.memory_space<vmem>>, vector<1x1x96xf32>
    %209 = vector.shape_cast %208 : vector<1x1x96xf32> to vector<1x96xf32>
    %210 = vector.broadcast %209 : vector<1x96xf32> to vector<34x96xf32>
    %211 = arith.addf %207, %210 : vector<34x96xf32>
    %212 = vector.extract_strided_slice %211 {offsets = [0, 0], sizes = [17, 16], strides = [1, 1]} : vector<34x96xf32> to vector<17x16xf32>
    %213 = vector.extract_strided_slice %211 {offsets = [0, 32], sizes = [17, 16], strides = [1, 1]} : vector<34x96xf32> to vector<17x16xf32>
    %214 = vector.extract_strided_slice %211 {offsets = [0, 64], sizes = [17, 16], strides = [1, 1]} : vector<34x96xf32> to vector<17x16xf32>
    %215 = tpu.transpose %213, [1, 0] : vector<17x16xf32> -> vector<16x17xf32>
    %cst_103 = arith.constant dense<0.000000e+00> : vector<17x17xf32>
    %216 = tpu.matmul %212, %215, %cst_103 {dimension_numbers = #tpu.dot_dimension_numbers<[1], [0], [0], [1], [0, 0, 1, 1], [], []>} : vector<17x16xf32>, vector<16x17xf32>, vector<17x17xf32> -> vector<17x17xf32>
    %cst_104 = arith.constant dense<0xFF800000> : vector<17xf32>
    %217 = vector.multi_reduction <maximumf>, %216, %cst_104 [1] : vector<17x17xf32> to vector<17xf32>
    %218 = vector.shape_cast %217 : vector<17xf32> to vector<17x1xf32>
    %219 = vector.broadcast %218 : vector<17x1xf32> to vector<17x17xf32>
    %220 = arith.subf %216, %219 : vector<17x17xf32>
    %221 = math.exp %220 : vector<17x17xf32>
    %cst_105 = arith.constant dense<0.000000e+00> : vector<17xf32>
    %222 = vector.multi_reduction <add>, %221, %cst_105 [1] : vector<17x17xf32> to vector<17xf32>
    %223 = vector.shape_cast %222 : vector<17xf32> to vector<17x1xf32>
    %224 = tpu.reciprocal %223 {approx = true} : vector<17x1xf32> -> vector<17x1xf32>
    %225 = vector.broadcast %224 : vector<17x1xf32> to vector<17x17xf32>
    %226 = arith.mulf %221, %225 : vector<17x17xf32>
    %cst_106 = arith.constant dense<0.000000e+00> : vector<17x16xf32>
    %227 = tpu.matmul %226, %214, %cst_106 {dimension_numbers = #tpu.dot_dimension_numbers<[1], [0], [0], [1], [0, 0, 1, 1], [], []>} : vector<17x17xf32>, vector<17x16xf32>, vector<17x16xf32> -> vector<17x16xf32>
    %c0_107 = arith.constant 0 : index
    %c0_108 = arith.constant 0 : index
    %228 = vector.load %arg22[%c0_107, %c0_108] : memref<34x32xf32, #tpu.memory_space<vmem>>, vector<17x16xf32>
    tpu.vector_store %arg22[%c0_107, %c0_108], %227 {strides = array<i32>} : memref<34x32xf32, #tpu.memory_space<vmem>>, vector<17x16xf32>,
    %229 = vector.extract_strided_slice %211 {offsets = [0, 16], sizes = [17, 16], strides = [1, 1]} : vector<34x96xf32> to vector<17x16xf32>
    %230 = vector.extract_strided_slice %211 {offsets = [0, 48], sizes = [17, 16], strides = [1, 1]} : vector<34x96xf32> to vector<17x16xf32>
    %231 = vector.extract_strided_slice %211 {offsets = [0, 80], sizes = [17, 16], strides = [1, 1]} : vector<34x96xf32> to vector<17x16xf32>
    %232 = tpu.transpose %230, [1, 0] : vector<17x16xf32> -> vector<16x17xf32>
    %cst_109 = arith.constant dense<0.000000e+00> : vector<17x17xf32>
    %233 = tpu.matmul %229, %232, %cst_109 {dimension_numbers = #tpu.dot_dimension_numbers<[1], [0], [0], [1], [0, 0, 1, 1], [], []>} : vector<17x16xf32>, vector<16x17xf32>, vector<17x17xf32> -> vector<17x17xf32>
    %cst_110 = arith.constant dense<0xFF800000> : vector<17xf32>
    %234 = vector.multi_reduction <maximumf>, %233, %cst_110 [1] : vector<17x17xf32> to vector<17xf32>
    %235 = vector.shape_cast %234 : vector<17xf32> to vector<17x1xf32>
    %236 = vector.broadcast %235 : vector<17x1xf32> to vector<17x17xf32>
    %237 = arith.subf %233, %236 : vector<17x17xf32>
    %238 = math.exp %237 : vector<17x17xf32>
    %cst_111 = arith.constant dense<0.000000e+00> : vector<17xf32>
    %239 = vector.multi_reduction <add>, %238, %cst_111 [1] : vector<17x17xf32> to vector<17xf32>
    %240 = vector.shape_cast %239 : vector<17xf32> to vector<17x1xf32>
    %241 = tpu.reciprocal %240 {approx = true} : vector<17x1xf32> -> vector<17x1xf32>
    %242 = vector.broadcast %241 : vector<17x1xf32> to vector<17x17xf32>
    %243 = arith.mulf %238, %242 : vector<17x17xf32>
    %cst_112 = arith.constant dense<0.000000e+00> : vector<17x16xf32>
    %244 = tpu.matmul %243, %231, %cst_112 {dimension_numbers = #tpu.dot_dimension_numbers<[1], [0], [0], [1], [0, 0, 1, 1], [], []>} : vector<17x17xf32>, vector<17x16xf32>, vector<17x16xf32> -> vector<17x16xf32>
    %c0_113 = arith.constant 0 : index
    %c16_114 = arith.constant 16 : index
    %245 = vector.load %arg22[%c0_113, %c16_114] : memref<34x32xf32, #tpu.memory_space<vmem>>, vector<17x16xf32>
    tpu.vector_store %arg22[%c0_113, %c16_114], %244 {strides = array<i32>} : memref<34x32xf32, #tpu.memory_space<vmem>>, vector<17x16xf32>,
    %246 = vector.extract_strided_slice %211 {offsets = [17, 0], sizes = [17, 16], strides = [1, 1]} : vector<34x96xf32> to vector<17x16xf32>
    %247 = vector.extract_strided_slice %211 {offsets = [17, 32], sizes = [17, 16], strides = [1, 1]} : vector<34x96xf32> to vector<17x16xf32>
    %248 = vector.extract_strided_slice %211 {offsets = [17, 64], sizes = [17, 16], strides = [1, 1]} : vector<34x96xf32> to vector<17x16xf32>
    %249 = tpu.transpose %247, [1, 0] : vector<17x16xf32> -> vector<16x17xf32>
    %cst_115 = arith.constant dense<0.000000e+00> : vector<17x17xf32>
    %250 = tpu.matmul %246, %249, %cst_115 {dimension_numbers = #tpu.dot_dimension_numbers<[1], [0], [0], [1], [0, 0, 1, 1], [], []>} : vector<17x16xf32>, vector<16x17xf32>, vector<17x17xf32> -> vector<17x17xf32>
    %cst_116 = arith.constant dense<0xFF800000> : vector<17xf32>
    %251 = vector.multi_reduction <maximumf>, %250, %cst_116 [1] : vector<17x17xf32> to vector<17xf32>
    %252 = vector.shape_cast %251 : vector<17xf32> to vector<17x1xf32>
    %253 = vector.broadcast %252 : vector<17x1xf32> to vector<17x17xf32>
    %254 = arith.subf %250, %253 : vector<17x17xf32>
    %255 = math.exp %254 : vector<17x17xf32>
    %cst_117 = arith.constant dense<0.000000e+00> : vector<17xf32>
    %256 = vector.multi_reduction <add>, %255, %cst_117 [1] : vector<17x17xf32> to vector<17xf32>
    %257 = vector.shape_cast %256 : vector<17xf32> to vector<17x1xf32>
    %258 = tpu.reciprocal %257 {approx = true} : vector<17x1xf32> -> vector<17x1xf32>
    %259 = vector.broadcast %258 : vector<17x1xf32> to vector<17x17xf32>
    %260 = arith.mulf %255, %259 : vector<17x17xf32>
    %cst_118 = arith.constant dense<0.000000e+00> : vector<17x16xf32>
    %261 = tpu.matmul %260, %248, %cst_118 {dimension_numbers = #tpu.dot_dimension_numbers<[1], [0], [0], [1], [0, 0, 1, 1], [], []>} : vector<17x17xf32>, vector<17x16xf32>, vector<17x16xf32> -> vector<17x16xf32>
    %c17_119 = arith.constant 17 : index
    %c0_120 = arith.constant 0 : index
    %262 = vector.load %arg22[%c17_119, %c0_120] : memref<34x32xf32, #tpu.memory_space<vmem>>, vector<17x16xf32>
    tpu.vector_store %arg22[%c17_119, %c0_120], %261 {strides = array<i32>} : memref<34x32xf32, #tpu.memory_space<vmem>>, vector<17x16xf32>,
    %263 = vector.extract_strided_slice %211 {offsets = [17, 16], sizes = [17, 16], strides = [1, 1]} : vector<34x96xf32> to vector<17x16xf32>
    %264 = vector.extract_strided_slice %211 {offsets = [17, 48], sizes = [17, 16], strides = [1, 1]} : vector<34x96xf32> to vector<17x16xf32>
    %265 = vector.extract_strided_slice %211 {offsets = [17, 80], sizes = [17, 16], strides = [1, 1]} : vector<34x96xf32> to vector<17x16xf32>
    %266 = tpu.transpose %264, [1, 0] : vector<17x16xf32> -> vector<16x17xf32>
    %cst_121 = arith.constant dense<0.000000e+00> : vector<17x17xf32>
    %267 = tpu.matmul %263, %266, %cst_121 {dimension_numbers = #tpu.dot_dimension_numbers<[1], [0], [0], [1], [0, 0, 1, 1], [], []>} : vector<17x16xf32>, vector<16x17xf32>, vector<17x17xf32> -> vector<17x17xf32>
    %cst_122 = arith.constant dense<0xFF800000> : vector<17xf32>
    %268 = vector.multi_reduction <maximumf>, %267, %cst_122 [1] : vector<17x17xf32> to vector<17xf32>
    %269 = vector.shape_cast %268 : vector<17xf32> to vector<17x1xf32>
    %270 = vector.broadcast %269 : vector<17x1xf32> to vector<17x17xf32>
    %271 = arith.subf %267, %270 : vector<17x17xf32>
    %272 = math.exp %271 : vector<17x17xf32>
    %cst_123 = arith.constant dense<0.000000e+00> : vector<17xf32>
    %273 = vector.multi_reduction <add>, %272, %cst_123 [1] : vector<17x17xf32> to vector<17xf32>
    %274 = vector.shape_cast %273 : vector<17xf32> to vector<17x1xf32>
    %275 = tpu.reciprocal %274 {approx = true} : vector<17x1xf32> -> vector<17x1xf32>
    %276 = vector.broadcast %275 : vector<17x1xf32> to vector<17x17xf32>
    %277 = arith.mulf %272, %276 : vector<17x17xf32>
    %cst_124 = arith.constant dense<0.000000e+00> : vector<17x16xf32>
    %278 = tpu.matmul %277, %265, %cst_124 {dimension_numbers = #tpu.dot_dimension_numbers<[1], [0], [0], [1], [0, 0, 1, 1], [], []>} : vector<17x17xf32>, vector<17x16xf32>, vector<17x16xf32> -> vector<17x16xf32>
    %c17_125 = arith.constant 17 : index
    %c16_126 = arith.constant 16 : index
    %279 = vector.load %arg22[%c17_125, %c16_126] : memref<34x32xf32, #tpu.memory_space<vmem>>, vector<17x16xf32>
    tpu.vector_store %arg22[%c17_125, %c16_126], %278 {strides = array<i32>} : memref<34x32xf32, #tpu.memory_space<vmem>>, vector<17x16xf32>,
    %c0_127 = arith.constant 0 : index
    %c0_128 = arith.constant 0 : index
    %280 = vector.load %arg22[%c0_127, %c0_128] : memref<34x32xf32, #tpu.memory_space<vmem>>, vector<34x32xf32>
    %c1_129 = arith.constant 1 : index
    %c0_130 = arith.constant 0 : index
    %c0_131 = arith.constant 0 : index
    %281 = vector.load %arg9[%c1_129, %c0_130, %c0_131] : memref<2x32x32xf32, #tpu.memory_space<vmem>>, vector<1x32x32xf32>
    %282 = vector.shape_cast %281 : vector<1x32x32xf32> to vector<32x32xf32>
    %cst_132 = arith.constant dense<0.000000e+00> : vector<34x32xf32>
    %283 = tpu.matmul %280, %282, %cst_132 {dimension_numbers = #tpu.dot_dimension_numbers<[1], [0], [0], [1], [0, 0, 1, 1], [], []>} : vector<34x32xf32>, vector<32x32xf32>, vector<34x32xf32> -> vector<34x32xf32>
    %c1_133 = arith.constant 1 : index
    %c0_134 = arith.constant 0 : index
    %c0_135 = arith.constant 0 : index
    %284 = vector.load %arg10[%c1_133, %c0_134, %c0_135] : memref<2x1x32xf32, #tpu.memory_space<vmem>>, vector<1x1x32xf32>
    %285 = vector.shape_cast %284 : vector<1x1x32xf32> to vector<1x32xf32>
    %286 = vector.broadcast %285 : vector<1x32xf32> to vector<34x32xf32>
    %287 = arith.addf %283, %286 : vector<34x32xf32>
    %288 = arith.addf %178, %287 : vector<34x32xf32>
    %c1_136 = arith.constant 1 : index
    %c0_137 = arith.constant 0 : index
    %c0_138 = arith.constant 0 : index
    %289 = vector.load %arg11[%c1_136, %c0_137, %c0_138] : memref<2x1x32xf32, #tpu.memory_space<vmem>>, vector<1x1x32xf32>
    %290 = vector.shape_cast %289 : vector<1x1x32xf32> to vector<1x32xf32>
    %c1_139 = arith.constant 1 : index
    %c0_140 = arith.constant 0 : index
    %c0_141 = arith.constant 0 : index
    %291 = vector.load %arg12[%c1_139, %c0_140, %c0_141] : memref<2x1x32xf32, #tpu.memory_space<vmem>>, vector<1x1x32xf32>
    %292 = vector.shape_cast %291 : vector<1x1x32xf32> to vector<1x32xf32>
    %cst_142 = arith.constant dense<0.000000e+00> : vector<34xf32>
    %293 = vector.multi_reduction <add>, %288, %cst_142 [1] : vector<34x32xf32> to vector<34xf32>
    %294 = vector.shape_cast %293 : vector<34xf32> to vector<34x1xf32>
    %cst_143 = arith.constant 3.200000e+01 : f32
    %295 = vector.broadcast %cst_143 : f32 to vector<34x1xf32>
    %296 = arith.divf %294, %295 : vector<34x1xf32>
    %297 = vector.broadcast %296 : vector<34x1xf32> to vector<34x32xf32>
    %298 = arith.subf %288, %297 : vector<34x32xf32>
    %299 = arith.mulf %298, %298 : vector<34x32xf32>
    %cst_144 = arith.constant dense<0.000000e+00> : vector<34xf32>
    %300 = vector.multi_reduction <add>, %299, %cst_144 [1] : vector<34x32xf32> to vector<34xf32>
    %301 = vector.shape_cast %300 : vector<34xf32> to vector<34x1xf32>
    %cst_145 = arith.constant 3.200000e+01 : f32
    %302 = vector.broadcast %cst_145 : f32 to vector<34x1xf32>
    %303 = arith.divf %301, %302 : vector<34x1xf32>
    %304 = vector.broadcast %296 : vector<34x1xf32> to vector<34x32xf32>
    %305 = arith.subf %288, %304 : vector<34x32xf32>
    %cst_146 = arith.constant 9.99999974E-6 : f32
    %306 = vector.broadcast %cst_146 : f32 to vector<34x1xf32>
    %307 = arith.addf %303, %306 : vector<34x1xf32>
    %308 = math.rsqrt %307 : vector<34x1xf32>
    %309 = vector.broadcast %308 : vector<34x1xf32> to vector<34x32xf32>
    %310 = arith.mulf %305, %309 : vector<34x32xf32>
    %311 = vector.broadcast %290 : vector<1x32xf32> to vector<34x32xf32>
    %312 = arith.mulf %310, %311 : vector<34x32xf32>
    %313 = vector.broadcast %292 : vector<1x32xf32> to vector<34x32xf32>
    %314 = arith.addf %312, %313 : vector<34x32xf32>
    %c1_147 = arith.constant 1 : index
    %c0_148 = arith.constant 0 : index
    %c0_149 = arith.constant 0 : index
    %315 = vector.load %arg13[%c1_147, %c0_148, %c0_149] : memref<2x32x128xf32, #tpu.memory_space<vmem>>, vector<1x32x128xf32>
    %316 = vector.shape_cast %315 : vector<1x32x128xf32> to vector<32x128xf32>
    %cst_150 = arith.constant dense<0.000000e+00> : vector<34x128xf32>
    %317 = tpu.matmul %314, %316, %cst_150 {dimension_numbers = #tpu.dot_dimension_numbers<[1], [0], [0], [1], [0, 0, 1, 1], [], []>} : vector<34x32xf32>, vector<32x128xf32>, vector<34x128xf32> -> vector<34x128xf32>
    %c1_151 = arith.constant 1 : index
    %c0_152 = arith.constant 0 : index
    %c0_153 = arith.constant 0 : index
    %318 = vector.load %arg14[%c1_151, %c0_152, %c0_153] : memref<2x1x128xf32, #tpu.memory_space<vmem>>, vector<1x1x128xf32>
    %319 = vector.shape_cast %318 : vector<1x1x128xf32> to vector<1x128xf32>
    %320 = vector.broadcast %319 : vector<1x128xf32> to vector<34x128xf32>
    %321 = arith.addf %317, %320 : vector<34x128xf32>
    %cst_154 = arith.constant 5.000000e-01 : f32
    %322 = vector.broadcast %cst_154 : f32 to vector<34x128xf32>
    %323 = arith.mulf %322, %321 : vector<34x128xf32>
    %cst_155 = arith.constant 2.000000e+00 : f32
    %324 = math.sqrt %cst_155 : f32
    %325 = vector.broadcast %324 : f32 to vector<34x128xf32>
    %326 = arith.divf %321, %325 : vector<34x128xf32>
    %327 = math.erf %326 : vector<34x128xf32>
    %cst_156 = arith.constant 1.000000e+00 : f32
    %328 = vector.broadcast %cst_156 : f32 to vector<34x128xf32>
    %329 = arith.addf %328, %327 : vector<34x128xf32>
    %330 = arith.mulf %323, %329 : vector<34x128xf32>
    %c1_157 = arith.constant 1 : index
    %c0_158 = arith.constant 0 : index
    %c0_159 = arith.constant 0 : index
    %331 = vector.load %arg15[%c1_157, %c0_158, %c0_159] : memref<2x128x32xf32, #tpu.memory_space<vmem>>, vector<1x128x32xf32>
    %332 = vector.shape_cast %331 : vector<1x128x32xf32> to vector<128x32xf32>
    %cst_160 = arith.constant dense<0.000000e+00> : vector<34x32xf32>
    %333 = tpu.matmul %330, %332, %cst_160 {dimension_numbers = #tpu.dot_dimension_numbers<[1], [0], [0], [1], [0, 0, 1, 1], [], []>} : vector<34x128xf32>, vector<128x32xf32>, vector<34x32xf32> -> vector<34x32xf32>
    %c1_161 = arith.constant 1 : index
    %c0_162 = arith.constant 0 : index
    %c0_163 = arith.constant 0 : index
    %334 = vector.load %arg16[%c1_161, %c0_162, %c0_163] : memref<2x1x32xf32, #tpu.memory_space<vmem>>, vector<1x1x32xf32>
    %335 = vector.shape_cast %334 : vector<1x1x32xf32> to vector<1x32xf32>
    %336 = vector.broadcast %335 : vector<1x32xf32> to vector<34x32xf32>
    %337 = arith.addf %333, %336 : vector<34x32xf32>
    %338 = arith.addf %288, %337 : vector<34x32xf32>
    %339 = vector.extract_strided_slice %338 {offsets = [0, 0], sizes = [1, 32], strides = [1, 1]} : vector<34x32xf32> to vector<1x32xf32>
    %340 = vector.extract_strided_slice %338 {offsets = [17, 0], sizes = [1, 32], strides = [1, 1]} : vector<34x32xf32> to vector<1x32xf32>
    %341 = tpu.concatenate %339, %340 in 0 : vector<1x32xf32>, vector<1x32xf32> -> vector<2x32xf32>
    %c0_164 = arith.constant 0 : index
    %c0_165 = arith.constant 0 : index
    %342 = vector.load %arg17[%c0_164, %c0_165] : memref<1x32xf32, #tpu.memory_space<vmem>>, vector<1x32xf32>
    %c0_166 = arith.constant 0 : index
    %c0_167 = arith.constant 0 : index
    %343 = vector.load %arg18[%c0_166, %c0_167] : memref<1x32xf32, #tpu.memory_space<vmem>>, vector<1x32xf32>
    %cst_168 = arith.constant dense<0.000000e+00> : vector<2xf32>
    %344 = vector.multi_reduction <add>, %341, %cst_168 [1] : vector<2x32xf32> to vector<2xf32>
    %345 = vector.shape_cast %344 : vector<2xf32> to vector<2x1xf32>
    %cst_169 = arith.constant 3.200000e+01 : f32
    %346 = vector.broadcast %cst_169 : f32 to vector<2x1xf32>
    %347 = arith.divf %345, %346 : vector<2x1xf32>
    %348 = vector.broadcast %347 : vector<2x1xf32> to vector<2x32xf32>
    %349 = arith.subf %341, %348 : vector<2x32xf32>
    %350 = arith.mulf %349, %349 : vector<2x32xf32>
    %cst_170 = arith.constant dense<0.000000e+00> : vector<2xf32>
    %351 = vector.multi_reduction <add>, %350, %cst_170 [1] : vector<2x32xf32> to vector<2xf32>
    %352 = vector.shape_cast %351 : vector<2xf32> to vector<2x1xf32>
    %cst_171 = arith.constant 3.200000e+01 : f32
    %353 = vector.broadcast %cst_171 : f32 to vector<2x1xf32>
    %354 = arith.divf %352, %353 : vector<2x1xf32>
    %355 = vector.broadcast %347 : vector<2x1xf32> to vector<2x32xf32>
    %356 = arith.subf %341, %355 : vector<2x32xf32>
    %cst_172 = arith.constant 9.99999974E-6 : f32
    %357 = vector.broadcast %cst_172 : f32 to vector<2x1xf32>
    %358 = arith.addf %354, %357 : vector<2x1xf32>
    %359 = math.rsqrt %358 : vector<2x1xf32>
    %360 = vector.broadcast %359 : vector<2x1xf32> to vector<2x32xf32>
    %361 = arith.mulf %356, %360 : vector<2x32xf32>
    %362 = vector.broadcast %342 : vector<1x32xf32> to vector<2x32xf32>
    %363 = arith.mulf %361, %362 : vector<2x32xf32>
    %364 = vector.broadcast %343 : vector<1x32xf32> to vector<2x32xf32>
    %365 = arith.addf %363, %364 : vector<2x32xf32>
    %c0_173 = arith.constant 0 : index
    %c0_174 = arith.constant 0 : index
    %366 = vector.load %arg19[%c0_173, %c0_174] : memref<32x16xf32, #tpu.memory_space<vmem>>, vector<32x16xf32>
    %cst_175 = arith.constant dense<0.000000e+00> : vector<2x16xf32>
    %367 = tpu.matmul %365, %366, %cst_175 {dimension_numbers = #tpu.dot_dimension_numbers<[1], [0], [0], [1], [0, 0, 1, 1], [], []>} : vector<2x32xf32>, vector<32x16xf32>, vector<2x16xf32> -> vector<2x16xf32>
    %c0_176 = arith.constant 0 : index
    %c0_177 = arith.constant 0 : index
    %368 = vector.load %arg20[%c0_176, %c0_177] : memref<1x16xf32, #tpu.memory_space<vmem>>, vector<1x16xf32>
    %369 = vector.broadcast %368 : vector<1x16xf32> to vector<2x16xf32>
    %370 = arith.addf %367, %369 : vector<2x16xf32>
    %c0_178 = arith.constant 0 : index
    %c0_179 = arith.constant 0 : index
    %371 = vector.load %arg21[%c0_178, %c0_179] : memref<2x16xf32, #tpu.memory_space<vmem>>, vector<2x16xf32>
    tpu.vector_store %arg21[%c0_178, %c0_179], %370 {strides = array<i32>} : memref<2x16xf32, #tpu.memory_space<vmem>>, vector<2x16xf32>,
    return
  }
}

</mosaic_0001>

<llo_original>
// kernel: vit_forward.1
$region0: #{vit_forward.1}
  #allocation0 [shape = 'u32[]', space=smem, size = 0x4, offset = 0x4, fixed_abs, tag = 'smem constant byte address 0x4 - core index']
  #allocation1 [shape = 'u32[72,128]{1,0:T(1,128)}', space=vmem, size = 0x9000, scoped, tag = 'internal scratch']
  #allocation2 [shape = 'f32[34,32]{1,0:T(8,128)}', space=vmem, size = 0x5000, scoped, tag = 'scratch operand']
  %s0 = inlined_call_operand.vmem [shape: f32[32,48], index: 0, kind: input, shape index: {}]
  %s1 = inlined_call_operand.vmem [shape: f32[48,32], index: 1, kind: input, shape index: {}]
  %s2 = inlined_call_operand.vmem [shape: f32[1,32], index: 2, kind: input, shape index: {}]
  %s3 = inlined_call_operand.vmem [shape: f32[1,32], index: 3, kind: input, shape index: {}]
  %s4 = inlined_call_operand.vmem [shape: f32[17,32], index: 4, kind: input, shape index: {}]
  %s5 = inlined_call_operand.vmem [shape: f32[2,1,32], index: 5, kind: input, shape index: {}]
  %s6 = inlined_call_operand.vmem [shape: f32[2,1,32], index: 6, kind: input, shape index: {}]
  %s7 = inlined_call_operand.vmem [shape: f32[2,32,96], index: 7, kind: input, shape index: {}]
  %s8 = inlined_call_operand.vmem [shape: f32[2,1,96], index: 8, kind: input, shape index: {}]
  %s9 = inlined_call_operand.vmem [shape: f32[2,32,32], index: 9, kind: input, shape index: {}]
  %s10 = inlined_call_operand.vmem [shape: f32[2,1,32], index: 10, kind: input, shape index: {}]
  %s11 = inlined_call_operand.vmem [shape: f32[2,1,32], index: 11, kind: input, shape index: {}]
  %s12 = inlined_call_operand.vmem [shape: f32[2,1,32], index: 12, kind: input, shape index: {}]
  %s13 = inlined_call_operand.vmem [shape: f32[2,32,128], index: 13, kind: input, shape index: {}]
  %s14 = inlined_call_operand.vmem [shape: f32[2,1,128], index: 14, kind: input, shape index: {}]
  %s15 = inlined_call_operand.vmem [shape: f32[2,128,32], index: 15, kind: input, shape index: {}]
  %s16 = inlined_call_operand.vmem [shape: f32[2,1,32], index: 16, kind: input, shape index: {}]
  %s17 = inlined_call_operand.vmem [shape: f32[1,32], index: 17, kind: input, shape index: {}]
  %s18 = inlined_call_operand.vmem [shape: f32[1,32], index: 18, kind: input, shape index: {}]
  %s19 = inlined_call_operand.vmem [shape: f32[32,16], index: 19, kind: input, shape index: {}]
  %s20 = inlined_call_operand.vmem [shape: f32[1,16], index: 20, kind: input, shape index: {}]
  %s21 = inlined_call_operand.hbm [shape: f32[2,16], index: 21, kind: output, shape index: {}]
  %s22 = sld [smem:[#allocation0]]
  $region94: #{vit_forward.1} parent=0
    _
  %s24 = ssub.s32 1, %s22
  %s25 = scalar_select 0, %s24, %s22
  $region1: #{vit_forward.1} parent=0
    #allocation3 [shape = 'u8[1024]{0}', space=vmem, size = 0x400, scoped, tag = 'output window, operand 0, single buffered']
    #allocation4 [shape = 's32[1]{0}', space=sflag, size = 0x4, scoped, tag = 'scoped memory for vit_forward.1']
    %26 = vsyncpa [#allocation4], 0
    // Predicated region
    $region2: #{vit_forward.1} parent=1 // pred_check
      _
    $region3: #{vit_forward.1} parent=1 // pred_check_branch
      %28 = sbr.rel (0) target = $region5
    $region4: #{vit_forward.1} parent=1 // pred_region
      _
    $region5: #{vit_forward.1} parent=1 // pred_fallthru
      _
    // Predicated region
    $region6: #{vit_forward.1} parent=1 // pred_check
      _
    $region7: #{vit_forward.1} parent=1 // pred_check_branch
      %30 = sbr.rel (0) target = $region9
    $region8: #{vit_forward.1} parent=1 // pred_region
      _
    $region9: #{vit_forward.1} parent=1 // pred_fallthru
      _
    // Predicated region
    $region10: #{vit_forward.1} parent=1 // pred_check
      _
    $region11: #{vit_forward.1} parent=1 // pred_check_branch
      %32 = sbr.rel (0) target = $region13
    $region12: #{vit_forward.1} parent=1 // pred_region
      _
    $region13: #{vit_forward.1} parent=1 // pred_fallthru
      _
    // Predicated region
    $region14: #{vit_forward.1} parent=1 // pred_check
      _
    $region15: #{vit_forward.1} parent=1 // pred_check_branch
      %34 = sbr.rel (0) target = $region17
    $region16: #{vit_forward.1} parent=1 // pred_region
      _
    $region17: #{vit_forward.1} parent=1 // pred_fallthru
      _
    // Predicated region
    $region18: #{vit_forward.1} parent=1 // pred_check
      _
    $region19: #{vit_forward.1} parent=1 // pred_check_branch
      %36 = sbr.rel (0) target = $region21
    $region20: #{vit_forward.1} parent=1 // pred_region
      _
    $region21: #{vit_forward.1} parent=1 // pred_fallthru
      _
    // Predicated region
    $region22: #{vit_forward.1} parent=1 // pred_check
      _
    $region23: #{vit_forward.1} parent=1 // pred_check_branch
      %38 = sbr.rel (0) target = $region25
    $region24: #{vit_forward.1} parent=1 // pred_region
      _
    $region25: #{vit_forward.1} parent=1 // pred_fallthru
      _
    // Predicated region
    $region26: #{vit_forward.1} parent=1 // pred_check
      _
    $region27: #{vit_forward.1} parent=1 // pred_check_branch
      %40 = sbr.rel (0) target = $region29
    $region28: #{vit_forward.1} parent=1 // pred_region
      _
    $region29: #{vit_forward.1} parent=1 // pred_fallthru
      _
    // Predicated region
    $region30: #{vit_forward.1} parent=1 // pred_check
      _
    $region31: #{vit_forward.1} parent=1 // pred_check_branch
      %42 = sbr.rel (0) target = $region33
    $region32: #{vit_forward.1} parent=1 // pred_region
      _
    $region33: #{vit_forward.1} parent=1 // pred_fallthru
      _
    // Predicated region
    $region34: #{vit_forward.1} parent=1 // pred_check
      _
    $region35: #{vit_forward.1} parent=1 // pred_check_branch
      %44 = sbr.rel (0) target = $region37
    $region36: #{vit_forward.1} parent=1 // pred_region
      _
    $region37: #{vit_forward.1} parent=1 // pred_fallthru
      _
    // Predicated region
    $region38: #{vit_forward.1} parent=1 // pred_check
      _
    $region39: #{vit_forward.1} parent=1 // pred_check_branch
      %46 = sbr.rel (0) target = $region41
    $region40: #{vit_forward.1} parent=1 // pred_region
      _
    $region41: #{vit_forward.1} parent=1 // pred_fallthru
      _
    // Predicated region
    $region42: #{vit_forward.1} parent=1 // pred_check
      _
    $region43: #{vit_forward.1} parent=1 // pred_check_branch
      %48 = sbr.rel (0) target = $region45
    $region44: #{vit_forward.1} parent=1 // pred_region
      _
    $region45: #{vit_forward.1} parent=1 // pred_fallthru
      _
    // Predicated region
    $region46: #{vit_forward.1} parent=1 // pred_check
      _
    $region47: #{vit_forward.1} parent=1 // pred_check_branch
      %50 = sbr.rel (0) target = $region49
    $region48: #{vit_forward.1} parent=1 // pred_region
      _
    $region49: #{vit_forward.1} parent=1 // pred_fallthru
      _
    // Predicated region
    $region50: #{vit_forward.1} parent=1 // pred_check
      _
    $region51: #{vit_forward.1} parent=1 // pred_check_branch
      %52 = sbr.rel (0) target = $region53
    $region52: #{vit_forward.1} parent=1 // pred_region
      _
    $region53: #{vit_forward.1} parent=1 // pred_fallthru
      _
    // Predicated region
    $region54: #{vit_forward.1} parent=1 // pred_check
      _
    $region55: #{vit_forward.1} parent=1 // pred_check_branch
      %54 = sbr.rel (0) target = $region57
    $region56: #{vit_forward.1} parent=1 // pred_region
      _
    $region57: #{vit_forward.1} parent=1 // pred_fallthru
      _
    // Predicated region
    $region58: #{vit_forward.1} parent=1 // pred_check
      _
    $region59: #{vit_forward.1} parent=1 // pred_check_branch
      %56 = sbr.rel (0) target = $region61
    $region60: #{vit_forward.1} parent=1 // pred_region
      _
    $region61: #{vit_forward.1} parent=1 // pred_fallthru
      _
    // Predicated region
    $region62: #{vit_forward.1} parent=1 // pred_check
      _
    $region63: #{vit_forward.1} parent=1 // pred_check_branch
      %58 = sbr.rel (0) target = $region65
    $region64: #{vit_forward.1} parent=1 // pred_region
      _
    $region65: #{vit_forward.1} parent=1 // pred_fallthru
      _
    // Predicated region
    $region66: #{vit_forward.1} parent=1 // pred_check
      _
    $region67: #{vit_forward.1} parent=1 // pred_check_branch
      %60 = sbr.rel (0) target = $region69
    $region68: #{vit_forward.1} parent=1 // pred_region
      _
    $region69: #{vit_forward.1} parent=1 // pred_fallthru
      _
    // Predicated region
    $region70: #{vit_forward.1} parent=1 // pred_check
      _
    $region71: #{vit_forward.1} parent=1 // pred_check_branch
      %62 = sbr.rel (0) target = $region73
    $region72: #{vit_forward.1} parent=1 // pred_region
      _
    $region73: #{vit_forward.1} parent=1 // pred_fallthru
      _
    // Predicated region
    $region74: #{vit_forward.1} parent=1 // pred_check
      _
    $region75: #{vit_forward.1} parent=1 // pred_check_branch
      %64 = sbr.rel (0) target = $region77
    $region76: #{vit_forward.1} parent=1 // pred_region
      _
    $region77: #{vit_forward.1} parent=1 // pred_fallthru
      _
    // Predicated region
    $region78: #{vit_forward.1} parent=1 // pred_check
      _
    $region79: #{vit_forward.1} parent=1 // pred_check_branch
      %66 = sbr.rel (0) target = $region81
    $region80: #{vit_forward.1} parent=1 // pred_region
      _
    $region81: #{vit_forward.1} parent=1 // pred_fallthru
      _
    // Predicated region
    $region82: #{vit_forward.1} parent=1 // pred_check
      _
    $region83: #{vit_forward.1} parent=1 // pred_check_branch
      %68 = sbr.rel (0) target = $region85
    $region84: #{vit_forward.1} parent=1 // pred_region
      _
    $region85: #{vit_forward.1} parent=1 // pred_fallthru
      _
    %v69 = vld [vmem:[%s0] sm:$0xff]
    %v70 = vld [vmem:[%s0 + $0x8] sm:$0xff]
    %v71 = vld [vmem:[%s0 + $0x10] sm:$0xff]
    %v72 = vld [vmem:[%s0 + $0x18] sm:$0xff]
    %v73 = vld [vmem:[%s1] sm:$0xff]
    %v74 = vld [vmem:[%s1 + $0x8] sm:$0xff]
    %v75 = vld [vmem:[%s1 + $0x10] sm:$0xff]
    %v76 = vld [vmem:[%s1 + $0x18] sm:$0xff]
    %v77 = vld [vmem:[%s1 + $0x20] sm:$0xff]
    %v78 = vld [vmem:[%s1 + $0x28] sm:$0xff]
    %v79 = vld [vmem:[%s2] sm:$0x1]
    %v81 = vperm.slane %v79, 0
    %vm83 = vcmask 392192
    %v85 = vsel %vm83, %v69, 0
    %v88 = vsel %vm83, %v70, 0
    %v91 = vsel %vm83, %v71, 0
    %v94 = vsel %vm83, %v72, 0
    %96 = vmatpush.msra.mxu0 0.0
    %97 = vmatpush.msra.mxu0 0.0
    %98 = vmatpush.msra.mxu0 0.0
    %99 = vmatpush.msra.mxu0 0.0
    %100 = vmatpush.msra.mxu0 0.0
    %101 = vmatpush.msra.mxu0 0.0
    %102 = vmatpush.msra.mxu0 0.0
    %103 = vmatpush.msra.mxu0 0.0
    %104 = vmatpush.msra.mxu0 0.0
    %105 = vmatpush.msra.mxu0 0.0
    %106 = vmatpush.msra.mxu0 %v78
    %107 = vmatpush.msra.mxu0 %v77
    %108 = vmatpush.msra.mxu0 %v76
    %109 = vmatpush.msra.mxu0 %v75
    %110 = vmatpush.msra.mxu0 %v74
    %111 = vmatpush.msra.mxu0 %v73
    %112 = vmatmul.f32.gmra.mxu0 %v85
    %v113 = vpop.f32.mrf.mxu0
    %v114 = vadd.f32 %v81, %v113
    %115 = vmatmul.f32.gmra.mxu0 %v88
    %v116 = vpop.f32.mrf.mxu0
    %v117 = vadd.f32 %v81, %v116
    %118 = vmatmul.f32.gmra.mxu0 %v91
    %v119 = vpop.f32.mrf.mxu0
    %v120 = vadd.f32 %v81, %v119
    %121 = vmatmul.f32.gmra.mxu0 %v94
    %v122 = vpop.f32.mrf.mxu0
    %v123 = vadd.f32 %v81, %v122
    %124 = vdwg.mxu0
    %v125 = vld [vmem:[%s3] sm:$0x1]
    %v126 = vld [vmem:[%s4] sm:$0xff]
    %v127 = vld [vmem:[%s4 + $0x8] sm:$0xff]
    %v128 = vld [vmem:[%s4 + $0x10] sm:$0x1]
    %v129 = vadd.f32 %v125, %v126
    %vm133 = vcmask 1046528
    %v134 = vrot.slane %v126, 1
    %v135 = vrot.slane %v127, 1
    %v136 = vsel %vm133, %v134, %v135
    %v137 = vrot.slane %v128, 1
    %v138 = vsel %vm133, %v135, %v137
    %v141 = vadd.f32 %v114, %v136
    %v142 = vadd.f32 %v117, %v138
    %v143 = vadd.f32 %v120, %v136
    %v144 = vadd.f32 %v123, %v138
    %vm147 = vcmask 1040384
    %v148 = vrot.slane %v141, 7
    %v149 = vrot.slane %v142, 7
    %v150 = vsel %vm147, %v148, %v149
    %v155 = vperm.slane %v129, 0
    %vm159 = vcmask 1041408
    %v160 = vrot.slane %v143, 6
    %v161 = vrot.slane %v144, 6
    %v162 = vsel %vm159, %v160, %v161
    %v166 = vsel %vm147, %v129, %v148
    %v167 = vsel %vm147, %v149, %v155
    %v168 = vsel %vm159, %v167, %v160
    %v169 = vld [vmem:[%s5] sm:$0x1]
    %v170 = vld [vmem:[%s6] sm:$0x1]
    %vm171 = vcmask 261120
    %v172 = vsel %vm171, %v166, 0.0
    %173 = vadd.xlane.f32.xlu0 %v172
    %v174 = vpop.xlane.xlu0 %173
    %v175 = vsel %vm171, %v150, 0.0
    %176 = vadd.xlane.f32.xlu0 %v175
    %v177 = vpop.xlane.xlu0 %176
    %v178 = vsel %vm171, %v168, 0.0
    %179 = vadd.xlane.f32.xlu0 %v178
    %v180 = vpop.xlane.xlu0 %179
    %v181 = vsel %vm171, %v162, 0.0
    %182 = vadd.xlane.f32.xlu0 %v181
    %v183 = vpop.xlane.xlu0 %182
    %vm184 = vcmask 254976
    %v185 = vsel %vm184, %v161, 0.0
    %186 = vadd.xlane.f32.xlu0 %v185
    %v187 = vpop.xlane.xlu0 %186
    %v188 = vrcp.pop 32.0
    %v189 = vmul.f32 32.0, %v188
    %v190 = vsub.f32 1.0, %v189
    %v191 = vmul.f32 %v188, %v190
    %v192 = vadd.f32 %v188, %v191
    %vm193 = vweird.f32 %v188
    %v194 = vsel %vm193, %v188, %v192
    %v195 = vmul.f32 %v174, %v194
    %v196 = vmul.f32 %v177, %v194
    %v197 = vmul.f32 %v180, %v194
    %v198 = vmul.f32 %v183, %v194
    %v199 = vmul.f32 %v187, %v194
    %v200 = vsub.f32 %v166, %v195
    %v201 = vsub.f32 %v150, %v196
    %v202 = vsub.f32 %v168, %v197
    %v203 = vsub.f32 %v162, %v198
    %v204 = vsub.f32 %v161, %v199
    %v205 = vmul.f32 %v200, %v200
    %v206 = vmul.f32 %v201, %v201
    %v207 = vmul.f32 %v202, %v202
    %v208 = vmul.f32 %v203, %v203
    %v209 = vmul.f32 %v204, %v204
    %v210 = vsel %vm171, %v205, 0.0
    %211 = vadd.xlane.f32.xlu0 %v210
    %v212 = vpop.xlane.xlu0 %211
    %v213 = vsel %vm171, %v206, 0.0
    %214 = vadd.xlane.f32.xlu0 %v213
    %v215 = vpop.xlane.xlu0 %214
    %v216 = vsel %vm171, %v207, 0.0
    %217 = vadd.xlane.f32.xlu0 %v216
    %v218 = vpop.xlane.xlu0 %217
    %v219 = vsel %vm171, %v208, 0.0
    %220 = vadd.xlane.f32.xlu0 %v219
    %v221 = vpop.xlane.xlu0 %220
    %v222 = vsel %vm184, %v209, 0.0
    %223 = vadd.xlane.f32.xlu0 %v222
    %v224 = vpop.xlane.xlu0 %223
    %v225 = vmul.f32 %v212, %v194
    %v226 = vmul.f32 %v215, %v194
    %v227 = vmul.f32 %v218, %v194
    %v228 = vmul.f32 %v221, %v194
    %v229 = vmul.f32 %v224, %v194
    %v230 = vadd.f32 %v225, 1e-05
    %v231 = vadd.f32 %v226, 1e-05
    %v232 = vadd.f32 %v227, 1e-05
    %v233 = vadd.f32 %v228, 1e-05
    %v234 = vadd.f32 %v229, 1e-05
    %v235 = vrsqrt.pop %v230
    %v236 = vmul.f32 %v235, %v230
    %v237 = vmul.f32 %v236, %v235
    %v238 = vmul.f32 0.5, %v237
    %v239 = vsub.f32 1.5, %v238
    %v240 = vmul.f32 %v235, %v239
    %vm241 = vweird.f32 %v230
    %vm242 = vweird.f32 %v235
    %vm243 = vmor %vm241, %vm242
    %v244 = vsel %vm243, %v235, %v240
    %v245 = vrsqrt.pop %v231
    %v246 = vmul.f32 %v245, %v231
    %v247 = vmul.f32 %v246, %v245
    %v248 = vmul.f32 0.5, %v247
    %v249 = vsub.f32 1.5, %v248
    %v250 = vmul.f32 %v245, %v249
    %vm251 = vweird.f32 %v231
    %vm252 = vweird.f32 %v245
    %vm253 = vmor %vm251, %vm252
    %v254 = vsel %vm253, %v245, %v250
    %v255 = vrsqrt.pop %v232
    %v256 = vmul.f32 %v255, %v232
    %v257 = vmul.f32 %v256, %v255
    %v258 = vmul.f32 0.5, %v257
    %v259 = vsub.f32 1.5, %v258
    %v260 = vmul.f32 %v255, %v259
    %vm261 = vweird.f32 %v232
    %vm262 = vweird.f32 %v255
    %vm263 = vmor %vm261, %vm262
    %v264 = vsel %vm263, %v255, %v260
    %v265 = vrsqrt.pop %v233
    %v266 = vmul.f32 %v265, %v233
    %v267 = vmul.f32 %v266, %v265
    %v268 = vmul.f32 0.5, %v267
    %v269 = vsub.f32 1.5, %v268
    %v270 = vmul.f32 %v265, %v269
    %vm271 = vweird.f32 %v233
    %vm272 = vweird.f32 %v265
    %vm273 = vmor %vm271, %vm272
    %v274 = vsel %vm273, %v265, %v270
    %v275 = vrsqrt.pop %v234
    %v276 = vmul.f32 %v275, %v234
    %v277 = vmul.f32 %v276, %v275
    %v278 = vmul.f32 0.5, %v277
    %v279 = vsub.f32 1.5, %v278
    %v280 = vmul.f32 %v275, %v279
    %vm281 = vweird.f32 %v234
    %vm282 = vweird.f32 %v275
    %vm283 = vmor %vm281, %vm282
    %v284 = vsel %vm283, %v275, %v280
    %v285 = vmul.f32 %v200, %v244
    %v286 = vmul.f32 %v201, %v254
    %v287 = vmul.f32 %v202, %v264
    %v288 = vmul.f32 %v203, %v274
    %v289 = vmul.f32 %v204, %v284
    %v291 = vperm.slane %v169, 0
    %v293 = vmul.f32 %v285, %v291
    %v294 = vmul.f32 %v286, %v291
    %v295 = vmul.f32 %v287, %v291
    %v296 = vmul.f32 %v288, %v291
    %v297 = vmul.f32 %v289, %v291
    %v299 = vperm.slane %v170, 0
    %v301 = vadd.f32 %v293, %v299
    %v302 = vadd.f32 %v294, %v299
    %v303 = vadd.f32 %v295, %v299
    %v304 = vadd.f32 %v296, %v299
    %v305 = vadd.f32 %v297, %v299
    %v306 = vld [vmem:[%s7] sm:$0xff]
    %v307 = vld [vmem:[%s7 + $0x8] sm:$0xff]
    %v308 = vld [vmem:[%s7 + $0x10] sm:$0xff]
    %v309 = vld [vmem:[%s7 + $0x18] sm:$0xff]
    %v310 = vld [vmem:[%s8] sm:$0x1]
    %v312 = vperm.slane %v310, 0
    %v315 = vsel %vm171, %v301, 0
    %v318 = vsel %vm171, %v302, 0
    %v321 = vsel %vm171, %v303, 0
    %v324 = vsel %vm171, %v304, 0
    %v327 = vsel %vm171, %v305, 0
    %329 = vmatpush.msra.mxu0 0.0
    %330 = vmatpush.msra.mxu0 0.0
    %331 = vmatpush.msra.mxu0 0.0
    %332 = vmatpush.msra.mxu0 0.0
    %333 = vmatpush.msra.mxu0 0.0
    %334 = vmatpush.msra.mxu0 0.0
    %335 = vmatpush.msra.mxu0 0.0
    %336 = vmatpush.msra.mxu0 0.0
    %337 = vmatpush.msra.mxu0 0.0
    %338 = vmatpush.msra.mxu0 0.0
    %339 = vmatpush.msra.mxu0 0.0
    %340 = vmatpush.msra.mxu0 0.0
    %341 = vmatpush.msra.mxu0 %v309
    %342 = vmatpush.msra.mxu0 %v308
    %343 = vmatpush.msra.mxu0 %v307
    %344 = vmatpush.msra.mxu0 %v306
    %345 = vmatmul.f32.gmra.mxu0 %v315
    %v346 = vpop.f32.mrf.mxu0
    %v347 = vadd.f32 %v312, %v346
    %348 = vmatmul.f32.gmra.mxu0 %v318
    %v349 = vpop.f32.mrf.mxu0
    %v350 = vadd.f32 %v312, %v349
    %351 = vmatmul.f32.gmra.mxu0 %v321
    %v352 = vpop.f32.mrf.mxu0
    %v353 = vadd.f32 %v312, %v352
    %354 = vmatmul.f32.gmra.mxu0 %v324
    %v355 = vpop.f32.mrf.mxu0
    %v356 = vadd.f32 %v312, %v355
    %357 = vmatmul.f32.gmra.mxu0 %v327
    %v358 = vpop.f32.mrf.mxu0
    %v359 = vadd.f32 %v312, %v358
    %360 = vdwg.mxu0
    %364 = vrot.lane.b32.xlu0 %v347, 96
    %v365 = vpop.permute.xlu0 %364
    %366 = vrot.lane.b32.xlu0 %v350, 96
    %v367 = vpop.permute.xlu0 %366
    %368 = vrot.lane.b32.xlu0 %v353, 96
    %v369 = vpop.permute.xlu0 %368
    %vm370 = vcmask 130048
    %v371 = vsel %vm370, %v347, 0
    %v373 = vsel %vm370, %v350, 0
    %v375 = vsel %vm370, %v353, 0
    %v377 = vsel %vm370, %v365, 0
    %v379 = vsel %vm370, %v367, 0
    %v381 = vsel %vm370, %v369, 0
    %383 = vmatpush.xpose.msra.mxu0 0.0
    %384 = vmatpush.xpose.msra.mxu0 0.0
    %385 = vmatpush.xpose.msra.mxu0 0.0
    %386 = vmatpush.xpose.msra.mxu0 0.0
    %387 = vmatpush.xpose.msra.mxu0 0.0
    %388 = vmatpush.xpose.msra.mxu0 0.0
    %389 = vmatpush.xpose.msra.mxu0 0.0
    %390 = vmatpush.xpose.msra.mxu0 0.0
    %391 = vmatpush.xpose.msra.mxu0 0.0
    %392 = vmatpush.xpose.msra.mxu0 0.0
    %393 = vmatpush.xpose.msra.mxu0 0.0
    %394 = vmatpush.xpose.msra.mxu0 0.0
    %395 = vmatpush.xpose.msra.mxu0 0.0
    %396 = vmatpush.xpose.msra.mxu0 %v381
    %397 = vmatpush.xpose.msra.mxu0 %v379
    %398 = vmatpush.xpose.msra.mxu0 %v377
    %399 = vmatmul.f32.gmra.mxu0 %v371
    %v400 = vpop.f32.mrf.mxu0
    %v401 = vadd.f32 0.0, %v400
    %402 = vmatmul.f32.gmra.mxu0 %v373
    %v403 = vpop.f32.mrf.mxu0
    %v404 = vadd.f32 0.0, %v403
    %405 = vmatmul.f32.gmra.mxu0 %v375
    %v406 = vpop.f32.mrf.mxu0
    %v407 = vadd.f32 0.0, %v406
    %408 = vdwg.mxu0
    %vm409 = vcmask 138240
    %v410 = vsel %vm409, %v401, -inf
    %411 = vmax.xlane.f32.xlu0 %v410
    %v412 = vpop.xlane.xlu0 %411
    %v413 = vsel %vm409, %v404, -inf
    %414 = vmax.xlane.f32.xlu0 %v413
    %v415 = vpop.xlane.xlu0 %414
    %vm416 = vcmask 131072
    %v417 = vsel %vm416, %v407, -inf
    %418 = vmax.xlane.f32.xlu0 %v417
    %v419 = vpop.xlane.xlu0 %418
    %v420 = vsub.f32 %v401, %v412
    %v421 = vsub.f32 %v404, %v415
    %v422 = vsub.f32 %v407, %v419
    %v423 = vmul.f32 %v420, 1.442695
    %v424 = vpow.pop %v423
    %v425 = vmul.f32 %v421, 1.442695
    %v426 = vpow.pop %v425
    %v427 = vmul.f32 %v422, 1.442695
    %v428 = vpow.pop %v427
    %v429 = vsel %vm409, %v424, 0.0
    %430 = vadd.xlane.f32.xlu0 %v429
    %v431 = vpop.xlane.xlu0 %430
    %v432 = vsel %vm409, %v426, 0.0
    %433 = vadd.xlane.f32.xlu0 %v432
    %v434 = vpop.xlane.xlu0 %433
    %v435 = vsel %vm416, %v428, 0.0
    %436 = vadd.xlane.f32.xlu0 %v435
    %v437 = vpop.xlane.xlu0 %436
    %v438 = vrcp.pop %v431
    %v439 = vrcp.pop %v434
    %v440 = vrcp.pop %v437
    %v441 = vmul.f32 %v424, %v438
    %v442 = vmul.f32 %v426, %v439
    %v443 = vmul.f32 %v428, %v440
    %444 = vrot.lane.b32.xlu0 %v347, 64
    %v445 = vpop.permute.xlu0 %444
    %446 = vrot.lane.b32.xlu0 %v350, 64
    %v447 = vpop.permute.xlu0 %446
    %448 = vrot.lane.b32.xlu0 %v353, 64
    %v449 = vpop.permute.xlu0 %448
    %v453 = vsel %vm409, %v441, 0
    %v456 = vsel %vm409, %v442, 0
    %v459 = vsel %vm409, %v443, 0
    %v461 = vsel %vm147, %v449, 0
    %463 = vmatpush.msra.mxu0 0.0
    %464 = vmatpush.msra.mxu0 0.0
    %465 = vmatpush.msra.mxu0 0.0
    %466 = vmatpush.msra.mxu0 0.0
    %467 = vmatpush.msra.mxu0 0.0
    %468 = vmatpush.msra.mxu0 0.0
    %469 = vmatpush.msra.mxu0 0.0
    %470 = vmatpush.msra.mxu0 0.0
    %471 = vmatpush.msra.mxu0 0.0
    %472 = vmatpush.msra.mxu0 0.0
    %473 = vmatpush.msra.mxu0 0.0
    %474 = vmatpush.msra.mxu0 0.0
    %475 = vmatpush.msra.mxu0 0.0
    %476 = vmatpush.msra.mxu0 %v461
    %477 = vmatpush.msra.mxu0 %v447
    %478 = vmatpush.msra.mxu0 %v445
    %479 = vmatmul.f32.gmra.mxu0 %v453
    %v480 = vpop.f32.mrf.mxu0
    %v481 = vadd.f32 0.0, %v480
    %482 = vmatmul.f32.gmra.mxu0 %v456
    %v483 = vpop.f32.mrf.mxu0
    %v484 = vadd.f32 0.0, %v483
    %485 = vmatmul.f32.gmra.mxu0 %v459
    %v486 = vpop.f32.mrf.mxu0
    %v487 = vadd.f32 0.0, %v486
    %488 = vdwg.mxu0
    %489 = vst.msk [vmem:[#allocation2] sm:$0xff] %vm370, %v481
    %490 = vst.msk [vmem:[#allocation2 + $0x8] sm:$0xff] %vm370, %v484
    %vm491 = vcmask 122880
    %492 = vst.msk [vmem:[#allocation2 + $0x10] sm:$0x1] %vm491, %v487
    %493 = vrot.lane.b32.xlu0 %v347, 112
    %v494 = vpop.permute.xlu0 %493
    %495 = vrot.lane.b32.xlu0 %v350, 112
    %v496 = vpop.permute.xlu0 %495
    %497 = vrot.lane.b32.xlu0 %v353, 112
    %v498 = vpop.permute.xlu0 %497
    %499 = vrot.lane.b32.xlu0 %v347, 80
    %v500 = vpop.permute.xlu0 %499
    %501 = vrot.lane.b32.xlu0 %v350, 80
    %v502 = vpop.permute.xlu0 %501
    %503 = vrot.lane.b32.xlu0 %v353, 80
    %v504 = vpop.permute.xlu0 %503
    %v505 = vsel %vm370, %v494, 0
    %v507 = vsel %vm370, %v496, 0
    %v509 = vsel %vm370, %v498, 0
    %v511 = vsel %vm370, %v500, 0
    %v513 = vsel %vm370, %v502, 0
    %v515 = vsel %vm370, %v504, 0
    %517 = vmatpush.xpose.msra.mxu0 0.0
    %518 = vmatpush.xpose.msra.mxu0 0.0
    %519 = vmatpush.xpose.msra.mxu0 0.0
    %520 = vmatpush.xpose.msra.mxu0 0.0
    %521 = vmatpush.xpose.msra.mxu0 0.0
    %522 = vmatpush.xpose.msra.mxu0 0.0
    %523 = vmatpush.xpose.msra.mxu0 0.0
    %524 = vmatpush.xpose.msra.mxu0 0.0
    %525 = vmatpush.xpose.msra.mxu0 0.0
    %526 = vmatpush.xpose.msra.mxu0 0.0
    %527 = vmatpush.xpose.msra.mxu0 0.0
    %528 = vmatpush.xpose.msra.mxu0 0.0
    %529 = vmatpush.xpose.msra.mxu0 0.0
    %530 = vmatpush.xpose.msra.mxu0 %v515
    %531 = vmatpush.xpose.msra.mxu0 %v513
    %532 = vmatpush.xpose.msra.mxu0 %v511
    %533 = vmatmul.f32.gmra.mxu0 %v505
    %v534 = vpop.f32.mrf.mxu0
    %v535 = vadd.f32 0.0, %v534
    %536 = vmatmul.f32.gmra.mxu0 %v507
    %v537 = vpop.f32.mrf.mxu0
    %v538 = vadd.f32 0.0, %v537
    %539 = vmatmul.f32.gmra.mxu0 %v509
    %v540 = vpop.f32.mrf.mxu0
    %v541 = vadd.f32 0.0, %v540
    %542 = vdwg.mxu0
    %v543 = vsel %vm409, %v535, -inf
    %544 = vmax.xlane.f32.xlu0 %v543
    %v545 = vpop.xlane.xlu0 %544
    %v546 = vsel %vm409, %v538, -inf
    %547 = vmax.xlane.f32.xlu0 %v546
    %v548 = vpop.xlane.xlu0 %547
    %v549 = vsel %vm416, %v541, -inf
    %550 = vmax.xlane.f32.xlu0 %v549
    %v551 = vpop.xlane.xlu0 %550
    %v552 = vsub.f32 %v535, %v545
    %v553 = vsub.f32 %v538, %v548
    %v554 = vsub.f32 %v541, %v551
    %v555 = vmul.f32 %v552, 1.442695
    %v556 = vpow.pop %v555
    %v557 = vmul.f32 %v553, 1.442695
    %v558 = vpow.pop %v557
    %v559 = vmul.f32 %v554, 1.442695
    %v560 = vpow.pop %v559
    %v561 = vsel %vm409, %v556, 0.0
    %562 = vadd.xlane.f32.xlu0 %v561
    %v563 = vpop.xlane.xlu0 %562
    %v564 = vsel %vm409, %v558, 0.0
    %565 = vadd.xlane.f32.xlu0 %v564
    %v566 = vpop.xlane.xlu0 %565
    %v567 = vsel %vm416, %v560, 0.0
    %568 = vadd.xlane.f32.xlu0 %v567
    %v569 = vpop.xlane.xlu0 %568
    %v570 = vrcp.pop %v563
    %v571 = vrcp.pop %v566
    %v572 = vrcp.pop %v569
    %v573 = vmul.f32 %v556, %v570
    %v574 = vmul.f32 %v558, %v571
    %v575 = vmul.f32 %v560, %v572
    %576 = vrot.lane.b32.xlu0 %v347, 48
    %v577 = vpop.permute.xlu0 %576
    %578 = vrot.lane.b32.xlu0 %v350, 48
    %v579 = vpop.permute.xlu0 %578
    %580 = vrot.lane.b32.xlu0 %v353, 48
    %v581 = vpop.permute.xlu0 %580
    %v585 = vsel %vm409, %v573, 0
    %v588 = vsel %vm409, %v574, 0
    %v591 = vsel %vm409, %v575, 0
    %v593 = vsel %vm147, %v581, 0
    %595 = vmatpush.msra.mxu0 0.0
    %596 = vmatpush.msra.mxu0 0.0
    %597 = vmatpush.msra.mxu0 0.0
    %598 = vmatpush.msra.mxu0 0.0
    %599 = vmatpush.msra.mxu0 0.0
    %600 = vmatpush.msra.mxu0 0.0
    %601 = vmatpush.msra.mxu0 0.0
    %602 = vmatpush.msra.mxu0 0.0
    %603 = vmatpush.msra.mxu0 0.0
    %604 = vmatpush.msra.mxu0 0.0
    %605 = vmatpush.msra.mxu0 0.0
    %606 = vmatpush.msra.mxu0 0.0
    %607 = vmatpush.msra.mxu0 0.0
    %608 = vmatpush.msra.mxu0 %v593
    %609 = vmatpush.msra.mxu0 %v579
    %610 = vmatpush.msra.mxu0 %v577
    %611 = vmatmul.f32.gmra.mxu0 %v585
    %v612 = vpop.f32.mrf.mxu0
    %v613 = vadd.f32 0.0, %v612
    %614 = vmatmul.f32.gmra.mxu0 %v588
    %v615 = vpop.f32.mrf.mxu0
    %v616 = vadd.f32 0.0, %v615
    %617 = vmatmul.f32.gmra.mxu0 %v591
    %v618 = vpop.f32.mrf.mxu0
    %v619 = vadd.f32 0.0, %v618
    %620 = vdwg.mxu0
    %624 = vrot.lane.b32.xlu0 %v613, 16
    %v625 = vpop.permute.xlu0 %624
    %626 = vrot.lane.b32.xlu0 %v616, 16
    %v627 = vpop.permute.xlu0 %626
    %628 = vrot.lane.b32.xlu0 %v619, 16
    %v629 = vpop.permute.xlu0 %628
    %vm633 = vcmask 261248
    %634 = vst.msk [vmem:[#allocation2] sm:$0xff] %vm633, %v625
    %635 = vst.msk [vmem:[#allocation2 + $0x8] sm:$0xff] %vm633, %v627
    %vm636 = vcmask 254080
    %637 = vst.msk [vmem:[#allocation2 + $0x10] sm:$0x1] %vm636, %v629
    %v640 = vrot.slane %v353, 1
    %v641 = vrot.slane %v356, 1
    %v642 = vsel %vm133, %v640, %v641
    %v643 = vrot.slane %v359, 1
    %v644 = vsel %vm133, %v641, %v643
    %645 = vrot.lane.b32.xlu0 %v642, 96
    %v646 = vpop.permute.xlu0 %645
    %647 = vrot.lane.b32.xlu0 %v644, 96
    %v648 = vpop.permute.xlu0 %647
    %649 = vrot.lane.b32.xlu0 %v643, 96
    %v650 = vpop.permute.xlu0 %649
    %v651 = vsel %vm370, %v642, 0
    %v653 = vsel %vm370, %v644, 0
    %v655 = vsel %vm370, %v643, 0
    %v657 = vsel %vm370, %v646, 0
    %v659 = vsel %vm370, %v648, 0
    %v661 = vsel %vm370, %v650, 0
    %663 = vmatpush.xpose.msra.mxu0 0.0
    %664 = vmatpush.xpose.msra.mxu0 0.0
    %665 = vmatpush.xpose.msra.mxu0 0.0
    %666 = vmatpush.xpose.msra.mxu0 0.0
    %667 = vmatpush.xpose.msra.mxu0 0.0
    %668 = vmatpush.xpose.msra.mxu0 0.0
    %669 = vmatpush.xpose.msra.mxu0 0.0
    %670 = vmatpush.xpose.msra.mxu0 0.0
    %671 = vmatpush.xpose.msra.mxu0 0.0
    %672 = vmatpush.xpose.msra.mxu0 0.0
    %673 = vmatpush.xpose.msra.mxu0 0.0
    %674 = vmatpush.xpose.msra.mxu0 0.0
    %675 = vmatpush.xpose.msra.mxu0 0.0
    %676 = vmatpush.xpose.msra.mxu0 %v661
    %677 = vmatpush.xpose.msra.mxu0 %v659
    %678 = vmatpush.xpose.msra.mxu0 %v657
    %679 = vmatmul.f32.gmra.mxu0 %v651
    %v680 = vpop.f32.mrf.mxu0
    %v681 = vadd.f32 0.0, %v680
    %682 = vmatmul.f32.gmra.mxu0 %v653
    %v683 = vpop.f32.mrf.mxu0
    %v684 = vadd.f32 0.0, %v683
    %685 = vmatmul.f32.gmra.mxu0 %v655
    %v686 = vpop.f32.mrf.mxu0
    %v687 = vadd.f32 0.0, %v686
    %688 = vdwg.mxu0
    %v689 = vsel %vm409, %v681, -inf
    %690 = vmax.xlane.f32.xlu0 %v689
    %v691 = vpop.xlane.xlu0 %690
    %v692 = vsel %vm409, %v684, -inf
    %693 = vmax.xlane.f32.xlu0 %v692
    %v694 = vpop.xlane.xlu0 %693
    %v695 = vsel %vm416, %v687, -inf
    %696 = vmax.xlane.f32.xlu0 %v695
    %v697 = vpop.xlane.xlu0 %696
    %v698 = vsub.f32 %v681, %v691
    %v699 = vsub.f32 %v684, %v694
    %v700 = vsub.f32 %v687, %v697
    %v701 = vmul.f32 %v698, 1.442695
    %v702 = vpow.pop %v701
    %v703 = vmul.f32 %v699, 1.442695
    %v704 = vpow.pop %v703
    %v705 = vmul.f32 %v700, 1.442695
    %v706 = vpow.pop %v705
    %v707 = vsel %vm409, %v702, 0.0
    %708 = vadd.xlane.f32.xlu0 %v707
    %v709 = vpop.xlane.xlu0 %708
    %v710 = vsel %vm409, %v704, 0.0
    %711 = vadd.xlane.f32.xlu0 %v710
    %v712 = vpop.xlane.xlu0 %711
    %v713 = vsel %vm416, %v706, 0.0
    %714 = vadd.xlane.f32.xlu0 %v713
    %v715 = vpop.xlane.xlu0 %714
    %v716 = vrcp.pop %v709
    %v717 = vrcp.pop %v712
    %v718 = vrcp.pop %v715
    %v719 = vmul.f32 %v702, %v716
    %v720 = vmul.f32 %v704, %v717
    %v721 = vmul.f32 %v706, %v718
    %722 = vrot.lane.b32.xlu0 %v642, 64
    %v723 = vpop.permute.xlu0 %722
    %724 = vrot.lane.b32.xlu0 %v644, 64
    %v725 = vpop.permute.xlu0 %724
    %726 = vrot.lane.b32.xlu0 %v643, 64
    %v727 = vpop.permute.xlu0 %726
    %v731 = vsel %vm409, %v719, 0
    %v734 = vsel %vm409, %v720, 0
    %v737 = vsel %vm409, %v721, 0
    %v739 = vsel %vm147, %v727, 0
    %741 = vmatpush.msra.mxu0 0.0
    %742 = vmatpush.msra.mxu0 0.0
    %743 = vmatpush.msra.mxu0 0.0
    %744 = vmatpush.msra.mxu0 0.0
    %745 = vmatpush.msra.mxu0 0.0
    %746 = vmatpush.msra.mxu0 0.0
    %747 = vmatpush.msra.mxu0 0.0
    %748 = vmatpush.msra.mxu0 0.0
    %749 = vmatpush.msra.mxu0 0.0
    %750 = vmatpush.msra.mxu0 0.0
    %751 = vmatpush.msra.mxu0 0.0
    %752 = vmatpush.msra.mxu0 0.0
    %753 = vmatpush.msra.mxu0 0.0
    %754 = vmatpush.msra.mxu0 %v739
    %755 = vmatpush.msra.mxu0 %v725
    %756 = vmatpush.msra.mxu0 %v723
    %757 = vmatmul.f32.gmra.mxu0 %v731
    %v758 = vpop.f32.mrf.mxu0
    %v759 = vadd.f32 0.0, %v758
    %760 = vmatmul.f32.gmra.mxu0 %v734
    %v761 = vpop.f32.mrf.mxu0
    %v762 = vadd.f32 0.0, %v761
    %763 = vmatmul.f32.gmra.mxu0 %v737
    %v764 = vpop.f32.mrf.mxu0
    %v765 = vadd.f32 0.0, %v764
    %766 = vdwg.mxu0
    %767 = vst.msk [vmem:[#allocation2 + $0x11] sm:$0xff] %vm370, %v759
    %768 = vst.msk [vmem:[#allocation2 + $0x19] sm:$0xff] %vm370, %v762
    %769 = vst.msk [vmem:[#allocation2 + $0x21] sm:$0x1] %vm491, %v765
    %770 = vrot.lane.b32.xlu0 %v642, 112
    %v771 = vpop.permute.xlu0 %770
    %772 = vrot.lane.b32.xlu0 %v644, 112
    %v773 = vpop.permute.xlu0 %772
    %774 = vrot.lane.b32.xlu0 %v643, 112
    %v775 = vpop.permute.xlu0 %774
    %776 = vrot.lane.b32.xlu0 %v642, 80
    %v777 = vpop.permute.xlu0 %776
    %778 = vrot.lane.b32.xlu0 %v644, 80
    %v779 = vpop.permute.xlu0 %778
    %780 = vrot.lane.b32.xlu0 %v643, 80
    %v781 = vpop.permute.xlu0 %780
    %v782 = vsel %vm370, %v771, 0
    %v784 = vsel %vm370, %v773, 0
    %v786 = vsel %vm370, %v775, 0
    %v788 = vsel %vm370, %v777, 0
    %v790 = vsel %vm370, %v779, 0
    %v792 = vsel %vm370, %v781, 0
    %794 = vmatpush.xpose.msra.mxu0 0.0
    %795 = vmatpush.xpose.msra.mxu0 0.0
    %796 = vmatpush.xpose.msra.mxu0 0.0
    %797 = vmatpush.xpose.msra.mxu0 0.0
    %798 = vmatpush.xpose.msra.mxu0 0.0
    %799 = vmatpush.xpose.msra.mxu0 0.0
    %800 = vmatpush.xpose.msra.mxu0 0.0
    %801 = vmatpush.xpose.msra.mxu0 0.0
    %802 = vmatpush.xpose.msra.mxu0 0.0
    %803 = vmatpush.xpose.msra.mxu0 0.0
    %804 = vmatpush.xpose.msra.mxu0 0.0
    %805 = vmatpush.xpose.msra.mxu0 0.0
    %806 = vmatpush.xpose.msra.mxu0 0.0
    %807 = vmatpush.xpose.msra.mxu0 %v792
    %808 = vmatpush.xpose.msra.mxu0 %v790
    %809 = vmatpush.xpose.msra.mxu0 %v788
    %810 = vmatmul.f32.gmra.mxu0 %v782
    %v811 = vpop.f32.mrf.mxu0
    %v812 = vadd.f32 0.0, %v811
    %813 = vmatmul.f32.gmra.mxu0 %v784
    %v814 = vpop.f32.mrf.mxu0
    %v815 = vadd.f32 0.0, %v814
    %816 = vmatmul.f32.gmra.mxu0 %v786
    %v817 = vpop.f32.mrf.mxu0
    %v818 = vadd.f32 0.0, %v817
    %819 = vdwg.mxu0
    %v820 = vsel %vm409, %v812, -inf
    %821 = vmax.xlane.f32.xlu0 %v820
    %v822 = vpop.xlane.xlu0 %821
    %v823 = vsel %vm409, %v815, -inf
    %824 = vmax.xlane.f32.xlu0 %v823
    %v825 = vpop.xlane.xlu0 %824
    %v826 = vsel %vm416, %v818, -inf
    %827 = vmax.xlane.f32.xlu0 %v826
    %v828 = vpop.xlane.xlu0 %827
    %v829 = vsub.f32 %v812, %v822
    %v830 = vsub.f32 %v815, %v825
    %v831 = vsub.f32 %v818, %v828
    %v832 = vmul.f32 %v829, 1.442695
    %v833 = vpow.pop %v832
    %v834 = vmul.f32 %v830, 1.442695
    %v835 = vpow.pop %v834
    %v836 = vmul.f32 %v831, 1.442695
    %v837 = vpow.pop %v836
    %v838 = vsel %vm409, %v833, 0.0
    %839 = vadd.xlane.f32.xlu0 %v838
    %v840 = vpop.xlane.xlu0 %839
    %v841 = vsel %vm409, %v835, 0.0
    %842 = vadd.xlane.f32.xlu0 %v841
    %v843 = vpop.xlane.xlu0 %842
    %v844 = vsel %vm416, %v837, 0.0
    %845 = vadd.xlane.f32.xlu0 %v844
    %v846 = vpop.xlane.xlu0 %845
    %v847 = vrcp.pop %v840
    %v848 = vrcp.pop %v843
    %v849 = vrcp.pop %v846
    %v850 = vmul.f32 %v833, %v847
    %v851 = vmul.f32 %v835, %v848
    %v852 = vmul.f32 %v837, %v849
    %853 = vrot.lane.b32.xlu0 %v642, 48
    %v854 = vpop.permute.xlu0 %853
    %855 = vrot.lane.b32.xlu0 %v644, 48
    %v856 = vpop.permute.xlu0 %855
    %857 = vrot.lane.b32.xlu0 %v643, 48
    %v858 = vpop.permute.xlu0 %857
    %v862 = vsel %vm409, %v850, 0
    %v865 = vsel %vm409, %v851, 0
    %v868 = vsel %vm409, %v852, 0
    %v870 = vsel %vm147, %v858, 0
    %872 = vmatpush.msra.mxu0 0.0
    %873 = vmatpush.msra.mxu0 0.0
    %874 = vmatpush.msra.mxu0 0.0
    %875 = vmatpush.msra.mxu0 0.0
    %876 = vmatpush.msra.mxu0 0.0
    %877 = vmatpush.msra.mxu0 0.0
    %878 = vmatpush.msra.mxu0 0.0
    %879 = vmatpush.msra.mxu0 0.0
    %880 = vmatpush.msra.mxu0 0.0
    %881 = vmatpush.msra.mxu0 0.0
    %882 = vmatpush.msra.mxu0 0.0
    %883 = vmatpush.msra.mxu0 0.0
    %884 = vmatpush.msra.mxu0 0.0
    %885 = vmatpush.msra.mxu0 %v870
    %886 = vmatpush.msra.mxu0 %v856
    %887 = vmatpush.msra.mxu0 %v854
    %888 = vmatmul.f32.gmra.mxu0 %v862
    %v889 = vpop.f32.mrf.mxu0
    %v890 = vadd.f32 0.0, %v889
    %891 = vmatmul.f32.gmra.mxu0 %v865
    %v892 = vpop.f32.mrf.mxu0
    %v893 = vadd.f32 0.0, %v892
    %894 = vmatmul.f32.gmra.mxu0 %v868
    %v895 = vpop.f32.mrf.mxu0
    %v896 = vadd.f32 0.0, %v895
    %897 = vdwg.mxu0
    %901 = vrot.lane.b32.xlu0 %v890, 16
    %v902 = vpop.permute.xlu0 %901
    %903 = vrot.lane.b32.xlu0 %v893, 16
    %v904 = vpop.permute.xlu0 %903
    %905 = vrot.lane.b32.xlu0 %v896, 16
    %v906 = vpop.permute.xlu0 %905
    %910 = vst.msk [vmem:[#allocation2 + $0x11] sm:$0xff] %vm633, %v902
    %911 = vst.msk [vmem:[#allocation2 + $0x19] sm:$0xff] %vm633, %v904
    %912 = vst.msk [vmem:[#allocation2 + $0x21] sm:$0x1] %vm636, %v906
    %v913 = vld [vmem:[#allocation2] sm:$0xff]
    %v914 = vld [vmem:[#allocation2 + $0x8] sm:$0xff]
    %v915 = vld [vmem:[#allocation2 + $0x10] sm:$0xff]
    %v916 = vld [vmem:[#allocation2 + $0x18] sm:$0xff]
    %v917 = vld [vmem:[#allocation2 + $0x20] sm:$0x3]
    %v918 = vld [vmem:[%s9] sm:$0xff]
    %v919 = vld [vmem:[%s9 + $0x8] sm:$0xff]
    %v920 = vld [vmem:[%s9 + $0x10] sm:$0xff]
    %v921 = vld [vmem:[%s9 + $0x18] sm:$0xff]
    %v922 = vld [vmem:[%s10] sm:$0x1]
    %v924 = vperm.slane %v922, 0
    %v927 = vsel %vm171, %v913, 0
    %v930 = vsel %vm171, %v914, 0
    %v933 = vsel %vm171, %v915, 0
    %v936 = vsel %vm171, %v916, 0
    %v939 = vsel %vm171, %v917, 0
    %941 = vmatpush.msra.mxu0 0.0
    %942 = vmatpush.msra.mxu0 0.0
    %943 = vmatpush.msra.mxu0 0.0
    %944 = vmatpush.msra.mxu0 0.0
    %945 = vmatpush.msra.mxu0 0.0
    %946 = vmatpush.msra.mxu0 0.0
    %947 = vmatpush.msra.mxu0 0.0
    %948 = vmatpush.msra.mxu0 0.0
    %949 = vmatpush.msra.mxu0 0.0
    %950 = vmatpush.msra.mxu0 0.0
    %951 = vmatpush.msra.mxu0 0.0
    %952 = vmatpush.msra.mxu0 0.0
    %953 = vmatpush.msra.mxu0 %v921
    %954 = vmatpush.msra.mxu0 %v920
    %955 = vmatpush.msra.mxu0 %v919
    %956 = vmatpush.msra.mxu0 %v918
    %957 = vmatmul.f32.gmra.mxu0 %v927
    %v958 = vpop.f32.mrf.mxu0
    %v959 = vadd.f32 %v924, %v958
    %960 = vmatmul.f32.gmra.mxu0 %v930
    %v961 = vpop.f32.mrf.mxu0
    %v962 = vadd.f32 %v924, %v961
    %963 = vmatmul.f32.gmra.mxu0 %v933
    %v964 = vpop.f32.mrf.mxu0
    %v965 = vadd.f32 %v924, %v964
    %966 = vmatmul.f32.gmra.mxu0 %v936
    %v967 = vpop.f32.mrf.mxu0
    %v968 = vadd.f32 %v924, %v967
    %969 = vmatmul.f32.gmra.mxu0 %v939
    %v970 = vpop.f32.mrf.mxu0
    %v971 = vadd.f32 %v924, %v970
    %972 = vdwg.mxu0
    %v973 = vadd.f32 %v166, %v959
    %v974 = vadd.f32 %v150, %v962
    %v975 = vadd.f32 %v168, %v965
    %v976 = vadd.f32 %v162, %v968
    %v977 = vadd.f32 %v161, %v971
    %v978 = vld [vmem:[%s11] sm:$0x1]
    %v979 = vld [vmem:[%s12] sm:$0x1]
    %v980 = vsel %vm171, %v973, 0.0
    %981 = vadd.xlane.f32.xlu0 %v980
    %v982 = vpop.xlane.xlu0 %981
    %v983 = vsel %vm171, %v974, 0.0
    %984 = vadd.xlane.f32.xlu0 %v983
    %v985 = vpop.xlane.xlu0 %984
    %v986 = vsel %vm171, %v975, 0.0
    %987 = vadd.xlane.f32.xlu0 %v986
    %v988 = vpop.xlane.xlu0 %987
    %v989 = vsel %vm171, %v976, 0.0
    %990 = vadd.xlane.f32.xlu0 %v989
    %v991 = vpop.xlane.xlu0 %990
    %v992 = vsel %vm184, %v977, 0.0
    %993 = vadd.xlane.f32.xlu0 %v992
    %v994 = vpop.xlane.xlu0 %993
    %v995 = vmul.f32 %v982, %v194
    %v996 = vmul.f32 %v985, %v194
    %v997 = vmul.f32 %v988, %v194
    %v998 = vmul.f32 %v991, %v194
    %v999 = vmul.f32 %v994, %v194
    %v1000 = vsub.f32 %v973, %v995
    %v1001 = vsub.f32 %v974, %v996
    %v1002 = vsub.f32 %v975, %v997
    %v1003 = vsub.f32 %v976, %v998
    %v1004 = vsub.f32 %v977, %v999
    %v1005 = vmul.f32 %v1000, %v1000
    %v1006 = vmul.f32 %v1001, %v1001
    %v1007 = vmul.f32 %v1002, %v1002
    %v1008 = vmul.f32 %v1003, %v1003
    %v1009 = vmul.f32 %v1004, %v1004
    %v1010 = vsel %vm171, %v1005, 0.0
    %1011 = vadd.xlane.f32.xlu0 %v1010
    %v1012 = vpop.xlane.xlu0 %1011
    %v1013 = vsel %vm171, %v1006, 0.0
    %1014 = vadd.xlane.f32.xlu0 %v1013
    %v1015 = vpop.xlane.xlu0 %1014
    %v1016 = vsel %vm171, %v1007, 0.0
    %1017 = vadd.xlane.f32.xlu0 %v1016
    %v1018 = vpop.xlane.xlu0 %1017
    %v1019 = vsel %vm171, %v1008, 0.0
    %1020 = vadd.xlane.f32.xlu0 %v1019
    %v1021 = vpop.xlane.xlu0 %1020
    %v1022 = vsel %vm184, %v1009, 0.0
    %1023 = vadd.xlane.f32.xlu0 %v1022
    %v1024 = vpop.xlane.xlu0 %1023
    %v1025 = vmul.f32 %v1012, %v194
    %v1026 = vmul.f32 %v1015, %v194
    %v1027 = vmul.f32 %v1018, %v194
    %v1028 = vmul.f32 %v1021, %v194
    %v1029 = vmul.f32 %v1024, %v194
    %v1030 = vadd.f32 %v1025, 1e-05
    %v1031 = vadd.f32 %v1026, 1e-05
    %v1032 = vadd.f32 %v1027, 1e-05
    %v1033 = vadd.f32 %v1028, 1e-05
    %v1034 = vadd.f32 %v1029, 1e-05
    %v1035 = vrsqrt.pop %v1030
    %v1036 = vmul.f32 %v1035, %v1030
    %v1037 = vmul.f32 %v1036, %v1035
    %v1038 = vmul.f32 0.5, %v1037
    %v1039 = vsub.f32 1.5, %v1038
    %v1040 = vmul.f32 %v1035, %v1039
    %vm1041 = vweird.f32 %v1030
    %vm1042 = vweird.f32 %v1035
    %vm1043 = vmor %vm1041, %vm1042
    %v1044 = vsel %vm1043, %v1035, %v1040
    %v1045 = vrsqrt.pop %v1031
    %v1046 = vmul.f32 %v1045, %v1031
    %v1047 = vmul.f32 %v1046, %v1045
    %v1048 = vmul.f32 0.5, %v1047
    %v1049 = vsub.f32 1.5, %v1048
    %v1050 = vmul.f32 %v1045, %v1049
    %vm1051 = vweird.f32 %v1031
    %vm1052 = vweird.f32 %v1045
    %vm1053 = vmor %vm1051, %vm1052
    %v1054 = vsel %vm1053, %v1045, %v1050
    %v1055 = vrsqrt.pop %v1032
    %v1056 = vmul.f32 %v1055, %v1032
    %v1057 = vmul.f32 %v1056, %v1055
    %v1058 = vmul.f32 0.5, %v1057
    %v1059 = vsub.f32 1.5, %v1058
    %v1060 = vmul.f32 %v1055, %v1059
    %vm1061 = vweird.f32 %v1032
    %vm1062 = vweird.f32 %v1055
    %vm1063 = vmor %vm1061, %vm1062
    %v1064 = vsel %vm1063, %v1055, %v1060
    %v1065 = vrsqrt.pop %v1033
    %v1066 = vmul.f32 %v1065, %v1033
    %v1067 = vmul.f32 %v1066, %v1065
    %v1068 = vmul.f32 0.5, %v1067
    %v1069 = vsub.f32 1.5, %v1068
    %v1070 = vmul.f32 %v1065, %v1069
    %vm1071 = vweird.f32 %v1033
    %vm1072 = vweird.f32 %v1065
    %vm1073 = vmor %vm1071, %vm1072
    %v1074 = vsel %vm1073, %v1065, %v1070
    %v1075 = vrsqrt.pop %v1034
    %v1076 = vmul.f32 %v1075, %v1034
    %v1077 = vmul.f32 %v1076, %v1075
    %v1078 = vmul.f32 0.5, %v1077
    %v1079 = vsub.f32 1.5, %v1078
    %v1080 = vmul.f32 %v1075, %v1079
    %vm1081 = vweird.f32 %v1034
    %vm1082 = vweird.f32 %v1075
    %vm1083 = vmor %vm1081, %vm1082
    %v1084 = vsel %vm1083, %v1075, %v1080
    %v1085 = vmul.f32 %v1000, %v1044
    %v1086 = vmul.f32 %v1001, %v1054
    %v1087 = vmul.f32 %v1002, %v1064
    %v1088 = vmul.f32 %v1003, %v1074
    %v1089 = vmul.f32 %v1004, %v1084
    %v1091 = vperm.slane %v978, 0
    %v1093 = vmul.f32 %v1085, %v1091
    %v1094 = vmul.f32 %v1086, %v1091
    %v1095 = vmul.f32 %v1087, %v1091
    %v1096 = vmul.f32 %v1088, %v1091
    %v1097 = vmul.f32 %v1089, %v1091
    %v1099 = vperm.slane %v979, 0
    %v1101 = vadd.f32 %v1093, %v1099
    %v1102 = vadd.f32 %v1094, %v1099
    %v1103 = vadd.f32 %v1095, %v1099
    %v1104 = vadd.f32 %v1096, %v1099
    %v1105 = vadd.f32 %v1097, %v1099
    %v1106 = vld [vmem:[%s13] sm:$0xff]
    %v1107 = vld [vmem:[%s13 + $0x8] sm:$0xff]
    %v1108 = vld [vmem:[%s13 + $0x10] sm:$0xff]
    %v1109 = vld [vmem:[%s13 + $0x18] sm:$0xff]
    %v1110 = vld [vmem:[%s14] sm:$0x1]
    %v1112 = vperm.slane %v1110, 0
    %v1115 = vsel %vm171, %v1101, 0
    %v1118 = vsel %vm171, %v1102, 0
    %v1121 = vsel %vm171, %v1103, 0
    %v1124 = vsel %vm171, %v1104, 0
    %v1127 = vsel %vm171, %v1105, 0
    %1129 = vmatpush.msra.mxu0 0.0
    %1130 = vmatpush.msra.mxu0 0.0
    %1131 = vmatpush.msra.mxu0 0.0
    %1132 = vmatpush.msra.mxu0 0.0
    %1133 = vmatpush.msra.mxu0 0.0
    %1134 = vmatpush.msra.mxu0 0.0
    %1135 = vmatpush.msra.mxu0 0.0
    %1136 = vmatpush.msra.mxu0 0.0
    %1137 = vmatpush.msra.mxu0 0.0
    %1138 = vmatpush.msra.mxu0 0.0
    %1139 = vmatpush.msra.mxu0 0.0
    %1140 = vmatpush.msra.mxu0 0.0
    %1141 = vmatpush.msra.mxu0 %v1109
    %1142 = vmatpush.msra.mxu0 %v1108
    %1143 = vmatpush.msra.mxu0 %v1107
    %1144 = vmatpush.msra.mxu0 %v1106
    %1145 = vmatmul.f32.gmra.mxu0 %v1115
    %v1146 = vpop.f32.mrf.mxu0
    %v1147 = vadd.f32 %v1112, %v1146
    %1148 = vmatmul.f32.gmra.mxu0 %v1118
    %v1149 = vpop.f32.mrf.mxu0
    %v1150 = vadd.f32 %v1112, %v1149
    %1151 = vmatmul.f32.gmra.mxu0 %v1121
    %v1152 = vpop.f32.mrf.mxu0
    %v1153 = vadd.f32 %v1112, %v1152
    %1154 = vmatmul.f32.gmra.mxu0 %v1124
    %v1155 = vpop.f32.mrf.mxu0
    %v1156 = vadd.f32 %v1112, %v1155
    %1157 = vmatmul.f32.gmra.mxu0 %v1127
    %v1158 = vpop.f32.mrf.mxu0
    %v1159 = vadd.f32 %v1112, %v1158
    %1160 = vdwg.mxu0
    %v1161 = vmul.f32 %v1147, 0.5
    %v1162 = vmul.f32 %v1150, 0.5
    %v1163 = vmul.f32 %v1153, 0.5
    %v1164 = vmul.f32 %v1156, 0.5
    %v1165 = vmul.f32 %v1159, 0.5
    %v1166 = vrcp.pop 1.4142135
    %v1167 = vmul.f32 1.4142135, %v1166
    %v1168 = vsub.f32 1.0, %v1167
    %v1169 = vmul.f32 %v1166, %v1168
    %v1170 = vadd.f32 %v1166, %v1169
    %vm1171 = vweird.f32 %v1166
    %v1172 = vsel %vm1171, %v1166, %v1170
    %v1173 = vmul.f32 %v1147, %v1172
    %v1174 = vmul.f32 %v1150, %v1172
    %v1175 = vmul.f32 %v1153, %v1172
    %v1176 = vmul.f32 %v1156, %v1172
    %v1177 = vmul.f32 %v1159, %v1172
    %v1178 = vmul.f32 %v1173, %v1173
    %v1179 = vmin.f32 16.0, %v1178
    %v1180 = vmul.f32 %v1179, 2.1237322e-06
    %v1181 = vadd.f32 %v1180, 0.00028619796
    %v1182 = vmul.f32 %v1179, %v1181
    %v1183 = vadd.f32 %v1182, 0.0036580483
    %v1184 = vmul.f32 %v1179, %v1183
    %v1185 = vadd.f32 %v1184, 0.05243302
    %v1186 = vmul.f32 %v1179, %v1185
    %v1187 = vadd.f32 %v1186, 0.18741608
    %v1188 = vmul.f32 %v1179, %v1187
    %v1189 = vadd.f32 %v1188, 1.1283791
    %v1190 = vmul.f32 %v1173, %v1189
    %v1191 = vmul.f32 %v1179, 3.8918573e-05
    %v1192 = vadd.f32 %v1191, 0.001143296
    %v1193 = vmul.f32 %v1179, %v1192
    %v1194 = vadd.f32 %v1193, 0.014752088
    %v1195 = vmul.f32 %v1179, %v1194
    %v1196 = vadd.f32 %v1195, 0.112945676
    %v1197 = vmul.f32 %v1179, %v1196
    %v1198 = vadd.f32 %v1197, 0.4994258
    %v1199 = vmul.f32 %v1179, %v1198
    %v1200 = vadd.f32 %v1199, 1.0
    %v1201 = vrcp.pop %v1200
    %v1202 = vmul.f32 %v1200, %v1201
    %v1203 = vsub.f32 1.0, %v1202
    %v1204 = vmul.f32 %v1201, %v1203
    %v1205 = vadd.f32 %v1201, %v1204
    %vm1206 = vweird.f32 %v1200
    %vm1207 = vweird.f32 %v1201
    %vm1208 = vmor %vm1206, %vm1207
    %v1209 = vsel %vm1208, %v1201, %v1205
    %v1210 = vand.u32 2147483647, %v1200
    %vm1211 = vcmp.eq.f32.partialorder %v1210, 8.507059e+37
    %v1212 = vand.u32 %v1200, 2147483648
    %v1213 = vor.u32 1.1754944e-38, %v1212
    %v1214 = vsel %vm1211, %v1213, %v1209
    %v1215 = vmul.f32 %v1190, %v1214
    %v1216 = vmin.f32 %v1215, 1.0
    %v1217 = vmax.f32 %v1216, -1.0
    %v1218 = vmul.f32 %v1174, %v1174
    %v1219 = vmin.f32 16.0, %v1218
    %v1220 = vmul.f32 %v1219, 2.1237322e-06
    %v1221 = vadd.f32 %v1220, 0.00028619796
    %v1222 = vmul.f32 %v1219, %v1221
    %v1223 = vadd.f32 %v1222, 0.0036580483
    %v1224 = vmul.f32 %v1219, %v1223
    %v1225 = vadd.f32 %v1224, 0.05243302
    %v1226 = vmul.f32 %v1219, %v1225
    %v1227 = vadd.f32 %v1226, 0.18741608
    %v1228 = vmul.f32 %v1219, %v1227
    %v1229 = vadd.f32 %v1228, 1.1283791
    %v1230 = vmul.f32 %v1174, %v1229
    %v1231 = vmul.f32 %v1219, 3.8918573e-05
    %v1232 = vadd.f32 %v1231, 0.001143296
    %v1233 = vmul.f32 %v1219, %v1232
    %v1234 = vadd.f32 %v1233, 0.014752088
    %v1235 = vmul.f32 %v1219, %v1234
    %v1236 = vadd.f32 %v1235, 0.112945676
    %v1237 = vmul.f32 %v1219, %v1236
    %v1238 = vadd.f32 %v1237, 0.4994258
    %v1239 = vmul.f32 %v1219, %v1238
    %v1240 = vadd.f32 %v1239, 1.0
    %v1241 = vrcp.pop %v1240
    %v1242 = vmul.f32 %v1240, %v1241
    %v1243 = vsub.f32 1.0, %v1242
    %v1244 = vmul.f32 %v1241, %v1243
    %v1245 = vadd.f32 %v1241, %v1244
    %vm1246 = vweird.f32 %v1240
    %vm1247 = vweird.f32 %v1241
    %vm1248 = vmor %vm1246, %vm1247
    %v1249 = vsel %vm1248, %v1241, %v1245
    %v1250 = vand.u32 2147483647, %v1240
    %vm1251 = vcmp.eq.f32.partialorder %v1250, 8.507059e+37
    %v1252 = vand.u32 %v1240, 2147483648
    %v1253 = vor.u32 1.1754944e-38, %v1252
    %v1254 = vsel %vm1251, %v1253, %v1249
    %v1255 = vmul.f32 %v1230, %v1254
    %v1256 = vmin.f32 %v1255, 1.0
    %v1257 = vmax.f32 %v1256, -1.0
    %v1258 = vmul.f32 %v1175, %v1175
    %v1259 = vmin.f32 16.0, %v1258
    %v1260 = vmul.f32 %v1259, 2.1237322e-06
    %v1261 = vadd.f32 %v1260, 0.00028619796
    %v1262 = vmul.f32 %v1259, %v1261
    %v1263 = vadd.f32 %v1262, 0.0036580483
    %v1264 = vmul.f32 %v1259, %v1263
    %v1265 = vadd.f32 %v1264, 0.05243302
    %v1266 = vmul.f32 %v1259, %v1265
    %v1267 = vadd.f32 %v1266, 0.18741608
    %v1268 = vmul.f32 %v1259, %v1267
    %v1269 = vadd.f32 %v1268, 1.1283791
    %v1270 = vmul.f32 %v1175, %v1269
    %v1271 = vmul.f32 %v1259, 3.8918573e-05
    %v1272 = vadd.f32 %v1271, 0.001143296
    %v1273 = vmul.f32 %v1259, %v1272
    %v1274 = vadd.f32 %v1273, 0.014752088
    %v1275 = vmul.f32 %v1259, %v1274
    %v1276 = vadd.f32 %v1275, 0.112945676
    %v1277 = vmul.f32 %v1259, %v1276
    %v1278 = vadd.f32 %v1277, 0.4994258
    %v1279 = vmul.f32 %v1259, %v1278
    %v1280 = vadd.f32 %v1279, 1.0
    %v1281 = vrcp.pop %v1280
    %v1282 = vmul.f32 %v1280, %v1281
    %v1283 = vsub.f32 1.0, %v1282
    %v1284 = vmul.f32 %v1281, %v1283
    %v1285 = vadd.f32 %v1281, %v1284
    %vm1286 = vweird.f32 %v1280
    %vm1287 = vweird.f32 %v1281
    %vm1288 = vmor %vm1286, %vm1287
    %v1289 = vsel %vm1288, %v1281, %v1285
    %v1290 = vand.u32 2147483647, %v1280
    %vm1291 = vcmp.eq.f32.partialorder %v1290, 8.507059e+37
    %v1292 = vand.u32 %v1280, 2147483648
    %v1293 = vor.u32 1.1754944e-38, %v1292
    %v1294 = vsel %vm1291, %v1293, %v1289
    %v1295 = vmul.f32 %v1270, %v1294
    %v1296 = vmin.f32 %v1295, 1.0
    %v1297 = vmax.f32 %v1296, -1.0
    %v1298 = vmul.f32 %v1176, %v1176
    %v1299 = vmin.f32 16.0, %v1298
    %v1300 = vmul.f32 %v1299, 2.1237322e-06
    %v1301 = vadd.f32 %v1300, 0.00028619796
    %v1302 = vmul.f32 %v1299, %v1301
    %v1303 = vadd.f32 %v1302, 0.0036580483
    %v1304 = vmul.f32 %v1299, %v1303
    %v1305 = vadd.f32 %v1304, 0.05243302
    %v1306 = vmul.f32 %v1299, %v1305
    %v1307 = vadd.f32 %v1306, 0.18741608
    %v1308 = vmul.f32 %v1299, %v1307
    %v1309 = vadd.f32 %v1308, 1.1283791
    %v1310 = vmul.f32 %v1176, %v1309
    %v1311 = vmul.f32 %v1299, 3.8918573e-05
    %v1312 = vadd.f32 %v1311, 0.001143296
    %v1313 = vmul.f32 %v1299, %v1312
    %v1314 = vadd.f32 %v1313, 0.014752088
    %v1315 = vmul.f32 %v1299, %v1314
    %v1316 = vadd.f32 %v1315, 0.112945676
    %v1317 = vmul.f32 %v1299, %v1316
    %v1318 = vadd.f32 %v1317, 0.4994258
    %v1319 = vmul.f32 %v1299, %v1318
    %v1320 = vadd.f32 %v1319, 1.0
    %v1321 = vrcp.pop %v1320
    %v1322 = vmul.f32 %v1320, %v1321
    %v1323 = vsub.f32 1.0, %v1322
    %v1324 = vmul.f32 %v1321, %v1323
    %v1325 = vadd.f32 %v1321, %v1324
    %vm1326 = vweird.f32 %v1320
    %vm1327 = vweird.f32 %v1321
    %vm1328 = vmor %vm1326, %vm1327
    %v1329 = vsel %vm1328, %v1321, %v1325
    %v1330 = vand.u32 2147483647, %v1320
    %vm1331 = vcmp.eq.f32.partialorder %v1330, 8.507059e+37
    %v1332 = vand.u32 %v1320, 2147483648
    %v1333 = vor.u32 1.1754944e-38, %v1332
    %v1334 = vsel %vm1331, %v1333, %v1329
    %v1335 = vmul.f32 %v1310, %v1334
    %v1336 = vmin.f32 %v1335, 1.0
    %v1337 = vmax.f32 %v1336, -1.0
    %v1338 = vmul.f32 %v1177, %v1177
    %v1339 = vmin.f32 16.0, %v1338
    %v1340 = vmul.f32 %v1339, 2.1237322e-06
    %v1341 = vadd.f32 %v1340, 0.00028619796
    %v1342 = vmul.f32 %v1339, %v1341
    %v1343 = vadd.f32 %v1342, 0.0036580483
    %v1344 = vmul.f32 %v1339, %v1343
    %v1345 = vadd.f32 %v1344, 0.05243302
    %v1346 = vmul.f32 %v1339, %v1345
    %v1347 = vadd.f32 %v1346, 0.18741608
    %v1348 = vmul.f32 %v1339, %v1347
    %v1349 = vadd.f32 %v1348, 1.1283791
    %v1350 = vmul.f32 %v1177, %v1349
    %v1351 = vmul.f32 %v1339, 3.8918573e-05
    %v1352 = vadd.f32 %v1351, 0.001143296
    %v1353 = vmul.f32 %v1339, %v1352
    %v1354 = vadd.f32 %v1353, 0.014752088
    %v1355 = vmul.f32 %v1339, %v1354
    %v1356 = vadd.f32 %v1355, 0.112945676
    %v1357 = vmul.f32 %v1339, %v1356
    %v1358 = vadd.f32 %v1357, 0.4994258
    %v1359 = vmul.f32 %v1339, %v1358
    %v1360 = vadd.f32 %v1359, 1.0
    %v1361 = vrcp.pop %v1360
    %v1362 = vmul.f32 %v1360, %v1361
    %v1363 = vsub.f32 1.0, %v1362
    %v1364 = vmul.f32 %v1361, %v1363
    %v1365 = vadd.f32 %v1361, %v1364
    %vm1366 = vweird.f32 %v1360
    %vm1367 = vweird.f32 %v1361
    %vm1368 = vmor %vm1366, %vm1367
    %v1369 = vsel %vm1368, %v1361, %v1365
    %v1370 = vand.u32 2147483647, %v1360
    %vm1371 = vcmp.eq.f32.partialorder %v1370, 8.507059e+37
    %v1372 = vand.u32 %v1360, 2147483648
    %v1373 = vor.u32 1.1754944e-38, %v1372
    %v1374 = vsel %vm1371, %v1373, %v1369
    %v1375 = vmul.f32 %v1350, %v1374
    %v1376 = vmin.f32 %v1375, 1.0
    %v1377 = vmax.f32 %v1376, -1.0
    %v1378 = vadd.f32 %v1217, 1.0
    %v1379 = vadd.f32 %v1257, 1.0
    %v1380 = vadd.f32 %v1297, 1.0
    %v1381 = vadd.f32 %v1337, 1.0
    %v1382 = vadd.f32 %v1377, 1.0
    %v1383 = vmul.f32 %v1161, %v1378
    %v1384 = vmul.f32 %v1162, %v1379
    %v1385 = vmul.f32 %v1163, %v1380
    %v1386 = vmul.f32 %v1164, %v1381
    %v1387 = vmul.f32 %v1165, %v1382
    %v1388 = vld [vmem:[%s15] sm:$0xff]
    %v1389 = vld [vmem:[%s15 + $0x8] sm:$0xff]
    %v1390 = vld [vmem:[%s15 + $0x10] sm:$0xff]
    %v1391 = vld [vmem:[%s15 + $0x18] sm:$0xff]
    %v1392 = vld [vmem:[%s15 + $0x20] sm:$0xff]
    %v1393 = vld [vmem:[%s15 + $0x28] sm:$0xff]
    %v1394 = vld [vmem:[%s15 + $0x30] sm:$0xff]
    %v1395 = vld [vmem:[%s15 + $0x38] sm:$0xff]
    %v1396 = vld [vmem:[%s15 + $0x40] sm:$0xff]
    %v1397 = vld [vmem:[%s15 + $0x48] sm:$0xff]
    %v1398 = vld [vmem:[%s15 + $0x50] sm:$0xff]
    %v1399 = vld [vmem:[%s15 + $0x58] sm:$0xff]
    %v1400 = vld [vmem:[%s15 + $0x60] sm:$0xff]
    %v1401 = vld [vmem:[%s15 + $0x68] sm:$0xff]
    %v1402 = vld [vmem:[%s15 + $0x70] sm:$0xff]
    %v1403 = vld [vmem:[%s15 + $0x78] sm:$0xff]
    %v1404 = vld [vmem:[%s16] sm:$0x1]
    %v1406 = vperm.slane %v1404, 0
    %1408 = vmatpush.msra.mxu0 %v1403
    %1409 = vmatpush.msra.mxu0 %v1402
    %1410 = vmatpush.msra.mxu0 %v1401
    %1411 = vmatpush.msra.mxu0 %v1400
    %1412 = vmatpush.msra.mxu0 %v1399
    %1413 = vmatpush.msra.mxu0 %v1398
    %1414 = vmatpush.msra.mxu0 %v1397
    %1415 = vmatpush.msra.mxu0 %v1396
    %1416 = vmatpush.msra.mxu0 %v1395
    %1417 = vmatpush.msra.mxu0 %v1394
    %1418 = vmatpush.msra.mxu0 %v1393
    %1419 = vmatpush.msra.mxu0 %v1392
    %1420 = vmatpush.msra.mxu0 %v1391
    %1421 = vmatpush.msra.mxu0 %v1390
    %1422 = vmatpush.msra.mxu0 %v1389
    %1423 = vmatpush.msra.mxu0 %v1388
    %1424 = vmatmul.f32.gmra.mxu0 %v1383
    %v1425 = vpop.f32.mrf.mxu0
    %v1426 = vadd.f32 %v1406, %v1425
    %1427 = vmatmul.f32.gmra.mxu0 %v1384
    %v1428 = vpop.f32.mrf.mxu0
    %v1429 = vadd.f32 %v1406, %v1428
    %1430 = vmatmul.f32.gmra.mxu0 %v1385
    %v1431 = vpop.f32.mrf.mxu0
    %v1432 = vadd.f32 %v1406, %v1431
    %1433 = vmatmul.f32.gmra.mxu0 %v1386
    %v1434 = vpop.f32.mrf.mxu0
    %v1435 = vadd.f32 %v1406, %v1434
    %1436 = vmatmul.f32.gmra.mxu0 %v1387
    %v1437 = vpop.f32.mrf.mxu0
    %v1438 = vadd.f32 %v1406, %v1437
    %1439 = vdwg.mxu0
    %v1440 = vadd.f32 %v973, %v1426
    %v1441 = vadd.f32 %v974, %v1429
    %v1442 = vadd.f32 %v975, %v1432
    %v1443 = vadd.f32 %v976, %v1435
    %v1444 = vadd.f32 %v977, %v1438
    %s1445 = scalar_lea.vmem %s5, 1
    %v1446 = vld [vmem:[%s1445] sm:$0x1]
    %s1447 = scalar_lea.vmem %s6, 1
    %v1448 = vld [vmem:[%s1447] sm:$0x1]
    %v1449 = vsel %vm171, %v1440, 0.0
    %1450 = vadd.xlane.f32.xlu0 %v1449
    %v1451 = vpop.xlane.xlu0 %1450
    %v1452 = vsel %vm171, %v1441, 0.0
    %1453 = vadd.xlane.f32.xlu0 %v1452
    %v1454 = vpop.xlane.xlu0 %1453
    %v1455 = vsel %vm171, %v1442, 0.0
    %1456 = vadd.xlane.f32.xlu0 %v1455
    %v1457 = vpop.xlane.xlu0 %1456
    %v1458 = vsel %vm171, %v1443, 0.0
    %1459 = vadd.xlane.f32.xlu0 %v1458
    %v1460 = vpop.xlane.xlu0 %1459
    %v1461 = vsel %vm184, %v1444, 0.0
    %1462 = vadd.xlane.f32.xlu0 %v1461
    %v1463 = vpop.xlane.xlu0 %1462
    %v1464 = vmul.f32 %v1451, %v194
    %v1465 = vmul.f32 %v1454, %v194
    %v1466 = vmul.f32 %v1457, %v194
    %v1467 = vmul.f32 %v1460, %v194
    %v1468 = vmul.f32 %v1463, %v194
    %v1469 = vsub.f32 %v1440, %v1464
    %v1470 = vsub.f32 %v1441, %v1465
    %v1471 = vsub.f32 %v1442, %v1466
    %v1472 = vsub.f32 %v1443, %v1467
    %v1473 = vsub.f32 %v1444, %v1468
    %v1474 = vmul.f32 %v1469, %v1469
    %v1475 = vmul.f32 %v1470, %v1470
    %v1476 = vmul.f32 %v1471, %v1471
    %v1477 = vmul.f32 %v1472, %v1472
    %v1478 = vmul.f32 %v1473, %v1473
    %v1479 = vsel %vm171, %v1474, 0.0
    %1480 = vadd.xlane.f32.xlu0 %v1479
    %v1481 = vpop.xlane.xlu0 %1480
    %v1482 = vsel %vm171, %v1475, 0.0
    %1483 = vadd.xlane.f32.xlu0 %v1482
    %v1484 = vpop.xlane.xlu0 %1483
    %v1485 = vsel %vm171, %v1476, 0.0
    %1486 = vadd.xlane.f32.xlu0 %v1485
    %v1487 = vpop.xlane.xlu0 %1486
    %v1488 = vsel %vm171, %v1477, 0.0
    %1489 = vadd.xlane.f32.xlu0 %v1488
    %v1490 = vpop.xlane.xlu0 %1489
    %v1491 = vsel %vm184, %v1478, 0.0
    %1492 = vadd.xlane.f32.xlu0 %v1491
    %v1493 = vpop.xlane.xlu0 %1492
    %v1494 = vmul.f32 %v1481, %v194
    %v1495 = vmul.f32 %v1484, %v194
    %v1496 = vmul.f32 %v1487, %v194
    %v1497 = vmul.f32 %v1490, %v194
    %v1498 = vmul.f32 %v1493, %v194
    %v1499 = vadd.f32 %v1494, 1e-05
    %v1500 = vadd.f32 %v1495, 1e-05
    %v1501 = vadd.f32 %v1496, 1e-05
    %v1502 = vadd.f32 %v1497, 1e-05
    %v1503 = vadd.f32 %v1498, 1e-05
    %v1504 = vrsqrt.pop %v1499
    %v1505 = vmul.f32 %v1504, %v1499
    %v1506 = vmul.f32 %v1505, %v1504
    %v1507 = vmul.f32 0.5, %v1506
    %v1508 = vsub.f32 1.5, %v1507
    %v1509 = vmul.f32 %v1504, %v1508
    %vm1510 = vweird.f32 %v1499
    %vm1511 = vweird.f32 %v1504
    %vm1512 = vmor %vm1510, %vm1511
    %v1513 = vsel %vm1512, %v1504, %v1509
    %v1514 = vrsqrt.pop %v1500
    %v1515 = vmul.f32 %v1514, %v1500
    %v1516 = vmul.f32 %v1515, %v1514
    %v1517 = vmul.f32 0.5, %v1516
    %v1518 = vsub.f32 1.5, %v1517
    %v1519 = vmul.f32 %v1514, %v1518
    %vm1520 = vweird.f32 %v1500
    %vm1521 = vweird.f32 %v1514
    %vm1522 = vmor %vm1520, %vm1521
    %v1523 = vsel %vm1522, %v1514, %v1519
    %v1524 = vrsqrt.pop %v1501
    %v1525 = vmul.f32 %v1524, %v1501
    %v1526 = vmul.f32 %v1525, %v1524
    %v1527 = vmul.f32 0.5, %v1526
    %v1528 = vsub.f32 1.5, %v1527
    %v1529 = vmul.f32 %v1524, %v1528
    %vm1530 = vweird.f32 %v1501
    %vm1531 = vweird.f32 %v1524
    %vm1532 = vmor %vm1530, %vm1531
    %v1533 = vsel %vm1532, %v1524, %v1529
    %v1534 = vrsqrt.pop %v1502
    %v1535 = vmul.f32 %v1534, %v1502
    %v1536 = vmul.f32 %v1535, %v1534
    %v1537 = vmul.f32 0.5, %v1536
    %v1538 = vsub.f32 1.5, %v1537
    %v1539 = vmul.f32 %v1534, %v1538
    %vm1540 = vweird.f32 %v1502
    %vm1541 = vweird.f32 %v1534
    %vm1542 = vmor %vm1540, %vm1541
    %v1543 = vsel %vm1542, %v1534, %v1539
    %v1544 = vrsqrt.pop %v1503
    %v1545 = vmul.f32 %v1544, %v1503
    %v1546 = vmul.f32 %v1545, %v1544
    %v1547 = vmul.f32 0.5, %v1546
    %v1548 = vsub.f32 1.5, %v1547
    %v1549 = vmul.f32 %v1544, %v1548
    %vm1550 = vweird.f32 %v1503
    %vm1551 = vweird.f32 %v1544
    %vm1552 = vmor %vm1550, %vm1551
    %v1553 = vsel %vm1552, %v1544, %v1549
    %v1554 = vmul.f32 %v1469, %v1513
    %v1555 = vmul.f32 %v1470, %v1523
    %v1556 = vmul.f32 %v1471, %v1533
    %v1557 = vmul.f32 %v1472, %v1543
    %v1558 = vmul.f32 %v1473, %v1553
    %v1560 = vperm.slane %v1446, 0
    %v1562 = vmul.f32 %v1554, %v1560
    %v1563 = vmul.f32 %v1555, %v1560
    %v1564 = vmul.f32 %v1556, %v1560
    %v1565 = vmul.f32 %v1557, %v1560
    %v1566 = vmul.f32 %v1558, %v1560
    %v1568 = vperm.slane %v1448, 0
    %v1570 = vadd.f32 %v1562, %v1568
    %v1571 = vadd.f32 %v1563, %v1568
    %v1572 = vadd.f32 %v1564, %v1568
    %v1573 = vadd.f32 %v1565, %v1568
    %v1574 = vadd.f32 %v1566, %v1568
    %s1575 = scalar_lea.vmem %s7, 32
    %v1576 = vld [vmem:[%s1575] sm:$0xff]
    %v1577 = vld [vmem:[%s1575 + $0x8] sm:$0xff]
    %v1578 = vld [vmem:[%s1575 + $0x10] sm:$0xff]
    %v1579 = vld [vmem:[%s1575 + $0x18] sm:$0xff]
    %s1580 = scalar_lea.vmem %s8, 1
    %v1581 = vld [vmem:[%s1580] sm:$0x1]
    %v1583 = vperm.slane %v1581, 0
    %v1586 = vsel %vm171, %v1570, 0
    %v1589 = vsel %vm171, %v1571, 0
    %v1592 = vsel %vm171, %v1572, 0
    %v1595 = vsel %vm171, %v1573, 0
    %v1598 = vsel %vm171, %v1574, 0
    %1600 = vmatpush.msra.mxu0 0.0
    %1601 = vmatpush.msra.mxu0 0.0
    %1602 = vmatpush.msra.mxu0 0.0
    %1603 = vmatpush.msra.mxu0 0.0
    %1604 = vmatpush.msra.mxu0 0.0
    %1605 = vmatpush.msra.mxu0 0.0
    %1606 = vmatpush.msra.mxu0 0.0
    %1607 = vmatpush.msra.mxu0 0.0
    %1608 = vmatpush.msra.mxu0 0.0
    %1609 = vmatpush.msra.mxu0 0.0
    %1610 = vmatpush.msra.mxu0 0.0
    %1611 = vmatpush.msra.mxu0 0.0
    %1612 = vmatpush.msra.mxu0 %v1579
    %1613 = vmatpush.msra.mxu0 %v1578
    %1614 = vmatpush.msra.mxu0 %v1577
    %1615 = vmatpush.msra.mxu0 %v1576
    %1616 = vmatmul.f32.gmra.mxu0 %v1586
    %v1617 = vpop.f32.mrf.mxu0
    %v1618 = vadd.f32 %v1583, %v1617
    %1619 = vmatmul.f32.gmra.mxu0 %v1589
    %v1620 = vpop.f32.mrf.mxu0
    %v1621 = vadd.f32 %v1583, %v1620
    %1622 = vmatmul.f32.gmra.mxu0 %v1592
    %v1623 = vpop.f32.mrf.mxu0
    %v1624 = vadd.f32 %v1583, %v1623
    %1625 = vmatmul.f32.gmra.mxu0 %v1595
    %v1626 = vpop.f32.mrf.mxu0
    %v1627 = vadd.f32 %v1583, %v1626
    %1628 = vmatmul.f32.gmra.mxu0 %v1598
    %v1629 = vpop.f32.mrf.mxu0
    %v1630 = vadd.f32 %v1583, %v1629
    %1631 = vdwg.mxu0
    %1635 = vrot.lane.b32.xlu0 %v1618, 96
    %v1636 = vpop.permute.xlu0 %1635
    %1637 = vrot.lane.b32.xlu0 %v1621, 96
    %v1638 = vpop.permute.xlu0 %1637
    %1639 = vrot.lane.b32.xlu0 %v1624, 96
    %v1640 = vpop.permute.xlu0 %1639
    %v1641 = vsel %vm370, %v1618, 0
    %v1643 = vsel %vm370, %v1621, 0
    %v1645 = vsel %vm370, %v1624, 0
    %v1647 = vsel %vm370, %v1636, 0
    %v1649 = vsel %vm370, %v1638, 0
    %v1651 = vsel %vm370, %v1640, 0
    %1653 = vmatpush.xpose.msra.mxu0 0.0
    %1654 = vmatpush.xpose.msra.mxu0 0.0
    %1655 = vmatpush.xpose.msra.mxu0 0.0
    %1656 = vmatpush.xpose.msra.mxu0 0.0
    %1657 = vmatpush.xpose.msra.mxu0 0.0
    %1658 = vmatpush.xpose.msra.mxu0 0.0
    %1659 = vmatpush.xpose.msra.mxu0 0.0
    %1660 = vmatpush.xpose.msra.mxu0 0.0
    %1661 = vmatpush.xpose.msra.mxu0 0.0
    %1662 = vmatpush.xpose.msra.mxu0 0.0
    %1663 = vmatpush.xpose.msra.mxu0 0.0
    %1664 = vmatpush.xpose.msra.mxu0 0.0
    %1665 = vmatpush.xpose.msra.mxu0 0.0
    %1666 = vmatpush.xpose.msra.mxu0 %v1651
    %1667 = vmatpush.xpose.msra.mxu0 %v1649
    %1668 = vmatpush.xpose.msra.mxu0 %v1647
    %1669 = vmatmul.f32.gmra.mxu0 %v1641
    %v1670 = vpop.f32.mrf.mxu0
    %v1671 = vadd.f32 0.0, %v1670
    %1672 = vmatmul.f32.gmra.mxu0 %v1643
    %v1673 = vpop.f32.mrf.mxu0
    %v1674 = vadd.f32 0.0, %v1673
    %1675 = vmatmul.f32.gmra.mxu0 %v1645
    %v1676 = vpop.f32.mrf.mxu0
    %v1677 = vadd.f32 0.0, %v1676
    %1678 = vdwg.mxu0
    %v1679 = vsel %vm409, %v1671, -inf
    %1680 = vmax.xlane.f32.xlu0 %v1679
    %v1681 = vpop.xlane.xlu0 %1680
    %v1682 = vsel %vm409, %v1674, -inf
    %1683 = vmax.xlane.f32.xlu0 %v1682
    %v1684 = vpop.xlane.xlu0 %1683
    %v1685 = vsel %vm416, %v1677, -inf
    %1686 = vmax.xlane.f32.xlu0 %v1685
    %v1687 = vpop.xlane.xlu0 %1686
    %v1688 = vsub.f32 %v1671, %v1681
    %v1689 = vsub.f32 %v1674, %v1684
    %v1690 = vsub.f32 %v1677, %v1687
    %v1691 = vmul.f32 %v1688, 1.442695
    %v1692 = vpow.pop %v1691
    %v1693 = vmul.f32 %v1689, 1.442695
    %v1694 = vpow.pop %v1693
    %v1695 = vmul.f32 %v1690, 1.442695
    %v1696 = vpow.pop %v1695
    %v1697 = vsel %vm409, %v1692, 0.0
    %1698 = vadd.xlane.f32.xlu0 %v1697
    %v1699 = vpop.xlane.xlu0 %1698
    %v1700 = vsel %vm409, %v1694, 0.0
    %1701 = vadd.xlane.f32.xlu0 %v1700
    %v1702 = vpop.xlane.xlu0 %1701
    %v1703 = vsel %vm416, %v1696, 0.0
    %1704 = vadd.xlane.f32.xlu0 %v1703
    %v1705 = vpop.xlane.xlu0 %1704
    %v1706 = vrcp.pop %v1699
    %v1707 = vrcp.pop %v1702
    %v1708 = vrcp.pop %v1705
    %v1709 = vmul.f32 %v1692, %v1706
    %v1710 = vmul.f32 %v1694, %v1707
    %v1711 = vmul.f32 %v1696, %v1708
    %1712 = vrot.lane.b32.xlu0 %v1618, 64
    %v1713 = vpop.permute.xlu0 %1712
    %1714 = vrot.lane.b32.xlu0 %v1621, 64
    %v1715 = vpop.permute.xlu0 %1714
    %1716 = vrot.lane.b32.xlu0 %v1624, 64
    %v1717 = vpop.permute.xlu0 %1716
    %v1721 = vsel %vm409, %v1709, 0
    %v1724 = vsel %vm409, %v1710, 0
    %v1727 = vsel %vm409, %v1711, 0
    %v1729 = vsel %vm147, %v1717, 0
    %1731 = vmatpush.msra.mxu0 0.0
    %1732 = vmatpush.msra.mxu0 0.0
    %1733 = vmatpush.msra.mxu0 0.0
    %1734 = vmatpush.msra.mxu0 0.0
    %1735 = vmatpush.msra.mxu0 0.0
    %1736 = vmatpush.msra.mxu0 0.0
    %1737 = vmatpush.msra.mxu0 0.0
    %1738 = vmatpush.msra.mxu0 0.0
    %1739 = vmatpush.msra.mxu0 0.0
    %1740 = vmatpush.msra.mxu0 0.0
    %1741 = vmatpush.msra.mxu0 0.0
    %1742 = vmatpush.msra.mxu0 0.0
    %1743 = vmatpush.msra.mxu0 0.0
    %1744 = vmatpush.msra.mxu0 %v1729
    %1745 = vmatpush.msra.mxu0 %v1715
    %1746 = vmatpush.msra.mxu0 %v1713
    %1747 = vmatmul.f32.gmra.mxu0 %v1721
    %v1748 = vpop.f32.mrf.mxu0
    %v1749 = vadd.f32 0.0, %v1748
    %1750 = vmatmul.f32.gmra.mxu0 %v1724
    %v1751 = vpop.f32.mrf.mxu0
    %v1752 = vadd.f32 0.0, %v1751
    %1753 = vmatmul.f32.gmra.mxu0 %v1727
    %v1754 = vpop.f32.mrf.mxu0
    %v1755 = vadd.f32 0.0, %v1754
    %1756 = vdwg.mxu0
    %1757 = vst.msk [vmem:[#allocation2] sm:$0xff] %vm370, %v1749
    %1758 = vst.msk [vmem:[#allocation2 + $0x8] sm:$0xff] %vm370, %v1752
    %1759 = vst.msk [vmem:[#allocation2 + $0x10] sm:$0x1] %vm491, %v1755
    %1760 = vrot.lane.b32.xlu0 %v1618, 112
    %v1761 = vpop.permute.xlu0 %1760
    %1762 = vrot.lane.b32.xlu0 %v1621, 112
    %v1763 = vpop.permute.xlu0 %1762
    %1764 = vrot.lane.b32.xlu0 %v1624, 112
    %v1765 = vpop.permute.xlu0 %1764
    %1766 = vrot.lane.b32.xlu0 %v1618, 80
    %v1767 = vpop.permute.xlu0 %1766
    %1768 = vrot.lane.b32.xlu0 %v1621, 80
    %v1769 = vpop.permute.xlu0 %1768
    %1770 = vrot.lane.b32.xlu0 %v1624, 80
    %v1771 = vpop.permute.xlu0 %1770
    %v1772 = vsel %vm370, %v1761, 0
    %v1774 = vsel %vm370, %v1763, 0
    %v1776 = vsel %vm370, %v1765, 0
    %v1778 = vsel %vm370, %v1767, 0
    %v1780 = vsel %vm370, %v1769, 0
    %v1782 = vsel %vm370, %v1771, 0
    %1784 = vmatpush.xpose.msra.mxu0 0.0
    %1785 = vmatpush.xpose.msra.mxu0 0.0
    %1786 = vmatpush.xpose.msra.mxu0 0.0
    %1787 = vmatpush.xpose.msra.mxu0 0.0
    %1788 = vmatpush.xpose.msra.mxu0 0.0
    %1789 = vmatpush.xpose.msra.mxu0 0.0
    %1790 = vmatpush.xpose.msra.mxu0 0.0
    %1791 = vmatpush.xpose.msra.mxu0 0.0
    %1792 = vmatpush.xpose.msra.mxu0 0.0
    %1793 = vmatpush.xpose.msra.mxu0 0.0
    %1794 = vmatpush.xpose.msra.mxu0 0.0
    %1795 = vmatpush.xpose.msra.mxu0 0.0
    %1796 = vmatpush.xpose.msra.mxu0 0.0
    %1797 = vmatpush.xpose.msra.mxu0 %v1782
    %1798 = vmatpush.xpose.msra.mxu0 %v1780
    %1799 = vmatpush.xpose.msra.mxu0 %v1778
    %1800 = vmatmul.f32.gmra.mxu0 %v1772
    %v1801 = vpop.f32.mrf.mxu0
    %v1802 = vadd.f32 0.0, %v1801
    %1803 = vmatmul.f32.gmra.mxu0 %v1774
    %v1804 = vpop.f32.mrf.mxu0
    %v1805 = vadd.f32 0.0, %v1804
    %1806 = vmatmul.f32.gmra.mxu0 %v1776
    %v1807 = vpop.f32.mrf.mxu0
    %v1808 = vadd.f32 0.0, %v1807
    %1809 = vdwg.mxu0
    %v1810 = vsel %vm409, %v1802, -inf
    %1811 = vmax.xlane.f32.xlu0 %v1810
    %v1812 = vpop.xlane.xlu0 %1811
    %v1813 = vsel %vm409, %v1805, -inf
    %1814 = vmax.xlane.f32.xlu0 %v1813
    %v1815 = vpop.xlane.xlu0 %1814
    %v1816 = vsel %vm416, %v1808, -inf
    %1817 = vmax.xlane.f32.xlu0 %v1816
    %v1818 = vpop.xlane.xlu0 %1817
    %v1819 = vsub.f32 %v1802, %v1812
    %v1820 = vsub.f32 %v1805, %v1815
    %v1821 = vsub.f32 %v1808, %v1818
    %v1822 = vmul.f32 %v1819, 1.442695
    %v1823 = vpow.pop %v1822
    %v1824 = vmul.f32 %v1820, 1.442695
    %v1825 = vpow.pop %v1824
    %v1826 = vmul.f32 %v1821, 1.442695
    %v1827 = vpow.pop %v1826
    %v1828 = vsel %vm409, %v1823, 0.0
    %1829 = vadd.xlane.f32.xlu0 %v1828
    %v1830 = vpop.xlane.xlu0 %1829
    %v1831 = vsel %vm409, %v1825, 0.0
    %1832 = vadd.xlane.f32.xlu0 %v1831
    %v1833 = vpop.xlane.xlu0 %1832
    %v1834 = vsel %vm416, %v1827, 0.0
    %1835 = vadd.xlane.f32.xlu0 %v1834
    %v1836 = vpop.xlane.xlu0 %1835
    %v1837 = vrcp.pop %v1830
    %v1838 = vrcp.pop %v1833
    %v1839 = vrcp.pop %v1836
    %v1840 = vmul.f32 %v1823, %v1837
    %v1841 = vmul.f32 %v1825, %v1838
    %v1842 = vmul.f32 %v1827, %v1839
    %1843 = vrot.lane.b32.xlu0 %v1618, 48
    %v1844 = vpop.permute.xlu0 %1843
    %1845 = vrot.lane.b32.xlu0 %v1621, 48
    %v1846 = vpop.permute.xlu0 %1845
    %1847 = vrot.lane.b32.xlu0 %v1624, 48
    %v1848 = vpop.permute.xlu0 %1847
    %v1852 = vsel %vm409, %v1840, 0
    %v1855 = vsel %vm409, %v1841, 0
    %v1858 = vsel %vm409, %v1842, 0
    %v1860 = vsel %vm147, %v1848, 0
    %1862 = vmatpush.msra.mxu0 0.0
    %1863 = vmatpush.msra.mxu0 0.0
    %1864 = vmatpush.msra.mxu0 0.0
    %1865 = vmatpush.msra.mxu0 0.0
    %1866 = vmatpush.msra.mxu0 0.0
    %1867 = vmatpush.msra.mxu0 0.0
    %1868 = vmatpush.msra.mxu0 0.0
    %1869 = vmatpush.msra.mxu0 0.0
    %1870 = vmatpush.msra.mxu0 0.0
    %1871 = vmatpush.msra.mxu0 0.0
    %1872 = vmatpush.msra.mxu0 0.0
    %1873 = vmatpush.msra.mxu0 0.0
    %1874 = vmatpush.msra.mxu0 0.0
    %1875 = vmatpush.msra.mxu0 %v1860
    %1876 = vmatpush.msra.mxu0 %v1846
    %1877 = vmatpush.msra.mxu0 %v1844
    %1878 = vmatmul.f32.gmra.mxu0 %v1852
    %v1879 = vpop.f32.mrf.mxu0
    %v1880 = vadd.f32 0.0, %v1879
    %1881 = vmatmul.f32.gmra.mxu0 %v1855
    %v1882 = vpop.f32.mrf.mxu0
    %v1883 = vadd.f32 0.0, %v1882
    %1884 = vmatmul.f32.gmra.mxu0 %v1858
    %v1885 = vpop.f32.mrf.mxu0
    %v1886 = vadd.f32 0.0, %v1885
    %1887 = vdwg.mxu0
    %1891 = vrot.lane.b32.xlu0 %v1880, 16
    %v1892 = vpop.permute.xlu0 %1891
    %1893 = vrot.lane.b32.xlu0 %v1883, 16
    %v1894 = vpop.permute.xlu0 %1893
    %1895 = vrot.lane.b32.xlu0 %v1886, 16
    %v1896 = vpop.permute.xlu0 %1895
    %1900 = vst.msk [vmem:[#allocation2] sm:$0xff] %vm633, %v1892
    %1901 = vst.msk [vmem:[#allocation2 + $0x8] sm:$0xff] %vm633, %v1894
    %1902 = vst.msk [vmem:[#allocation2 + $0x10] sm:$0x1] %vm636, %v1896
    %v1905 = vrot.slane %v1624, 1
    %v1906 = vrot.slane %v1627, 1
    %v1907 = vsel %vm133, %v1905, %v1906
    %v1908 = vrot.slane %v1630, 1
    %v1909 = vsel %vm133, %v1906, %v1908
    %1910 = vrot.lane.b32.xlu0 %v1907, 96
    %v1911 = vpop.permute.xlu0 %1910
    %1912 = vrot.lane.b32.xlu0 %v1909, 96
    %v1913 = vpop.permute.xlu0 %1912
    %1914 = vrot.lane.b32.xlu0 %v1908, 96
    %v1915 = vpop.permute.xlu0 %1914
    %v1916 = vsel %vm370, %v1907, 0
    %v1918 = vsel %vm370, %v1909, 0
    %v1920 = vsel %vm370, %v1908, 0
    %v1922 = vsel %vm370, %v1911, 0
    %v1924 = vsel %vm370, %v1913, 0
    %v1926 = vsel %vm370, %v1915, 0
    %1928 = vmatpush.xpose.msra.mxu0 0.0
    %1929 = vmatpush.xpose.msra.mxu0 0.0
    %1930 = vmatpush.xpose.msra.mxu0 0.0
    %1931 = vmatpush.xpose.msra.mxu0 0.0
    %1932 = vmatpush.xpose.msra.mxu0 0.0
    %1933 = vmatpush.xpose.msra.mxu0 0.0
    %1934 = vmatpush.xpose.msra.mxu0 0.0
    %1935 = vmatpush.xpose.msra.mxu0 0.0
    %1936 = vmatpush.xpose.msra.mxu0 0.0
    %1937 = vmatpush.xpose.msra.mxu0 0.0
    %1938 = vmatpush.xpose.msra.mxu0 0.0
    %1939 = vmatpush.xpose.msra.mxu0 0.0
    %1940 = vmatpush.xpose.msra.mxu0 0.0
    %1941 = vmatpush.xpose.msra.mxu0 %v1926
    %1942 = vmatpush.xpose.msra.mxu0 %v1924
    %1943 = vmatpush.xpose.msra.mxu0 %v1922
    %1944 = vmatmul.f32.gmra.mxu0 %v1916
    %v1945 = vpop.f32.mrf.mxu0
    %v1946 = vadd.f32 0.0, %v1945
    %1947 = vmatmul.f32.gmra.mxu0 %v1918
    %v1948 = vpop.f32.mrf.mxu0
    %v1949 = vadd.f32 0.0, %v1948
    %1950 = vmatmul.f32.gmra.mxu0 %v1920
    %v1951 = vpop.f32.mrf.mxu0
    %v1952 = vadd.f32 0.0, %v1951
    %1953 = vdwg.mxu0
    %v1954 = vsel %vm409, %v1946, -inf
    %1955 = vmax.xlane.f32.xlu0 %v1954
    %v1956 = vpop.xlane.xlu0 %1955
    %v1957 = vsel %vm409, %v1949, -inf
    %1958 = vmax.xlane.f32.xlu0 %v1957
    %v1959 = vpop.xlane.xlu0 %1958
    %v1960 = vsel %vm416, %v1952, -inf
    %1961 = vmax.xlane.f32.xlu0 %v1960
    %v1962 = vpop.xlane.xlu0 %1961
    %v1963 = vsub.f32 %v1946, %v1956
    %v1964 = vsub.f32 %v1949, %v1959
    %v1965 = vsub.f32 %v1952, %v1962
    %v1966 = vmul.f32 %v1963, 1.442695
    %v1967 = vpow.pop %v1966
    %v1968 = vmul.f32 %v1964, 1.442695
    %v1969 = vpow.pop %v1968
    %v1970 = vmul.f32 %v1965, 1.442695
    %v1971 = vpow.pop %v1970
    %v1972 = vsel %vm409, %v1967, 0.0
    %1973 = vadd.xlane.f32.xlu0 %v1972
    %v1974 = vpop.xlane.xlu0 %1973
    %v1975 = vsel %vm409, %v1969, 0.0
    %1976 = vadd.xlane.f32.xlu0 %v1975
    %v1977 = vpop.xlane.xlu0 %1976
    %v1978 = vsel %vm416, %v1971, 0.0
    %1979 = vadd.xlane.f32.xlu0 %v1978
    %v1980 = vpop.xlane.xlu0 %1979
    %v1981 = vrcp.pop %v1974
    %v1982 = vrcp.pop %v1977
    %v1983 = vrcp.pop %v1980
    %v1984 = vmul.f32 %v1967, %v1981
    %v1985 = vmul.f32 %v1969, %v1982
    %v1986 = vmul.f32 %v1971, %v1983
    %1987 = vrot.lane.b32.xlu0 %v1907, 64
    %v1988 = vpop.permute.xlu0 %1987
    %1989 = vrot.lane.b32.xlu0 %v1909, 64
    %v1990 = vpop.permute.xlu0 %1989
    %1991 = vrot.lane.b32.xlu0 %v1908, 64
    %v1992 = vpop.permute.xlu0 %1991
    %v1996 = vsel %vm409, %v1984, 0
    %v1999 = vsel %vm409, %v1985, 0
    %v2002 = vsel %vm409, %v1986, 0
    %v2004 = vsel %vm147, %v1992, 0
    %2006 = vmatpush.msra.mxu0 0.0
    %2007 = vmatpush.msra.mxu0 0.0
    %2008 = vmatpush.msra.mxu0 0.0
    %2009 = vmatpush.msra.mxu0 0.0
    %2010 = vmatpush.msra.mxu0 0.0
    %2011 = vmatpush.msra.mxu0 0.0
    %2012 = vmatpush.msra.mxu0 0.0
    %2013 = vmatpush.msra.mxu0 0.0
    %2014 = vmatpush.msra.mxu0 0.0
    %2015 = vmatpush.msra.mxu0 0.0
    %2016 = vmatpush.msra.mxu0 0.0
    %2017 = vmatpush.msra.mxu0 0.0
    %2018 = vmatpush.msra.mxu0 0.0
    %2019 = vmatpush.msra.mxu0 %v2004
    %2020 = vmatpush.msra.mxu0 %v1990
    %2021 = vmatpush.msra.mxu0 %v1988
    %2022 = vmatmul.f32.gmra.mxu0 %v1996
    %v2023 = vpop.f32.mrf.mxu0
    %v2024 = vadd.f32 0.0, %v2023
    %2025 = vmatmul.f32.gmra.mxu0 %v1999
    %v2026 = vpop.f32.mrf.mxu0
    %v2027 = vadd.f32 0.0, %v2026
    %2028 = vmatmul.f32.gmra.mxu0 %v2002
    %v2029 = vpop.f32.mrf.mxu0
    %v2030 = vadd.f32 0.0, %v2029
    %2031 = vdwg.mxu0
    %2032 = vst.msk [vmem:[#allocation2 + $0x11] sm:$0xff] %vm370, %v2024
    %2033 = vst.msk [vmem:[#allocation2 + $0x19] sm:$0xff] %vm370, %v2027
    %2034 = vst.msk [vmem:[#allocation2 + $0x21] sm:$0x1] %vm491, %v2030
    %2035 = vrot.lane.b32.xlu0 %v1907, 112
    %v2036 = vpop.permute.xlu0 %2035
    %2037 = vrot.lane.b32.xlu0 %v1909, 112
    %v2038 = vpop.permute.xlu0 %2037
    %2039 = vrot.lane.b32.xlu0 %v1908, 112
    %v2040 = vpop.permute.xlu0 %2039
    %2041 = vrot.lane.b32.xlu0 %v1907, 80
    %v2042 = vpop.permute.xlu0 %2041
    %2043 = vrot.lane.b32.xlu0 %v1909, 80
    %v2044 = vpop.permute.xlu0 %2043
    %2045 = vrot.lane.b32.xlu0 %v1908, 80
    %v2046 = vpop.permute.xlu0 %2045
    %v2047 = vsel %vm370, %v2036, 0
    %v2049 = vsel %vm370, %v2038, 0
    %v2051 = vsel %vm370, %v2040, 0
    %v2053 = vsel %vm370, %v2042, 0
    %v2055 = vsel %vm370, %v2044, 0
    %v2057 = vsel %vm370, %v2046, 0
    %2059 = vmatpush.xpose.msra.mxu0 0.0
    %2060 = vmatpush.xpose.msra.mxu0 0.0
    %2061 = vmatpush.xpose.msra.mxu0 0.0
    %2062 = vmatpush.xpose.msra.mxu0 0.0
    %2063 = vmatpush.xpose.msra.mxu0 0.0
    %2064 = vmatpush.xpose.msra.mxu0 0.0
    %2065 = vmatpush.xpose.msra.mxu0 0.0
    %2066 = vmatpush.xpose.msra.mxu0 0.0
    %2067 = vmatpush.xpose.msra.mxu0 0.0
    %2068 = vmatpush.xpose.msra.mxu0 0.0
    %2069 = vmatpush.xpose.msra.mxu0 0.0
    %2070 = vmatpush.xpose.msra.mxu0 0.0
    %2071 = vmatpush.xpose.msra.mxu0 0.0
    %2072 = vmatpush.xpose.msra.mxu0 %v2057
    %2073 = vmatpush.xpose.msra.mxu0 %v2055
    %2074 = vmatpush.xpose.msra.mxu0 %v2053
    %2075 = vmatmul.f32.gmra.mxu0 %v2047
    %v2076 = vpop.f32.mrf.mxu0
    %v2077 = vadd.f32 0.0, %v2076
    %2078 = vmatmul.f32.gmra.mxu0 %v2049
    %v2079 = vpop.f32.mrf.mxu0
    %v2080 = vadd.f32 0.0, %v2079
    %2081 = vmatmul.f32.gmra.mxu0 %v2051
    %v2082 = vpop.f32.mrf.mxu0
    %v2083 = vadd.f32 0.0, %v2082
    %2084 = vdwg.mxu0
    %v2085 = vsel %vm409, %v2077, -inf
    %2086 = vmax.xlane.f32.xlu0 %v2085
    %v2087 = vpop.xlane.xlu0 %2086
    %v2088 = vsel %vm409, %v2080, -inf
    %2089 = vmax.xlane.f32.xlu0 %v2088
    %v2090 = vpop.xlane.xlu0 %2089
    %v2091 = vsel %vm416, %v2083, -inf
    %2092 = vmax.xlane.f32.xlu0 %v2091
    %v2093 = vpop.xlane.xlu0 %2092
    %v2094 = vsub.f32 %v2077, %v2087
    %v2095 = vsub.f32 %v2080, %v2090
    %v2096 = vsub.f32 %v2083, %v2093
    %v2097 = vmul.f32 %v2094, 1.442695
    %v2098 = vpow.pop %v2097
    %v2099 = vmul.f32 %v2095, 1.442695
    %v2100 = vpow.pop %v2099
    %v2101 = vmul.f32 %v2096, 1.442695
    %v2102 = vpow.pop %v2101
    %v2103 = vsel %vm409, %v2098, 0.0
    %2104 = vadd.xlane.f32.xlu0 %v2103
    %v2105 = vpop.xlane.xlu0 %2104
    %v2106 = vsel %vm409, %v2100, 0.0
    %2107 = vadd.xlane.f32.xlu0 %v2106
    %v2108 = vpop.xlane.xlu0 %2107
    %v2109 = vsel %vm416, %v2102, 0.0
    %2110 = vadd.xlane.f32.xlu0 %v2109
    %v2111 = vpop.xlane.xlu0 %2110
    %v2112 = vrcp.pop %v2105
    %v2113 = vrcp.pop %v2108
    %v2114 = vrcp.pop %v2111
    %v2115 = vmul.f32 %v2098, %v2112
    %v2116 = vmul.f32 %v2100, %v2113
    %v2117 = vmul.f32 %v2102, %v2114
    %2118 = vrot.lane.b32.xlu0 %v1907, 48
    %v2119 = vpop.permute.xlu0 %2118
    %2120 = vrot.lane.b32.xlu0 %v1909, 48
    %v2121 = vpop.permute.xlu0 %2120
    %2122 = vrot.lane.b32.xlu0 %v1908, 48
    %v2123 = vpop.permute.xlu0 %2122
    %v2127 = vsel %vm409, %v2115, 0
    %v2130 = vsel %vm409, %v2116, 0
    %v2133 = vsel %vm409, %v2117, 0
    %v2135 = vsel %vm147, %v2123, 0
    %2137 = vmatpush.msra.mxu0 0.0
    %2138 = vmatpush.msra.mxu0 0.0
    %2139 = vmatpush.msra.mxu0 0.0
    %2140 = vmatpush.msra.mxu0 0.0
    %2141 = vmatpush.msra.mxu0 0.0
    %2142 = vmatpush.msra.mxu0 0.0
    %2143 = vmatpush.msra.mxu0 0.0
    %2144 = vmatpush.msra.mxu0 0.0
    %2145 = vmatpush.msra.mxu0 0.0
    %2146 = vmatpush.msra.mxu0 0.0
    %2147 = vmatpush.msra.mxu0 0.0
    %2148 = vmatpush.msra.mxu0 0.0
    %2149 = vmatpush.msra.mxu0 0.0
    %2150 = vmatpush.msra.mxu0 %v2135
    %2151 = vmatpush.msra.mxu0 %v2121
    %2152 = vmatpush.msra.mxu0 %v2119
    %2153 = vmatmul.f32.gmra.mxu0 %v2127
    %v2154 = vpop.f32.mrf.mxu0
    %v2155 = vadd.f32 0.0, %v2154
    %2156 = vmatmul.f32.gmra.mxu0 %v2130
    %v2157 = vpop.f32.mrf.mxu0
    %v2158 = vadd.f32 0.0, %v2157
    %2159 = vmatmul.f32.gmra.mxu0 %v2133
    %v2160 = vpop.f32.mrf.mxu0
    %v2161 = vadd.f32 0.0, %v2160
    %2162 = vdwg.mxu0
    %2166 = vrot.lane.b32.xlu0 %v2155, 16
    %v2167 = vpop.permute.xlu0 %2166
    %2168 = vrot.lane.b32.xlu0 %v2158, 16
    %v2169 = vpop.permute.xlu0 %2168
    %2170 = vrot.lane.b32.xlu0 %v2161, 16
    %v2171 = vpop.permute.xlu0 %2170
    %2175 = vst.msk [vmem:[#allocation2 + $0x11] sm:$0xff] %vm633, %v2167
    %2176 = vst.msk [vmem:[#allocation2 + $0x19] sm:$0xff] %vm633, %v2169
    %2177 = vst.msk [vmem:[#allocation2 + $0x21] sm:$0x1] %vm636, %v2171
    %v2178 = vld [vmem:[#allocation2] sm:$0xff]
    %v2179 = vld [vmem:[#allocation2 + $0x8] sm:$0xff]
    %v2180 = vld [vmem:[#allocation2 + $0x10] sm:$0xff]
    %v2181 = vld [vmem:[#allocation2 + $0x18] sm:$0xff]
    %v2182 = vld [vmem:[#allocation2 + $0x20] sm:$0x3]
    %s2183 = scalar_lea.vmem %s9, 32
    %v2184 = vld [vmem:[%s2183] sm:$0xff]
    %v2185 = vld [vmem:[%s2183 + $0x8] sm:$0xff]
    %v2186 = vld [vmem:[%s2183 + $0x10] sm:$0xff]
    %v2187 = vld [vmem:[%s2183 + $0x18] sm:$0xff]
    %s2188 = scalar_lea.vmem %s10, 1
    %v2189 = vld [vmem:[%s2188] sm:$0x1]
    %v2191 = vperm.slane %v2189, 0
    %v2194 = vsel %vm171, %v2178, 0
    %v2197 = vsel %vm171, %v2179, 0
    %v2200 = vsel %vm171, %v2180, 0
    %v2203 = vsel %vm171, %v2181, 0
    %v2206 = vsel %vm171, %v2182, 0
    %2208 = vmatpush.msra.mxu0 0.0
    %2209 = vmatpush.msra.mxu0 0.0
    %2210 = vmatpush.msra.mxu0 0.0
    %2211 = vmatpush.msra.mxu0 0.0
    %2212 = vmatpush.msra.mxu0 0.0
    %2213 = vmatpush.msra.mxu0 0.0
    %2214 = vmatpush.msra.mxu0 0.0
    %2215 = vmatpush.msra.mxu0 0.0
    %2216 = vmatpush.msra.mxu0 0.0
    %2217 = vmatpush.msra.mxu0 0.0
    %2218 = vmatpush.msra.mxu0 0.0
    %2219 = vmatpush.msra.mxu0 0.0
    %2220 = vmatpush.msra.mxu0 %v2187
    %2221 = vmatpush.msra.mxu0 %v2186
    %2222 = vmatpush.msra.mxu0 %v2185
    %2223 = vmatpush.msra.mxu0 %v2184
    %2224 = vmatmul.f32.gmra.mxu0 %v2194
    %v2225 = vpop.f32.mrf.mxu0
    %v2226 = vadd.f32 %v2191, %v2225
    %2227 = vmatmul.f32.gmra.mxu0 %v2197
    %v2228 = vpop.f32.mrf.mxu0
    %v2229 = vadd.f32 %v2191, %v2228
    %2230 = vmatmul.f32.gmra.mxu0 %v2200
    %v2231 = vpop.f32.mrf.mxu0
    %v2232 = vadd.f32 %v2191, %v2231
    %2233 = vmatmul.f32.gmra.mxu0 %v2203
    %v2234 = vpop.f32.mrf.mxu0
    %v2235 = vadd.f32 %v2191, %v2234
    %2236 = vmatmul.f32.gmra.mxu0 %v2206
    %v2237 = vpop.f32.mrf.mxu0
    %v2238 = vadd.f32 %v2191, %v2237
    %2239 = vdwg.mxu0
    %v2240 = vadd.f32 %v1440, %v2226
    %v2241 = vadd.f32 %v1441, %v2229
    %v2242 = vadd.f32 %v1442, %v2232
    %v2243 = vadd.f32 %v1443, %v2235
    %v2244 = vadd.f32 %v1444, %v2238
    %s2245 = scalar_lea.vmem %s11, 1
    %v2246 = vld [vmem:[%s2245] sm:$0x1]
    %s2247 = scalar_lea.vmem %s12, 1
    %v2248 = vld [vmem:[%s2247] sm:$0x1]
    %v2249 = vsel %vm171, %v2240, 0.0
    %2250 = vadd.xlane.f32.xlu0 %v2249
    %v2251 = vpop.xlane.xlu0 %2250
    %v2252 = vsel %vm171, %v2241, 0.0
    %2253 = vadd.xlane.f32.xlu0 %v2252
    %v2254 = vpop.xlane.xlu0 %2253
    %v2255 = vsel %vm171, %v2242, 0.0
    %2256 = vadd.xlane.f32.xlu0 %v2255
    %v2257 = vpop.xlane.xlu0 %2256
    %v2258 = vsel %vm171, %v2243, 0.0
    %2259 = vadd.xlane.f32.xlu0 %v2258
    %v2260 = vpop.xlane.xlu0 %2259
    %v2261 = vsel %vm184, %v2244, 0.0
    %2262 = vadd.xlane.f32.xlu0 %v2261
    %v2263 = vpop.xlane.xlu0 %2262
    %v2264 = vmul.f32 %v2251, %v194
    %v2265 = vmul.f32 %v2254, %v194
    %v2266 = vmul.f32 %v2257, %v194
    %v2267 = vmul.f32 %v2260, %v194
    %v2268 = vmul.f32 %v2263, %v194
    %v2269 = vsub.f32 %v2240, %v2264
    %v2270 = vsub.f32 %v2241, %v2265
    %v2271 = vsub.f32 %v2242, %v2266
    %v2272 = vsub.f32 %v2243, %v2267
    %v2273 = vsub.f32 %v2244, %v2268
    %v2274 = vmul.f32 %v2269, %v2269
    %v2275 = vmul.f32 %v2270, %v2270
    %v2276 = vmul.f32 %v2271, %v2271
    %v2277 = vmul.f32 %v2272, %v2272
    %v2278 = vmul.f32 %v2273, %v2273
    %v2279 = vsel %vm171, %v2274, 0.0
    %2280 = vadd.xlane.f32.xlu0 %v2279
    %v2281 = vpop.xlane.xlu0 %2280
    %v2282 = vsel %vm171, %v2275, 0.0
    %2283 = vadd.xlane.f32.xlu0 %v2282
    %v2284 = vpop.xlane.xlu0 %2283
    %v2285 = vsel %vm171, %v2276, 0.0
    %2286 = vadd.xlane.f32.xlu0 %v2285
    %v2287 = vpop.xlane.xlu0 %2286
    %v2288 = vsel %vm171, %v2277, 0.0
    %2289 = vadd.xlane.f32.xlu0 %v2288
    %v2290 = vpop.xlane.xlu0 %2289
    %v2291 = vsel %vm184, %v2278, 0.0
    %2292 = vadd.xlane.f32.xlu0 %v2291
    %v2293 = vpop.xlane.xlu0 %2292
    %v2294 = vmul.f32 %v2281, %v194
    %v2295 = vmul.f32 %v2284, %v194
    %v2296 = vmul.f32 %v2287, %v194
    %v2297 = vmul.f32 %v2290, %v194
    %v2298 = vmul.f32 %v2293, %v194
    %v2299 = vadd.f32 %v2294, 1e-05
    %v2300 = vadd.f32 %v2295, 1e-05
    %v2301 = vadd.f32 %v2296, 1e-05
    %v2302 = vadd.f32 %v2297, 1e-05
    %v2303 = vadd.f32 %v2298, 1e-05
    %v2304 = vrsqrt.pop %v2299
    %v2305 = vmul.f32 %v2304, %v2299
    %v2306 = vmul.f32 %v2305, %v2304
    %v2307 = vmul.f32 0.5, %v2306
    %v2308 = vsub.f32 1.5, %v2307
    %v2309 = vmul.f32 %v2304, %v2308
    %vm2310 = vweird.f32 %v2299
    %vm2311 = vweird.f32 %v2304
    %vm2312 = vmor %vm2310, %vm2311
    %v2313 = vsel %vm2312, %v2304, %v2309
    %v2314 = vrsqrt.pop %v2300
    %v2315 = vmul.f32 %v2314, %v2300
    %v2316 = vmul.f32 %v2315, %v2314
    %v2317 = vmul.f32 0.5, %v2316
    %v2318 = vsub.f32 1.5, %v2317
    %v2319 = vmul.f32 %v2314, %v2318
    %vm2320 = vweird.f32 %v2300
    %vm2321 = vweird.f32 %v2314
    %vm2322 = vmor %vm2320, %vm2321
    %v2323 = vsel %vm2322, %v2314, %v2319
    %v2324 = vrsqrt.pop %v2301
    %v2325 = vmul.f32 %v2324, %v2301
    %v2326 = vmul.f32 %v2325, %v2324
    %v2327 = vmul.f32 0.5, %v2326
    %v2328 = vsub.f32 1.5, %v2327
    %v2329 = vmul.f32 %v2324, %v2328
    %vm2330 = vweird.f32 %v2301
    %vm2331 = vweird.f32 %v2324
    %vm2332 = vmor %vm2330, %vm2331
    %v2333 = vsel %vm2332, %v2324, %v2329
    %v2334 = vrsqrt.pop %v2302
    %v2335 = vmul.f32 %v2334, %v2302
    %v2336 = vmul.f32 %v2335, %v2334
    %v2337 = vmul.f32 0.5, %v2336
    %v2338 = vsub.f32 1.5, %v2337
    %v2339 = vmul.f32 %v2334, %v2338
    %vm2340 = vweird.f32 %v2302
    %vm2341 = vweird.f32 %v2334
    %vm2342 = vmor %vm2340, %vm2341
    %v2343 = vsel %vm2342, %v2334, %v2339
    %v2344 = vrsqrt.pop %v2303
    %v2345 = vmul.f32 %v2344, %v2303
    %v2346 = vmul.f32 %v2345, %v2344
    %v2347 = vmul.f32 0.5, %v2346
    %v2348 = vsub.f32 1.5, %v2347
    %v2349 = vmul.f32 %v2344, %v2348
    %vm2350 = vweird.f32 %v2303
    %vm2351 = vweird.f32 %v2344
    %vm2352 = vmor %vm2350, %vm2351
    %v2353 = vsel %vm2352, %v2344, %v2349
    %v2354 = vmul.f32 %v2269, %v2313
    %v2355 = vmul.f32 %v2270, %v2323
    %v2356 = vmul.f32 %v2271, %v2333
    %v2357 = vmul.f32 %v2272, %v2343
    %v2358 = vmul.f32 %v2273, %v2353
    %v2360 = vperm.slane %v2246, 0
    %v2362 = vmul.f32 %v2354, %v2360
    %v2363 = vmul.f32 %v2355, %v2360
    %v2364 = vmul.f32 %v2356, %v2360
    %v2365 = vmul.f32 %v2357, %v2360
    %v2366 = vmul.f32 %v2358, %v2360
    %v2368 = vperm.slane %v2248, 0
    %v2370 = vadd.f32 %v2362, %v2368
    %v2371 = vadd.f32 %v2363, %v2368
    %v2372 = vadd.f32 %v2364, %v2368
    %v2373 = vadd.f32 %v2365, %v2368
    %v2374 = vadd.f32 %v2366, %v2368
    %s2375 = scalar_lea.vmem %s13, 32
    %v2376 = vld [vmem:[%s2375] sm:$0xff]
    %v2377 = vld [vmem:[%s2375 + $0x8] sm:$0xff]
    %v2378 = vld [vmem:[%s2375 + $0x10] sm:$0xff]
    %v2379 = vld [vmem:[%s2375 + $0x18] sm:$0xff]
    %s2380 = scalar_lea.vmem %s14, 1
    %v2381 = vld [vmem:[%s2380] sm:$0x1]
    %v2383 = vperm.slane %v2381, 0
    %v2386 = vsel %vm171, %v2370, 0
    %v2389 = vsel %vm171, %v2371, 0
    %v2392 = vsel %vm171, %v2372, 0
    %v2395 = vsel %vm171, %v2373, 0
    %v2398 = vsel %vm171, %v2374, 0
    %2400 = vmatpush.msra.mxu0 0.0
    %2401 = vmatpush.msra.mxu0 0.0
    %2402 = vmatpush.msra.mxu0 0.0
    %2403 = vmatpush.msra.mxu0 0.0
    %2404 = vmatpush.msra.mxu0 0.0
    %2405 = vmatpush.msra.mxu0 0.0
    %2406 = vmatpush.msra.mxu0 0.0
    %2407 = vmatpush.msra.mxu0 0.0
    %2408 = vmatpush.msra.mxu0 0.0
    %2409 = vmatpush.msra.mxu0 0.0
    %2410 = vmatpush.msra.mxu0 0.0
    %2411 = vmatpush.msra.mxu0 0.0
    %2412 = vmatpush.msra.mxu0 %v2379
    %2413 = vmatpush.msra.mxu0 %v2378
    %2414 = vmatpush.msra.mxu0 %v2377
    %2415 = vmatpush.msra.mxu0 %v2376
    %2416 = vmatmul.f32.gmra.mxu0 %v2386
    %v2417 = vpop.f32.mrf.mxu0
    %v2418 = vadd.f32 %v2383, %v2417
    %2419 = vmatmul.f32.gmra.mxu0 %v2389
    %v2420 = vpop.f32.mrf.mxu0
    %v2421 = vadd.f32 %v2383, %v2420
    %2422 = vmatmul.f32.gmra.mxu0 %v2392
    %v2423 = vpop.f32.mrf.mxu0
    %v2424 = vadd.f32 %v2383, %v2423
    %2425 = vmatmul.f32.gmra.mxu0 %v2395
    %v2426 = vpop.f32.mrf.mxu0
    %v2427 = vadd.f32 %v2383, %v2426
    %2428 = vmatmul.f32.gmra.mxu0 %v2398
    %v2429 = vpop.f32.mrf.mxu0
    %v2430 = vadd.f32 %v2383, %v2429
    %2431 = vdwg.mxu0
    %v2432 = vmul.f32 %v2418, 0.5
    %v2433 = vmul.f32 %v2421, 0.5
    %v2434 = vmul.f32 %v2424, 0.5
    %v2435 = vmul.f32 %v2427, 0.5
    %v2436 = vmul.f32 %v2430, 0.5
    %v2437 = vmul.f32 %v2418, %v1172
    %v2438 = vmul.f32 %v2421, %v1172
    %v2439 = vmul.f32 %v2424, %v1172
    %v2440 = vmul.f32 %v2427, %v1172
    %v2441 = vmul.f32 %v2430, %v1172
    %v2442 = vmul.f32 %v2437, %v2437
    %v2443 = vmin.f32 16.0, %v2442
    %v2444 = vmul.f32 %v2443, 2.1237322e-06
    %v2445 = vadd.f32 %v2444, 0.00028619796
    %v2446 = vmul.f32 %v2443, %v2445
    %v2447 = vadd.f32 %v2446, 0.0036580483
    %v2448 = vmul.f32 %v2443, %v2447
    %v2449 = vadd.f32 %v2448, 0.05243302
    %v2450 = vmul.f32 %v2443, %v2449
    %v2451 = vadd.f32 %v2450, 0.18741608
    %v2452 = vmul.f32 %v2443, %v2451
    %v2453 = vadd.f32 %v2452, 1.1283791
    %v2454 = vmul.f32 %v2437, %v2453
    %v2455 = vmul.f32 %v2443, 3.8918573e-05
    %v2456 = vadd.f32 %v2455, 0.001143296
    %v2457 = vmul.f32 %v2443, %v2456
    %v2458 = vadd.f32 %v2457, 0.014752088
    %v2459 = vmul.f32 %v2443, %v2458
    %v2460 = vadd.f32 %v2459, 0.112945676
    %v2461 = vmul.f32 %v2443, %v2460
    %v2462 = vadd.f32 %v2461, 0.4994258
    %v2463 = vmul.f32 %v2443, %v2462
    %v2464 = vadd.f32 %v2463, 1.0
    %v2465 = vrcp.pop %v2464
    %v2466 = vmul.f32 %v2464, %v2465
    %v2467 = vsub.f32 1.0, %v2466
    %v2468 = vmul.f32 %v2465, %v2467
    %v2469 = vadd.f32 %v2465, %v2468
    %vm2470 = vweird.f32 %v2464
    %vm2471 = vweird.f32 %v2465
    %vm2472 = vmor %vm2470, %vm2471
    %v2473 = vsel %vm2472, %v2465, %v2469
    %v2474 = vand.u32 2147483647, %v2464
    %vm2475 = vcmp.eq.f32.partialorder %v2474, 8.507059e+37
    %v2476 = vand.u32 %v2464, 2147483648
    %v2477 = vor.u32 1.1754944e-38, %v2476
    %v2478 = vsel %vm2475, %v2477, %v2473
    %v2479 = vmul.f32 %v2454, %v2478
    %v2480 = vmin.f32 %v2479, 1.0
    %v2481 = vmax.f32 %v2480, -1.0
    %v2482 = vmul.f32 %v2438, %v2438
    %v2483 = vmin.f32 16.0, %v2482
    %v2484 = vmul.f32 %v2483, 2.1237322e-06
    %v2485 = vadd.f32 %v2484, 0.00028619796
    %v2486 = vmul.f32 %v2483, %v2485
    %v2487 = vadd.f32 %v2486, 0.0036580483
    %v2488 = vmul.f32 %v2483, %v2487
    %v2489 = vadd.f32 %v2488, 0.05243302
    %v2490 = vmul.f32 %v2483, %v2489
    %v2491 = vadd.f32 %v2490, 0.18741608
    %v2492 = vmul.f32 %v2483, %v2491
    %v2493 = vadd.f32 %v2492, 1.1283791
    %v2494 = vmul.f32 %v2438, %v2493
    %v2495 = vmul.f32 %v2483, 3.8918573e-05
    %v2496 = vadd.f32 %v2495, 0.001143296
    %v2497 = vmul.f32 %v2483, %v2496
    %v2498 = vadd.f32 %v2497, 0.014752088
    %v2499 = vmul.f32 %v2483, %v2498
    %v2500 = vadd.f32 %v2499, 0.112945676
    %v2501 = vmul.f32 %v2483, %v2500
    %v2502 = vadd.f32 %v2501, 0.4994258
    %v2503 = vmul.f32 %v2483, %v2502
    %v2504 = vadd.f32 %v2503, 1.0
    %v2505 = vrcp.pop %v2504
    %v2506 = vmul.f32 %v2504, %v2505
    %v2507 = vsub.f32 1.0, %v2506
    %v2508 = vmul.f32 %v2505, %v2507
    %v2509 = vadd.f32 %v2505, %v2508
    %vm2510 = vweird.f32 %v2504
    %vm2511 = vweird.f32 %v2505
    %vm2512 = vmor %vm2510, %vm2511
    %v2513 = vsel %vm2512, %v2505, %v2509
    %v2514 = vand.u32 2147483647, %v2504
    %vm2515 = vcmp.eq.f32.partialorder %v2514, 8.507059e+37
    %v2516 = vand.u32 %v2504, 2147483648
    %v2517 = vor.u32 1.1754944e-38, %v2516
    %v2518 = vsel %vm2515, %v2517, %v2513
    %v2519 = vmul.f32 %v2494, %v2518
    %v2520 = vmin.f32 %v2519, 1.0
    %v2521 = vmax.f32 %v2520, -1.0
    %v2522 = vmul.f32 %v2439, %v2439
    %v2523 = vmin.f32 16.0, %v2522
    %v2524 = vmul.f32 %v2523, 2.1237322e-06
    %v2525 = vadd.f32 %v2524, 0.00028619796
    %v2526 = vmul.f32 %v2523, %v2525
    %v2527 = vadd.f32 %v2526, 0.0036580483
    %v2528 = vmul.f32 %v2523, %v2527
    %v2529 = vadd.f32 %v2528, 0.05243302
    %v2530 = vmul.f32 %v2523, %v2529
    %v2531 = vadd.f32 %v2530, 0.18741608
    %v2532 = vmul.f32 %v2523, %v2531
    %v2533 = vadd.f32 %v2532, 1.1283791
    %v2534 = vmul.f32 %v2439, %v2533
    %v2535 = vmul.f32 %v2523, 3.8918573e-05
    %v2536 = vadd.f32 %v2535, 0.001143296
    %v2537 = vmul.f32 %v2523, %v2536
    %v2538 = vadd.f32 %v2537, 0.014752088
    %v2539 = vmul.f32 %v2523, %v2538
    %v2540 = vadd.f32 %v2539, 0.112945676
    %v2541 = vmul.f32 %v2523, %v2540
    %v2542 = vadd.f32 %v2541, 0.4994258
    %v2543 = vmul.f32 %v2523, %v2542
    %v2544 = vadd.f32 %v2543, 1.0
    %v2545 = vrcp.pop %v2544
    %v2546 = vmul.f32 %v2544, %v2545
    %v2547 = vsub.f32 1.0, %v2546
    %v2548 = vmul.f32 %v2545, %v2547
    %v2549 = vadd.f32 %v2545, %v2548
    %vm2550 = vweird.f32 %v2544
    %vm2551 = vweird.f32 %v2545
    %vm2552 = vmor %vm2550, %vm2551
    %v2553 = vsel %vm2552, %v2545, %v2549
    %v2554 = vand.u32 2147483647, %v2544
    %vm2555 = vcmp.eq.f32.partialorder %v2554, 8.507059e+37
    %v2556 = vand.u32 %v2544, 2147483648
    %v2557 = vor.u32 1.1754944e-38, %v2556
    %v2558 = vsel %vm2555, %v2557, %v2553
    %v2559 = vmul.f32 %v2534, %v2558
    %v2560 = vmin.f32 %v2559, 1.0
    %v2561 = vmax.f32 %v2560, -1.0
    %v2562 = vmul.f32 %v2440, %v2440
    %v2563 = vmin.f32 16.0, %v2562
    %v2564 = vmul.f32 %v2563, 2.1237322e-06
    %v2565 = vadd.f32 %v2564, 0.00028619796
    %v2566 = vmul.f32 %v2563, %v2565
    %v2567 = vadd.f32 %v2566, 0.0036580483
    %v2568 = vmul.f32 %v2563, %v2567
    %v2569 = vadd.f32 %v2568, 0.05243302
    %v2570 = vmul.f32 %v2563, %v2569
    %v2571 = vadd.f32 %v2570, 0.18741608
    %v2572 = vmul.f32 %v2563, %v2571
    %v2573 = vadd.f32 %v2572, 1.1283791
    %v2574 = vmul.f32 %v2440, %v2573
    %v2575 = vmul.f32 %v2563, 3.8918573e-05
    %v2576 = vadd.f32 %v2575, 0.001143296
    %v2577 = vmul.f32 %v2563, %v2576
    %v2578 = vadd.f32 %v2577, 0.014752088
    %v2579 = vmul.f32 %v2563, %v2578
    %v2580 = vadd.f32 %v2579, 0.112945676
    %v2581 = vmul.f32 %v2563, %v2580
    %v2582 = vadd.f32 %v2581, 0.4994258
    %v2583 = vmul.f32 %v2563, %v2582
    %v2584 = vadd.f32 %v2583, 1.0
    %v2585 = vrcp.pop %v2584
    %v2586 = vmul.f32 %v2584, %v2585
    %v2587 = vsub.f32 1.0, %v2586
    %v2588 = vmul.f32 %v2585, %v2587
    %v2589 = vadd.f32 %v2585, %v2588
    %vm2590 = vweird.f32 %v2584
    %vm2591 = vweird.f32 %v2585
    %vm2592 = vmor %vm2590, %vm2591
    %v2593 = vsel %vm2592, %v2585, %v2589
    %v2594 = vand.u32 2147483647, %v2584
    %vm2595 = vcmp.eq.f32.partialorder %v2594, 8.507059e+37
    %v2596 = vand.u32 %v2584, 2147483648
    %v2597 = vor.u32 1.1754944e-38, %v2596
    %v2598 = vsel %vm2595, %v2597, %v2593
    %v2599 = vmul.f32 %v2574, %v2598
    %v2600 = vmin.f32 %v2599, 1.0
    %v2601 = vmax.f32 %v2600, -1.0
    %v2602 = vmul.f32 %v2441, %v2441
    %v2603 = vmin.f32 16.0, %v2602
    %v2604 = vmul.f32 %v2603, 2.1237322e-06
    %v2605 = vadd.f32 %v2604, 0.00028619796
    %v2606 = vmul.f32 %v2603, %v2605
    %v2607 = vadd.f32 %v2606, 0.0036580483
    %v2608 = vmul.f32 %v2603, %v2607
    %v2609 = vadd.f32 %v2608, 0.05243302
    %v2610 = vmul.f32 %v2603, %v2609
    %v2611 = vadd.f32 %v2610, 0.18741608
    %v2612 = vmul.f32 %v2603, %v2611
    %v2613 = vadd.f32 %v2612, 1.1283791
    %v2614 = vmul.f32 %v2441, %v2613
    %v2615 = vmul.f32 %v2603, 3.8918573e-05
    %v2616 = vadd.f32 %v2615, 0.001143296
    %v2617 = vmul.f32 %v2603, %v2616
    %v2618 = vadd.f32 %v2617, 0.014752088
    %v2619 = vmul.f32 %v2603, %v2618
    %v2620 = vadd.f32 %v2619, 0.112945676
    %v2621 = vmul.f32 %v2603, %v2620
    %v2622 = vadd.f32 %v2621, 0.4994258
    %v2623 = vmul.f32 %v2603, %v2622
    %v2624 = vadd.f32 %v2623, 1.0
    %v2625 = vrcp.pop %v2624
    %v2626 = vmul.f32 %v2624, %v2625
    %v2627 = vsub.f32 1.0, %v2626
    %v2628 = vmul.f32 %v2625, %v2627
    %v2629 = vadd.f32 %v2625, %v2628
    %vm2630 = vweird.f32 %v2624
    %vm2631 = vweird.f32 %v2625
    %vm2632 = vmor %vm2630, %vm2631
    %v2633 = vsel %vm2632, %v2625, %v2629
    %v2634 = vand.u32 2147483647, %v2624
    %vm2635 = vcmp.eq.f32.partialorder %v2634, 8.507059e+37
    %v2636 = vand.u32 %v2624, 2147483648
    %v2637 = vor.u32 1.1754944e-38, %v2636
    %v2638 = vsel %vm2635, %v2637, %v2633
    %v2639 = vmul.f32 %v2614, %v2638
    %v2640 = vmin.f32 %v2639, 1.0
    %v2641 = vmax.f32 %v2640, -1.0
    %v2642 = vadd.f32 %v2481, 1.0
    %v2643 = vadd.f32 %v2521, 1.0
    %v2644 = vadd.f32 %v2561, 1.0
    %v2645 = vadd.f32 %v2601, 1.0
    %v2646 = vadd.f32 %v2641, 1.0
    %v2647 = vmul.f32 %v2432, %v2642
    %v2648 = vmul.f32 %v2433, %v2643
    %v2649 = vmul.f32 %v2434, %v2644
    %v2650 = vmul.f32 %v2435, %v2645
    %v2651 = vmul.f32 %v2436, %v2646
    %s2652 = scalar_lea.vmem %s15, 128
    %v2653 = vld [vmem:[%s2652] sm:$0xff]
    %v2654 = vld [vmem:[%s2652 + $0x8] sm:$0xff]
    %v2655 = vld [vmem:[%s2652 + $0x10] sm:$0xff]
    %v2656 = vld [vmem:[%s2652 + $0x18] sm:$0xff]
    %v2657 = vld [vmem:[%s2652 + $0x20] sm:$0xff]
    %v2658 = vld [vmem:[%s2652 + $0x28] sm:$0xff]
    %v2659 = vld [vmem:[%s2652 + $0x30] sm:$0xff]
    %v2660 = vld [vmem:[%s2652 + $0x38] sm:$0xff]
    %v2661 = vld [vmem:[%s2652 + $0x40] sm:$0xff]
    %v2662 = vld [vmem:[%s2652 + $0x48] sm:$0xff]
    %v2663 = vld [vmem:[%s2652 + $0x50] sm:$0xff]
    %v2664 = vld [vmem:[%s2652 + $0x58] sm:$0xff]
    %v2665 = vld [vmem:[%s2652 + $0x60] sm:$0xff]
    %v2666 = vld [vmem:[%s2652 + $0x68] sm:$0xff]
    %v2667 = vld [vmem:[%s2652 + $0x70] sm:$0xff]
    %v2668 = vld [vmem:[%s2652 + $0x78] sm:$0xff]
    %s2669 = scalar_lea.vmem %s16, 1
    %v2670 = vld [vmem:[%s2669] sm:$0x1]
    %v2672 = vperm.slane %v2670, 0
    %2674 = vmatpush.msra.mxu0 %v2668
    %2675 = vmatpush.msra.mxu0 %v2667
    %2676 = vmatpush.msra.mxu0 %v2666
    %2677 = vmatpush.msra.mxu0 %v2665
    %2678 = vmatpush.msra.mxu0 %v2664
    %2679 = vmatpush.msra.mxu0 %v2663
    %2680 = vmatpush.msra.mxu0 %v2662
    %2681 = vmatpush.msra.mxu0 %v2661
    %2682 = vmatpush.msra.mxu0 %v2660
    %2683 = vmatpush.msra.mxu0 %v2659
    %2684 = vmatpush.msra.mxu0 %v2658
    %2685 = vmatpush.msra.mxu0 %v2657
    %2686 = vmatpush.msra.mxu0 %v2656
    %2687 = vmatpush.msra.mxu0 %v2655
    %2688 = vmatpush.msra.mxu0 %v2654
    %2689 = vmatpush.msra.mxu0 %v2653
    %2690 = vmatmul.f32.gmra.mxu0 %v2647
    %v2691 = vpop.f32.mrf.mxu0
    %v2692 = vadd.f32 %v2672, %v2691
    %2693 = vmatmul.f32.gmra.mxu0 %v2648
    %v2694 = vpop.f32.mrf.mxu0
    %2695 = vmatmul.f32.gmra.mxu0 %v2649
    %v2696 = vpop.f32.mrf.mxu0
    %v2697 = vadd.f32 %v2672, %v2696
    %2698 = vmatmul.f32.gmra.mxu0 %v2650
    %v2699 = vpop.f32.mrf.mxu0
    %2700 = vmatmul.f32.gmra.mxu0 %v2651
    %v2701 = vpop.f32.mrf.mxu0
    %2702 = vdwg.mxu0
    %v2703 = vadd.f32 %v2240, %v2692
    %v2704 = vadd.f32 %v2242, %v2697
    %v2705 = vsel %vm147, %v2703, %v2704
    %v2706 = vld [vmem:[%s17] sm:$0x1]
    %v2707 = vld [vmem:[%s18] sm:$0x1]
    %v2708 = vsel %vm184, %v2705, 0.0
    %2709 = vadd.xlane.f32.xlu0 %v2708
    %v2710 = vpop.xlane.xlu0 %2709
    %v2711 = vmul.f32 %v2710, %v194
    %v2712 = vsub.f32 %v2705, %v2711
    %v2713 = vmul.f32 %v2712, %v2712
    %v2714 = vsel %vm184, %v2713, 0.0
    %2715 = vadd.xlane.f32.xlu0 %v2714
    %v2716 = vpop.xlane.xlu0 %2715
    %v2717 = vmul.f32 %v2716, %v194
    %v2718 = vadd.f32 %v2717, 1e-05
    %v2719 = vrsqrt.pop %v2718
    %v2720 = vmul.f32 %v2719, %v2718
    %v2721 = vmul.f32 %v2720, %v2719
    %v2722 = vmul.f32 0.5, %v2721
    %v2723 = vsub.f32 1.5, %v2722
    %v2724 = vmul.f32 %v2719, %v2723
    %vm2725 = vweird.f32 %v2718
    %vm2726 = vweird.f32 %v2719
    %vm2727 = vmor %vm2725, %vm2726
    %v2728 = vsel %vm2727, %v2719, %v2724
    %v2729 = vmul.f32 %v2712, %v2728
    %v2731 = vperm.slane %v2706, 0
    %v2733 = vmul.f32 %v2729, %v2731
    %v2735 = vperm.slane %v2707, 0
    %v2737 = vadd.f32 %v2733, %v2735
    %v2738 = vld [vmem:[%s19] sm:$0xff]
    %v2739 = vld [vmem:[%s19 + $0x8] sm:$0xff]
    %v2740 = vld [vmem:[%s19 + $0x10] sm:$0xff]
    %v2741 = vld [vmem:[%s19 + $0x18] sm:$0xff]
    %v2742 = vld [vmem:[%s20] sm:$0x1]
    %v2744 = vperm.slane %v2742, 0
    %v2747 = vsel %vm171, %v2737, 0
    %2749 = vmatpush.msra.mxu0 0.0
    %2750 = vmatpush.msra.mxu0 0.0
    %2751 = vmatpush.msra.mxu0 0.0
    %2752 = vmatpush.msra.mxu0 0.0
    %2753 = vmatpush.msra.mxu0 0.0
    %2754 = vmatpush.msra.mxu0 0.0
    %2755 = vmatpush.msra.mxu0 0.0
    %2756 = vmatpush.msra.mxu0 0.0
    %2757 = vmatpush.msra.mxu0 0.0
    %2758 = vmatpush.msra.mxu0 0.0
    %2759 = vmatpush.msra.mxu0 0.0
    %2760 = vmatpush.msra.mxu0 0.0
    %2761 = vmatpush.msra.mxu0 %v2741
    %2762 = vmatpush.msra.mxu0 %v2740
    %2763 = vmatpush.msra.mxu0 %v2739
    %2764 = vmatpush.msra.mxu0 %v2738
    %2765 = vmatmul.f32.gmra.mxu0 %v2747
    %v2766 = vpop.f32.mrf.mxu0
    %v2767 = vadd.f32 %v2744, %v2766
    %2768 = vdwg.mxu0
    %vm2769 = vcmask 123904
    %2770 = vst.msk [vmem:[#allocation3] sm:$0x3] %vm2769, %v2767
    // Predicated region
    $region86: #{vit_forward.1} parent=1 // pred_check
      _
    $region87: #{vit_forward.1} parent=1 // pred_check_branch
      %2772 = sbr.rel (0) target = $region89
    $region88: #{vit_forward.1} parent=1 // pred_region
      %2774 = vsyncadd [#allocation4], 0
      %s2776 = sshll.u32 [#allocation3], 4
      %s2777 = int_to_ptr.vmem [resolvable:$true] %s2776
      %s2778 = sshll.u32 %s21, 4
      %s2779 = int_to_ptr.hbm [resolvable:$true] %s2778
      %2781 = dma.vmem_to_hbm [thread:$0]  %s2777, 32, %s2779, [#allocation4]
    $region89: #{vit_forward.1} parent=1 // pred_fallthru
      _
    // Predicated region
    $region90: #{vit_forward.1} parent=1 // pred_check
      _
    $region91: #{vit_forward.1} parent=1 // pred_check_branch
      %2783 = sbr.rel (0) target = $region93
    $region92: #{vit_forward.1} parent=1 // pred_region
      %2785 = dma.done [#allocation4], 32
    $region93: #{vit_forward.1} parent=1 // pred_fallthru
      _
    %2786 = vsyncpa [#allocation4], 1

</llo_original>
